<compile_context>
chip_gen: v5e
topology: v5e:2x2
jax: 0.10.0
libtpu: 0.0.40
codegen_flags: <defaults>
</compile_context>

<pallas_src>
import functools

import jax
import jax.numpy as jnp
from jax import lax
from jax.experimental import pallas as pl
from jax.experimental.pallas import tpu as pltpu


def _rcu_kernel(x_ref, w1_ref, b1_ref, w2_ref, b2_ref, o_ref, pad_scr,
                *, H, W, C):
    """One batch element per grid step.

    x_ref   : (1, H, W, C)   input (also used as the residual)
    w1_ref  : (3, 3, C, C)   conv1 weights (HWIO, bf16)
    b1_ref  : (1, C)         conv1 bias (f32)
    w2_ref  : (3, 3, C, C)   conv2 weights (HWIO, bf16)
    b2_ref  : (1, C)         conv2 bias (f32)
    o_ref   : (1, H, W, C)   output
    pad_scr : (H+2, W+2, C)  f32 VMEM scratch holding the zero-padded activation
    """
    x = x_ref[0]                                              # (H, W, C) f32

    # Zero only the 1-wide halo border; the interior is fully overwritten
    # below.  (Much cheaper than clearing the whole scratch, and safe under
    # megacore sharding because every grid step is self-contained.)
    pad_scr[pl.ds(0, 1), :, :] = jnp.zeros((1, W + 2, C), jnp.float32)
    pad_scr[pl.ds(H + 1, 1), :, :] = jnp.zeros((1, W + 2, C), jnp.float32)
    pad_scr[:, pl.ds(0, 1), :] = jnp.zeros((H + 2, 1, C), jnp.float32)
    pad_scr[:, pl.ds(W + 1, 1), :] = jnp.zeros((H + 2, 1, C), jnp.float32)

    # ---- out = relu(x), zero-padded through the scratch interior ----------
    pad_scr[pl.ds(1, H), pl.ds(1, W), :] = jnp.maximum(x, 0.0)
    a = pad_scr[...].astype(jnp.bfloat16)                     # (H+2, W+2, C)

    # ---- conv1 (3x3, stride 1, pad 1) as 9 tap-shifted MXU matmuls --------
    acc1 = jnp.zeros((H, W, C), jnp.float32)
    for kh in range(3):
        for kw in range(3):
            acc1 += jnp.dot(a[kh:kh + H, kw:kw + W, :], w1_ref[kh, kw],
                            preferred_element_type=jnp.float32)
    acc1 = jnp.maximum(acc1 + b1_ref[0], 0.0)                 # bias + relu

    # ---- conv2: re-pad relu(conv1) through the same scratch ---------------
    pad_scr[pl.ds(1, H), pl.ds(1, W), :] = acc1
    a2 = pad_scr[...].astype(jnp.bfloat16)

    acc2 = jnp.zeros((H, W, C), jnp.float32)
    for kh in range(3):
        for kw in range(3):
            acc2 += jnp.dot(a2[kh:kh + H, kw:kw + W, :], w2_ref[kh, kw],
                            preferred_element_type=jnp.float32)
    acc2 = acc2 + b2_ref[0]

    # ---- residual add (skip_add.add) ---------------------------------------
    o_ref[0] = (acc2 + x).astype(o_ref.dtype)


def residual_conv_unit(x_nhwc, w1, b1, w2, b2):
    """x_nhwc: (N, H, W, C) float32; weights HWIO (3,3,C,C); biases (C,)."""
    N, H, W, C = x_nhwc.shape
    w1_bf16 = w1.astype(jnp.bfloat16)
    w2_bf16 = w2.astype(jnp.bfloat16)
    b1_2d = b1.reshape(1, C).astype(jnp.float32)
    b2_2d = b2.reshape(1, C).astype(jnp.float32)

    kernel = functools.partial(_rcu_kernel, H=H, W=W, C=C)
    return pl.pallas_call(
        kernel,
        out_shape=jax.ShapeDtypeStruct((N, H, W, C), x_nhwc.dtype),
        grid=(N,),
        in_specs=[
            pl.BlockSpec((1, H, W, C), lambda b: (b, 0, 0, 0)),
            pl.BlockSpec((3, 3, C, C), lambda b: (0, 0, 0, 0)),
            pl.BlockSpec((1, C), lambda b: (0, 0)),
            pl.BlockSpec((3, 3, C, C), lambda b: (0, 0, 0, 0)),
            pl.BlockSpec((1, C), lambda b: (0, 0)),
        ],
        out_specs=pl.BlockSpec((1, H, W, C), lambda b: (b, 0, 0, 0)),
        scratch_shapes=[pltpu.VMEM((H + 2, W + 2, C), jnp.float32)],
        compiler_params=pltpu.CompilerParams(
            dimension_semantics=("parallel",),
            # Raise the scoped-VMEM ceiling above the 16/32 MiB defaults so
            # realistic DPT-sized blocks fit; harmless at the test shape.
            vmem_limit_bytes=64 << 20,
        ),
    )(x_nhwc, w1_bf16, b1_2d, w2_bf16, b2_2d)


def _reference(x_nhwc, w1, b1, w2, b2):
    """Pure-JAX f32 reference mirroring the PyTorch forward (bn=False, ReLU)."""
    dn = lax.conv_dimension_numbers(x_nhwc.shape, w1.shape,
                                    ("NHWC", "HWIO", "NHWC"))
    a = jax.nn.relu(x_nhwc)
    y = lax.conv_general_dilated(a, w1, (1, 1), "SAME",
                                 dimension_numbers=dn) + b1
    y = jax.nn.relu(y)
    y = lax.conv_general_dilated(y, w2, (1, 1), "SAME",
                                 dimension_numbers=dn) + b2
    return y + x_nhwc


if __name__ == "__main__":
    # Module config mirrored here: features=C, activation=ReLU, bn=False
    # (so conv1/conv2 carry biases).  groups == 1, so no conv_merge branch.
    N, C, H, W = 2, 4, 16, 16
    key = jax.random.PRNGKey(0)
    kx, k1, kb1, k2, kb2 = jax.random.split(key, 5)

    # PyTorch-style NCHW input.
    x_nchw = jax.random.normal(kx, (N, C, H, W), jnp.float32)

    # Deterministic synthetic parameters (HWIO layout for NHWC convolution).
    w1 = jax.random.normal(k1, (3, 3, C, C), jnp.float32) * 0.1
    b1 = jax.random.normal(kb1, (C,), jnp.float32) * 0.1
    w2 = jax.random.normal(k2, (3, 3, C, C), jnp.float32) * 0.1
    b2 = jax.random.normal(kb2, (C,), jnp.float32) * 0.1

    # NCHW -> NHWC for the kernel, back to NCHW afterwards.
    x_nhwc = jnp.transpose(x_nchw, (0, 2, 3, 1))
    out_nhwc = residual_conv_unit(x_nhwc, w1, b1, w2, b2)
    out_nchw = jnp.transpose(out_nhwc, (0, 3, 1, 2))
    jax.block_until_ready(out_nchw)

    ref_nhwc = _reference(x_nhwc, w1, b1, w2, b2)
    assert out_nhwc.shape == (N, H, W, C)
    # bf16 MXU operands -> relaxed tolerance vs. the pure-f32 reference.
    max_err = float(jnp.max(jnp.abs(out_nhwc - ref_nhwc)))
    assert jnp.allclose(out_nhwc, ref_nhwc, atol=5e-2, rtol=5e-2), (
        f"mismatch vs JAX reference (max abs err {max_err})")

    print("KERNEL_OK")
</pallas_src>

<mosaic_0001>
module attributes {stable_mosaic.version = 11 : i64} {
  func.func @_rcu_kernel(%arg0: i32, %arg1: memref<1x16x16x4xf32, #tpu.memory_space<vmem>>, %arg2: memref<3x3x4x4xbf16, #tpu.memory_space<vmem>>, %arg3: memref<1x4xf32, #tpu.memory_space<vmem>>, %arg4: memref<3x3x4x4xbf16, #tpu.memory_space<vmem>>, %arg5: memref<1x4xf32, #tpu.memory_space<vmem>>, %arg6: memref<1x16x16x4xf32, #tpu.memory_space<vmem>>, %arg7: memref<18x18x4xf32, #tpu.memory_space<vmem>>) attributes {dimension_semantics = [#tpu.dimension_semantics<parallel>], iteration_bounds = array<i64: 2>, scalar_prefetch = 0 : i64, scratch_operands = 1 : i64, tpu.core_type = #tpu.core_type<tc>, window_params = [{transform_indices = @transform_0, window_bounds = array<i64: 1, 16, 16, 4>}, {pipeline_mode = #tpu.pipeline_mode<synchronous>, transform_indices = @transform_1, window_bounds = array<i64: 3, 3, 4, 4>}, {pipeline_mode = #tpu.pipeline_mode<synchronous>, transform_indices = @transform_2, window_bounds = array<i64: 1, 4>}, {pipeline_mode = #tpu.pipeline_mode<synchronous>, transform_indices = @transform_3, window_bounds = array<i64: 3, 3, 4, 4>}, {pipeline_mode = #tpu.pipeline_mode<synchronous>, transform_indices = @transform_4, window_bounds = array<i64: 1, 4>}, {transform_indices = @transform_5, window_bounds = array<i64: 1, 16, 16, 4>}]} {
    %c0 = arith.constant 0 : index
    %c0_0 = arith.constant 0 : index
    %c0_1 = arith.constant 0 : index
    %c0_2 = arith.constant 0 : index
    %0 = vector.load %arg1[%c0, %c0_0, %c0_1, %c0_2] : memref<1x16x16x4xf32, #tpu.memory_space<vmem>>, vector<1x16x16x4xf32>
    %1 = vector.shape_cast %0 : vector<1x16x16x4xf32> to vector<16x16x4xf32>
    %cst = arith.constant 0.000000e+00 : f32
    %2 = vector.broadcast %cst : f32 to vector<1x18x4xf32>
    %c0_3 = arith.constant 0 : index
    %c0_4 = arith.constant 0 : index
    %c0_5 = arith.constant 0 : index
    %3 = vector.load %arg7[%c0_3, %c0_4, %c0_5] : memref<18x18x4xf32, #tpu.memory_space<vmem>>, vector<1x18x4xf32>
    tpu.vector_store %arg7[%c0_3, %c0_4, %c0_5], %2 {strides = array<i32>} : memref<18x18x4xf32, #tpu.memory_space<vmem>>, vector<1x18x4xf32>,
    %cst_6 = arith.constant 0.000000e+00 : f32
    %4 = vector.broadcast %cst_6 : f32 to vector<1x18x4xf32>
    %c17 = arith.constant 17 : index
    %c0_7 = arith.constant 0 : index
    %c0_8 = arith.constant 0 : index
    %5 = vector.load %arg7[%c17, %c0_7, %c0_8] : memref<18x18x4xf32, #tpu.memory_space<vmem>>, vector<1x18x4xf32>
    tpu.vector_store %arg7[%c17, %c0_7, %c0_8], %4 {strides = array<i32>} : memref<18x18x4xf32, #tpu.memory_space<vmem>>, vector<1x18x4xf32>,
    %cst_9 = arith.constant 0.000000e+00 : f32
    %6 = vector.broadcast %cst_9 : f32 to vector<18x1x4xf32>
    %c0_10 = arith.constant 0 : index
    %c0_11 = arith.constant 0 : index
    %c0_12 = arith.constant 0 : index
    %7 = vector.load %arg7[%c0_10, %c0_11, %c0_12] : memref<18x18x4xf32, #tpu.memory_space<vmem>>, vector<18x1x4xf32>
    tpu.vector_store %arg7[%c0_10, %c0_11, %c0_12], %6 {strides = array<i32>} : memref<18x18x4xf32, #tpu.memory_space<vmem>>, vector<18x1x4xf32>,
    %cst_13 = arith.constant 0.000000e+00 : f32
    %8 = vector.broadcast %cst_13 : f32 to vector<18x1x4xf32>
    %c0_14 = arith.constant 0 : index
    %c17_15 = arith.constant 17 : index
    %c0_16 = arith.constant 0 : index
    %9 = vector.load %arg7[%c0_14, %c17_15, %c0_16] : memref<18x18x4xf32, #tpu.memory_space<vmem>>, vector<18x1x4xf32>
    tpu.vector_store %arg7[%c0_14, %c17_15, %c0_16], %8 {strides = array<i32>} : memref<18x18x4xf32, #tpu.memory_space<vmem>>, vector<18x1x4xf32>,
    %cst_17 = arith.constant 0.000000e+00 : f32
    %10 = vector.broadcast %cst_17 : f32 to vector<16x16x4xf32>
    %11 = arith.maximumf %1, %10 : vector<16x16x4xf32>
    %c1 = arith.constant 1 : index
    %c1_18 = arith.constant 1 : index
    %c0_19 = arith.constant 0 : index
    %12 = vector.load %arg7[%c1, %c1_18, %c0_19] : memref<18x18x4xf32, #tpu.memory_space<vmem>>, vector<16x16x4xf32>
    tpu.vector_store %arg7[%c1, %c1_18, %c0_19], %11 {strides = array<i32>} : memref<18x18x4xf32, #tpu.memory_space<vmem>>, vector<16x16x4xf32>,
    %c0_20 = arith.constant 0 : index
    %c0_21 = arith.constant 0 : index
    %c0_22 = arith.constant 0 : index
    %13 = vector.load %arg7[%c0_20, %c0_21, %c0_22] : memref<18x18x4xf32, #tpu.memory_space<vmem>>, vector<18x18x4xf32>
    %14 = arith.truncf %13 : vector<18x18x4xf32> to vector<18x18x4xbf16>
    %cst_23 = arith.constant 0.000000e+00 : f32
    %15 = vector.broadcast %cst_23 : f32 to vector<16x16x4xf32>
    %16 = vector.extract_strided_slice %14 {offsets = [0, 0, 0], sizes = [16, 16, 4], strides = [1, 1, 1]} : vector<18x18x4xbf16> to vector<16x16x4xbf16>
    %c0_24 = arith.constant 0 : index
    %c0_25 = arith.constant 0 : index
    %c0_26 = arith.constant 0 : index
    %c0_27 = arith.constant 0 : index
    %17 = vector.load %arg2[%c0_24, %c0_25, %c0_26, %c0_27] : memref<3x3x4x4xbf16, #tpu.memory_space<vmem>>, vector<1x1x4x4xbf16>
    %18 = vector.shape_cast %17 : vector<1x1x4x4xbf16> to vector<4x4xbf16>
    %cst_28 = arith.constant dense<0.000000e+00> : vector<16x16x4xf32>
    %19 = tpu.matmul %16, %18, %cst_28 {dimension_numbers = #tpu.dot_dimension_numbers<[2], [0], [0, 1], [1], [0, 0, 0, 1, 1, 1], [], []>} : vector<16x16x4xbf16>, vector<4x4xbf16>, vector<16x16x4xf32> -> vector<16x16x4xf32>
    %20 = arith.addf %15, %19 : vector<16x16x4xf32>
    %21 = vector.extract_strided_slice %14 {offsets = [0, 1, 0], sizes = [16, 16, 4], strides = [1, 1, 1]} : vector<18x18x4xbf16> to vector<16x16x4xbf16>
    %c0_29 = arith.constant 0 : index
    %c1_30 = arith.constant 1 : index
    %c0_31 = arith.constant 0 : index
    %c0_32 = arith.constant 0 : index
    %22 = vector.load %arg2[%c0_29, %c1_30, %c0_31, %c0_32] : memref<3x3x4x4xbf16, #tpu.memory_space<vmem>>, vector<1x1x4x4xbf16>
    %23 = vector.shape_cast %22 : vector<1x1x4x4xbf16> to vector<4x4xbf16>
    %cst_33 = arith.constant dense<0.000000e+00> : vector<16x16x4xf32>
    %24 = tpu.matmul %21, %23, %cst_33 {dimension_numbers = #tpu.dot_dimension_numbers<[2], [0], [0, 1], [1], [0, 0, 0, 1, 1, 1], [], []>} : vector<16x16x4xbf16>, vector<4x4xbf16>, vector<16x16x4xf32> -> vector<16x16x4xf32>
    %25 = arith.addf %20, %24 : vector<16x16x4xf32>
    %26 = vector.extract_strided_slice %14 {offsets = [0, 2, 0], sizes = [16, 16, 4], strides = [1, 1, 1]} : vector<18x18x4xbf16> to vector<16x16x4xbf16>
    %c0_34 = arith.constant 0 : index
    %c2 = arith.constant 2 : index
    %c0_35 = arith.constant 0 : index
    %c0_36 = arith.constant 0 : index
    %27 = vector.load %arg2[%c0_34, %c2, %c0_35, %c0_36] : memref<3x3x4x4xbf16, #tpu.memory_space<vmem>>, vector<1x1x4x4xbf16>
    %28 = vector.shape_cast %27 : vector<1x1x4x4xbf16> to vector<4x4xbf16>
    %cst_37 = arith.constant dense<0.000000e+00> : vector<16x16x4xf32>
    %29 = tpu.matmul %26, %28, %cst_37 {dimension_numbers = #tpu.dot_dimension_numbers<[2], [0], [0, 1], [1], [0, 0, 0, 1, 1, 1], [], []>} : vector<16x16x4xbf16>, vector<4x4xbf16>, vector<16x16x4xf32> -> vector<16x16x4xf32>
    %30 = arith.addf %25, %29 : vector<16x16x4xf32>
    %31 = vector.extract_strided_slice %14 {offsets = [1, 0, 0], sizes = [16, 16, 4], strides = [1, 1, 1]} : vector<18x18x4xbf16> to vector<16x16x4xbf16>
    %c1_38 = arith.constant 1 : index
    %c0_39 = arith.constant 0 : index
    %c0_40 = arith.constant 0 : index
    %c0_41 = arith.constant 0 : index
    %32 = vector.load %arg2[%c1_38, %c0_39, %c0_40, %c0_41] : memref<3x3x4x4xbf16, #tpu.memory_space<vmem>>, vector<1x1x4x4xbf16>
    %33 = vector.shape_cast %32 : vector<1x1x4x4xbf16> to vector<4x4xbf16>
    %cst_42 = arith.constant dense<0.000000e+00> : vector<16x16x4xf32>
    %34 = tpu.matmul %31, %33, %cst_42 {dimension_numbers = #tpu.dot_dimension_numbers<[2], [0], [0, 1], [1], [0, 0, 0, 1, 1, 1], [], []>} : vector<16x16x4xbf16>, vector<4x4xbf16>, vector<16x16x4xf32> -> vector<16x16x4xf32>
    %35 = arith.addf %30, %34 : vector<16x16x4xf32>
    %36 = vector.extract_strided_slice %14 {offsets = [1, 1, 0], sizes = [16, 16, 4], strides = [1, 1, 1]} : vector<18x18x4xbf16> to vector<16x16x4xbf16>
    %c1_43 = arith.constant 1 : index
    %c1_44 = arith.constant 1 : index
    %c0_45 = arith.constant 0 : index
    %c0_46 = arith.constant 0 : index
    %37 = vector.load %arg2[%c1_43, %c1_44, %c0_45, %c0_46] : memref<3x3x4x4xbf16, #tpu.memory_space<vmem>>, vector<1x1x4x4xbf16>
    %38 = vector.shape_cast %37 : vector<1x1x4x4xbf16> to vector<4x4xbf16>
    %cst_47 = arith.constant dense<0.000000e+00> : vector<16x16x4xf32>
    %39 = tpu.matmul %36, %38, %cst_47 {dimension_numbers = #tpu.dot_dimension_numbers<[2], [0], [0, 1], [1], [0, 0, 0, 1, 1, 1], [], []>} : vector<16x16x4xbf16>, vector<4x4xbf16>, vector<16x16x4xf32> -> vector<16x16x4xf32>
    %40 = arith.addf %35, %39 : vector<16x16x4xf32>
    %41 = vector.extract_strided_slice %14 {offsets = [1, 2, 0], sizes = [16, 16, 4], strides = [1, 1, 1]} : vector<18x18x4xbf16> to vector<16x16x4xbf16>
    %c1_48 = arith.constant 1 : index
    %c2_49 = arith.constant 2 : index
    %c0_50 = arith.constant 0 : index
    %c0_51 = arith.constant 0 : index
    %42 = vector.load %arg2[%c1_48, %c2_49, %c0_50, %c0_51] : memref<3x3x4x4xbf16, #tpu.memory_space<vmem>>, vector<1x1x4x4xbf16>
    %43 = vector.shape_cast %42 : vector<1x1x4x4xbf16> to vector<4x4xbf16>
    %cst_52 = arith.constant dense<0.000000e+00> : vector<16x16x4xf32>
    %44 = tpu.matmul %41, %43, %cst_52 {dimension_numbers = #tpu.dot_dimension_numbers<[2], [0], [0, 1], [1], [0, 0, 0, 1, 1, 1], [], []>} : vector<16x16x4xbf16>, vector<4x4xbf16>, vector<16x16x4xf32> -> vector<16x16x4xf32>
    %45 = arith.addf %40, %44 : vector<16x16x4xf32>
    %46 = vector.extract_strided_slice %14 {offsets = [2, 0, 0], sizes = [16, 16, 4], strides = [1, 1, 1]} : vector<18x18x4xbf16> to vector<16x16x4xbf16>
    %c2_53 = arith.constant 2 : index
    %c0_54 = arith.constant 0 : index
    %c0_55 = arith.constant 0 : index
    %c0_56 = arith.constant 0 : index
    %47 = vector.load %arg2[%c2_53, %c0_54, %c0_55, %c0_56] : memref<3x3x4x4xbf16, #tpu.memory_space<vmem>>, vector<1x1x4x4xbf16>
    %48 = vector.shape_cast %47 : vector<1x1x4x4xbf16> to vector<4x4xbf16>
    %cst_57 = arith.constant dense<0.000000e+00> : vector<16x16x4xf32>
    %49 = tpu.matmul %46, %48, %cst_57 {dimension_numbers = #tpu.dot_dimension_numbers<[2], [0], [0, 1], [1], [0, 0, 0, 1, 1, 1], [], []>} : vector<16x16x4xbf16>, vector<4x4xbf16>, vector<16x16x4xf32> -> vector<16x16x4xf32>
    %50 = arith.addf %45, %49 : vector<16x16x4xf32>
    %51 = vector.extract_strided_slice %14 {offsets = [2, 1, 0], sizes = [16, 16, 4], strides = [1, 1, 1]} : vector<18x18x4xbf16> to vector<16x16x4xbf16>
    %c2_58 = arith.constant 2 : index
    %c1_59 = arith.constant 1 : index
    %c0_60 = arith.constant 0 : index
    %c0_61 = arith.constant 0 : index
    %52 = vector.load %arg2[%c2_58, %c1_59, %c0_60, %c0_61] : memref<3x3x4x4xbf16, #tpu.memory_space<vmem>>, vector<1x1x4x4xbf16>
    %53 = vector.shape_cast %52 : vector<1x1x4x4xbf16> to vector<4x4xbf16>
    %cst_62 = arith.constant dense<0.000000e+00> : vector<16x16x4xf32>
    %54 = tpu.matmul %51, %53, %cst_62 {dimension_numbers = #tpu.dot_dimension_numbers<[2], [0], [0, 1], [1], [0, 0, 0, 1, 1, 1], [], []>} : vector<16x16x4xbf16>, vector<4x4xbf16>, vector<16x16x4xf32> -> vector<16x16x4xf32>
    %55 = arith.addf %50, %54 : vector<16x16x4xf32>
    %56 = vector.extract_strided_slice %14 {offsets = [2, 2, 0], sizes = [16, 16, 4], strides = [1, 1, 1]} : vector<18x18x4xbf16> to vector<16x16x4xbf16>
    %c2_63 = arith.constant 2 : index
    %c2_64 = arith.constant 2 : index
    %c0_65 = arith.constant 0 : index
    %c0_66 = arith.constant 0 : index
    %57 = vector.load %arg2[%c2_63, %c2_64, %c0_65, %c0_66] : memref<3x3x4x4xbf16, #tpu.memory_space<vmem>>, vector<1x1x4x4xbf16>
    %58 = vector.shape_cast %57 : vector<1x1x4x4xbf16> to vector<4x4xbf16>
    %cst_67 = arith.constant dense<0.000000e+00> : vector<16x16x4xf32>
    %59 = tpu.matmul %56, %58, %cst_67 {dimension_numbers = #tpu.dot_dimension_numbers<[2], [0], [0, 1], [1], [0, 0, 0, 1, 1, 1], [], []>} : vector<16x16x4xbf16>, vector<4x4xbf16>, vector<16x16x4xf32> -> vector<16x16x4xf32>
    %60 = arith.addf %55, %59 : vector<16x16x4xf32>
    %c0_68 = arith.constant 0 : index
    %c0_69 = arith.constant 0 : index
    %61 = vector.load %arg3[%c0_68, %c0_69] : memref<1x4xf32, #tpu.memory_space<vmem>>, vector<1x4xf32>
    %62 = vector.shape_cast %61 : vector<1x4xf32> to vector<4xf32>
    %63 = vector.shape_cast %62 : vector<4xf32> to vector<1x1x4xf32>
    %64 = vector.broadcast %63 : vector<1x1x4xf32> to vector<16x16x4xf32>
    %65 = arith.addf %60, %64 : vector<16x16x4xf32>
    %cst_70 = arith.constant 0.000000e+00 : f32
    %66 = vector.broadcast %cst_70 : f32 to vector<16x16x4xf32>
    %67 = arith.maximumf %65, %66 : vector<16x16x4xf32>
    %c1_71 = arith.constant 1 : index
    %c1_72 = arith.constant 1 : index
    %c0_73 = arith.constant 0 : index
    %68 = vector.load %arg7[%c1_71, %c1_72, %c0_73] : memref<18x18x4xf32, #tpu.memory_space<vmem>>, vector<16x16x4xf32>
    tpu.vector_store %arg7[%c1_71, %c1_72, %c0_73], %67 {strides = array<i32>} : memref<18x18x4xf32, #tpu.memory_space<vmem>>, vector<16x16x4xf32>,
    %c0_74 = arith.constant 0 : index
    %c0_75 = arith.constant 0 : index
    %c0_76 = arith.constant 0 : index
    %69 = vector.load %arg7[%c0_74, %c0_75, %c0_76] : memref<18x18x4xf32, #tpu.memory_space<vmem>>, vector<18x18x4xf32>
    %70 = arith.truncf %69 : vector<18x18x4xf32> to vector<18x18x4xbf16>
    %cst_77 = arith.constant 0.000000e+00 : f32
    %71 = vector.broadcast %cst_77 : f32 to vector<16x16x4xf32>
    %72 = vector.extract_strided_slice %70 {offsets = [0, 0, 0], sizes = [16, 16, 4], strides = [1, 1, 1]} : vector<18x18x4xbf16> to vector<16x16x4xbf16>
    %c0_78 = arith.constant 0 : index
    %c0_79 = arith.constant 0 : index
    %c0_80 = arith.constant 0 : index
    %c0_81 = arith.constant 0 : index
    %73 = vector.load %arg4[%c0_78, %c0_79, %c0_80, %c0_81] : memref<3x3x4x4xbf16, #tpu.memory_space<vmem>>, vector<1x1x4x4xbf16>
    %74 = vector.shape_cast %73 : vector<1x1x4x4xbf16> to vector<4x4xbf16>
    %cst_82 = arith.constant dense<0.000000e+00> : vector<16x16x4xf32>
    %75 = tpu.matmul %72, %74, %cst_82 {dimension_numbers = #tpu.dot_dimension_numbers<[2], [0], [0, 1], [1], [0, 0, 0, 1, 1, 1], [], []>} : vector<16x16x4xbf16>, vector<4x4xbf16>, vector<16x16x4xf32> -> vector<16x16x4xf32>
    %76 = arith.addf %71, %75 : vector<16x16x4xf32>
    %77 = vector.extract_strided_slice %70 {offsets = [0, 1, 0], sizes = [16, 16, 4], strides = [1, 1, 1]} : vector<18x18x4xbf16> to vector<16x16x4xbf16>
    %c0_83 = arith.constant 0 : index
    %c1_84 = arith.constant 1 : index
    %c0_85 = arith.constant 0 : index
    %c0_86 = arith.constant 0 : index
    %78 = vector.load %arg4[%c0_83, %c1_84, %c0_85, %c0_86] : memref<3x3x4x4xbf16, #tpu.memory_space<vmem>>, vector<1x1x4x4xbf16>
    %79 = vector.shape_cast %78 : vector<1x1x4x4xbf16> to vector<4x4xbf16>
    %cst_87 = arith.constant dense<0.000000e+00> : vector<16x16x4xf32>
    %80 = tpu.matmul %77, %79, %cst_87 {dimension_numbers = #tpu.dot_dimension_numbers<[2], [0], [0, 1], [1], [0, 0, 0, 1, 1, 1], [], []>} : vector<16x16x4xbf16>, vector<4x4xbf16>, vector<16x16x4xf32> -> vector<16x16x4xf32>
    %81 = arith.addf %76, %80 : vector<16x16x4xf32>
    %82 = vector.extract_strided_slice %70 {offsets = [0, 2, 0], sizes = [16, 16, 4], strides = [1, 1, 1]} : vector<18x18x4xbf16> to vector<16x16x4xbf16>
    %c0_88 = arith.constant 0 : index
    %c2_89 = arith.constant 2 : index
    %c0_90 = arith.constant 0 : index
    %c0_91 = arith.constant 0 : index
    %83 = vector.load %arg4[%c0_88, %c2_89, %c0_90, %c0_91] : memref<3x3x4x4xbf16, #tpu.memory_space<vmem>>, vector<1x1x4x4xbf16>
    %84 = vector.shape_cast %83 : vector<1x1x4x4xbf16> to vector<4x4xbf16>
    %cst_92 = arith.constant dense<0.000000e+00> : vector<16x16x4xf32>
    %85 = tpu.matmul %82, %84, %cst_92 {dimension_numbers = #tpu.dot_dimension_numbers<[2], [0], [0, 1], [1], [0, 0, 0, 1, 1, 1], [], []>} : vector<16x16x4xbf16>, vector<4x4xbf16>, vector<16x16x4xf32> -> vector<16x16x4xf32>
    %86 = arith.addf %81, %85 : vector<16x16x4xf32>
    %87 = vector.extract_strided_slice %70 {offsets = [1, 0, 0], sizes = [16, 16, 4], strides = [1, 1, 1]} : vector<18x18x4xbf16> to vector<16x16x4xbf16>
    %c1_93 = arith.constant 1 : index
    %c0_94 = arith.constant 0 : index
    %c0_95 = arith.constant 0 : index
    %c0_96 = arith.constant 0 : index
    %88 = vector.load %arg4[%c1_93, %c0_94, %c0_95, %c0_96] : memref<3x3x4x4xbf16, #tpu.memory_space<vmem>>, vector<1x1x4x4xbf16>
    %89 = vector.shape_cast %88 : vector<1x1x4x4xbf16> to vector<4x4xbf16>
    %cst_97 = arith.constant dense<0.000000e+00> : vector<16x16x4xf32>
    %90 = tpu.matmul %87, %89, %cst_97 {dimension_numbers = #tpu.dot_dimension_numbers<[2], [0], [0, 1], [1], [0, 0, 0, 1, 1, 1], [], []>} : vector<16x16x4xbf16>, vector<4x4xbf16>, vector<16x16x4xf32> -> vector<16x16x4xf32>
    %91 = arith.addf %86, %90 : vector<16x16x4xf32>
    %92 = vector.extract_strided_slice %70 {offsets = [1, 1, 0], sizes = [16, 16, 4], strides = [1, 1, 1]} : vector<18x18x4xbf16> to vector<16x16x4xbf16>
    %c1_98 = arith.constant 1 : index
    %c1_99 = arith.constant 1 : index
    %c0_100 = arith.constant 0 : index
    %c0_101 = arith.constant 0 : index
    %93 = vector.load %arg4[%c1_98, %c1_99, %c0_100, %c0_101] : memref<3x3x4x4xbf16, #tpu.memory_space<vmem>>, vector<1x1x4x4xbf16>
    %94 = vector.shape_cast %93 : vector<1x1x4x4xbf16> to vector<4x4xbf16>
    %cst_102 = arith.constant dense<0.000000e+00> : vector<16x16x4xf32>
    %95 = tpu.matmul %92, %94, %cst_102 {dimension_numbers = #tpu.dot_dimension_numbers<[2], [0], [0, 1], [1], [0, 0, 0, 1, 1, 1], [], []>} : vector<16x16x4xbf16>, vector<4x4xbf16>, vector<16x16x4xf32> -> vector<16x16x4xf32>
    %96 = arith.addf %91, %95 : vector<16x16x4xf32>
    %97 = vector.extract_strided_slice %70 {offsets = [1, 2, 0], sizes = [16, 16, 4], strides = [1, 1, 1]} : vector<18x18x4xbf16> to vector<16x16x4xbf16>
    %c1_103 = arith.constant 1 : index
    %c2_104 = arith.constant 2 : index
    %c0_105 = arith.constant 0 : index
    %c0_106 = arith.constant 0 : index
    %98 = vector.load %arg4[%c1_103, %c2_104, %c0_105, %c0_106] : memref<3x3x4x4xbf16, #tpu.memory_space<vmem>>, vector<1x1x4x4xbf16>
    %99 = vector.shape_cast %98 : vector<1x1x4x4xbf16> to vector<4x4xbf16>
    %cst_107 = arith.constant dense<0.000000e+00> : vector<16x16x4xf32>
    %100 = tpu.matmul %97, %99, %cst_107 {dimension_numbers = #tpu.dot_dimension_numbers<[2], [0], [0, 1], [1], [0, 0, 0, 1, 1, 1], [], []>} : vector<16x16x4xbf16>, vector<4x4xbf16>, vector<16x16x4xf32> -> vector<16x16x4xf32>
    %101 = arith.addf %96, %100 : vector<16x16x4xf32>
    %102 = vector.extract_strided_slice %70 {offsets = [2, 0, 0], sizes = [16, 16, 4], strides = [1, 1, 1]} : vector<18x18x4xbf16> to vector<16x16x4xbf16>
    %c2_108 = arith.constant 2 : index
    %c0_109 = arith.constant 0 : index
    %c0_110 = arith.constant 0 : index
    %c0_111 = arith.constant 0 : index
    %103 = vector.load %arg4[%c2_108, %c0_109, %c0_110, %c0_111] : memref<3x3x4x4xbf16, #tpu.memory_space<vmem>>, vector<1x1x4x4xbf16>
    %104 = vector.shape_cast %103 : vector<1x1x4x4xbf16> to vector<4x4xbf16>
    %cst_112 = arith.constant dense<0.000000e+00> : vector<16x16x4xf32>
    %105 = tpu.matmul %102, %104, %cst_112 {dimension_numbers = #tpu.dot_dimension_numbers<[2], [0], [0, 1], [1], [0, 0, 0, 1, 1, 1], [], []>} : vector<16x16x4xbf16>, vector<4x4xbf16>, vector<16x16x4xf32> -> vector<16x16x4xf32>
    %106 = arith.addf %101, %105 : vector<16x16x4xf32>
    %107 = vector.extract_strided_slice %70 {offsets = [2, 1, 0], sizes = [16, 16, 4], strides = [1, 1, 1]} : vector<18x18x4xbf16> to vector<16x16x4xbf16>
    %c2_113 = arith.constant 2 : index
    %c1_114 = arith.constant 1 : index
    %c0_115 = arith.constant 0 : index
    %c0_116 = arith.constant 0 : index
    %108 = vector.load %arg4[%c2_113, %c1_114, %c0_115, %c0_116] : memref<3x3x4x4xbf16, #tpu.memory_space<vmem>>, vector<1x1x4x4xbf16>
    %109 = vector.shape_cast %108 : vector<1x1x4x4xbf16> to vector<4x4xbf16>
    %cst_117 = arith.constant dense<0.000000e+00> : vector<16x16x4xf32>
    %110 = tpu.matmul %107, %109, %cst_117 {dimension_numbers = #tpu.dot_dimension_numbers<[2], [0], [0, 1], [1], [0, 0, 0, 1, 1, 1], [], []>} : vector<16x16x4xbf16>, vector<4x4xbf16>, vector<16x16x4xf32> -> vector<16x16x4xf32>
    %111 = arith.addf %106, %110 : vector<16x16x4xf32>
    %112 = vector.extract_strided_slice %70 {offsets = [2, 2, 0], sizes = [16, 16, 4], strides = [1, 1, 1]} : vector<18x18x4xbf16> to vector<16x16x4xbf16>
    %c2_118 = arith.constant 2 : index
    %c2_119 = arith.constant 2 : index
    %c0_120 = arith.constant 0 : index
    %c0_121 = arith.constant 0 : index
    %113 = vector.load %arg4[%c2_118, %c2_119, %c0_120, %c0_121] : memref<3x3x4x4xbf16, #tpu.memory_space<vmem>>, vector<1x1x4x4xbf16>
    %114 = vector.shape_cast %113 : vector<1x1x4x4xbf16> to vector<4x4xbf16>
    %cst_122 = arith.constant dense<0.000000e+00> : vector<16x16x4xf32>
    %115 = tpu.matmul %112, %114, %cst_122 {dimension_numbers = #tpu.dot_dimension_numbers<[2], [0], [0, 1], [1], [0, 0, 0, 1, 1, 1], [], []>} : vector<16x16x4xbf16>, vector<4x4xbf16>, vector<16x16x4xf32> -> vector<16x16x4xf32>
    %116 = arith.addf %111, %115 : vector<16x16x4xf32>
    %c0_123 = arith.constant 0 : index
    %c0_124 = arith.constant 0 : index
    %117 = vector.load %arg5[%c0_123, %c0_124] : memref<1x4xf32, #tpu.memory_space<vmem>>, vector<1x4xf32>
    %118 = vector.shape_cast %117 : vector<1x4xf32> to vector<4xf32>
    %119 = vector.shape_cast %118 : vector<4xf32> to vector<1x1x4xf32>
    %120 = vector.broadcast %119 : vector<1x1x4xf32> to vector<16x16x4xf32>
    %121 = arith.addf %116, %120 : vector<16x16x4xf32>
    %122 = arith.addf %121, %1 : vector<16x16x4xf32>
    %c0_125 = arith.constant 0 : index
    %c0_126 = arith.constant 0 : index
    %c0_127 = arith.constant 0 : index
    %c0_128 = arith.constant 0 : index
    %123 = vector.load %arg6[%c0_125, %c0_126, %c0_127, %c0_128] : memref<1x16x16x4xf32, #tpu.memory_space<vmem>>, vector<1x16x16x4xf32>
    %124 = vector.shape_cast %123 : vector<1x16x16x4xf32> to vector<16x16x4xf32>
    %125 = vector.shape_cast %122 : vector<16x16x4xf32> to vector<1x16x16x4xf32>
    tpu.vector_store %arg6[%c0_125, %c0_126, %c0_127, %c0_128], %125 {strides = array<i32>} : memref<1x16x16x4xf32, #tpu.memory_space<vmem>>, vector<1x16x16x4xf32>,
    return
  }
  func.func @transform_0(%arg0: i32) -> (i32, i32, i32, i32) {
    %c0_i32 = arith.constant 0 : i32
    %c0_i32_0 = arith.constant 0 : i32
    %c0_i32_1 = arith.constant 0 : i32
    %c0_i32_2 = arith.constant 0 : i32
    return %arg0, %c0_i32, %c0_i32_0, %c0_i32_1 : i32, i32, i32, i32
  }
  func.func @transform_1(%arg0: i32) -> (i32, i32, i32, i32) {
    %c0_i32 = arith.constant 0 : i32
    %c0_i32_0 = arith.constant 0 : i32
    %c0_i32_1 = arith.constant 0 : i32
    %c0_i32_2 = arith.constant 0 : i32
    %c0_i32_3 = arith.constant 0 : i32
    return %c0_i32, %c0_i32_0, %c0_i32_1, %c0_i32_2 : i32, i32, i32, i32
  }
  func.func @transform_2(%arg0: i32) -> (i32, i32) {
    %c0_i32 = arith.constant 0 : i32
    %c0_i32_0 = arith.constant 0 : i32
    %c0_i32_1 = arith.constant 0 : i32
    return %c0_i32, %c0_i32_0 : i32, i32
  }
  func.func @transform_3(%arg0: i32) -> (i32, i32, i32, i32) {
    %c0_i32 = arith.constant 0 : i32
    %c0_i32_0 = arith.constant 0 : i32
    %c0_i32_1 = arith.constant 0 : i32
    %c0_i32_2 = arith.constant 0 : i32
    %c0_i32_3 = arith.constant 0 : i32
    return %c0_i32, %c0_i32_0, %c0_i32_1, %c0_i32_2 : i32, i32, i32, i32
  }
  func.func @transform_4(%arg0: i32) -> (i32, i32) {
    %c0_i32 = arith.constant 0 : i32
    %c0_i32_0 = arith.constant 0 : i32
    %c0_i32_1 = arith.constant 0 : i32
    return %c0_i32, %c0_i32_0 : i32, i32
  }
  func.func @transform_5(%arg0: i32) -> (i32, i32, i32, i32) {
    %c0_i32 = arith.constant 0 : i32
    %c0_i32_0 = arith.constant 0 : i32
    %c0_i32_1 = arith.constant 0 : i32
    %c0_i32_2 = arith.constant 0 : i32
    return %arg0, %c0_i32, %c0_i32_0, %c0_i32_1 : i32, i32, i32, i32
  }
}

</mosaic_0001>

<llo_original>
// kernel: tpu_custom_call.1
$region0: #{tpu_custom_call.1}
  #allocation0 [shape = 'u32[]', space=smem, size = 0x4, offset = 0x4, fixed_abs, tag = 'smem constant byte address 0x4 - core index']
  #allocation1 [shape = 'u32[72,128]{1,0:T(1,128)}', space=vmem, size = 0x9000, scoped, tag = 'internal scratch']
  #allocation2 [shape = 'f32[18,18,4]{2,1,0:T(8,128)}', space=vmem, size = 0x36000, scoped, tag = 'scratch operand']
  %s0 = inlined_call_operand.vmem [shape: f32[2,16,16,4], index: 0, kind: input, shape index: {}]
  %s1 = inlined_call_operand.vmem [shape: bf16[3,3,4,4], index: 1, kind: input, shape index: {}]
  %s2 = inlined_call_operand.vmem [shape: f32[1,4], index: 2, kind: input, shape index: {}]
  %s3 = inlined_call_operand.vmem [shape: bf16[3,3,4,4], index: 3, kind: input, shape index: {}]
  %s4 = inlined_call_operand.vmem [shape: f32[1,4], index: 4, kind: input, shape index: {}]
  %s5 = inlined_call_operand.vmem [shape: f32[2,16,16,4], index: 5, kind: output, shape index: {}]
  %s6 = sld [smem:[#allocation0]]
  $region53: #{tpu_custom_call.1} parent=0
    _
  %s8 = ssub.s32 1, %s6
  %s9 = scalar_select 0, %s8, %s6
  loop: start=0, step=1, limit=4
  $region2: #{tpu_custom_call.1} parent=0 // loop_pre_header
    _
  $region3: #{tpu_custom_call.1} parent=0 // loop_header
    %s11 = sphi 0, %s15
    %p12 = scmp.ge.s32.totalorder %s11, 4
    %s21 = sphi 0, %s23
    %s24 = sphi 0, %s21
    %s25 = sphi 0, %s24
    %s41 = sphi 0, %s25
    %s45 = sphi 0, %s45
    %s47 = sphi 0, %s45
    %s48 = sphi 0, %s47
    %s62 = sphi 0, %s48
    %s66 = sphi 0, %s66
    %s68 = sphi 0, %s66
    %s69 = sphi 0, %s68
    %s83 = sphi 0, %s69
    %s87 = sphi 0, %s87
    %s89 = sphi 0, %s87
    %s90 = sphi 0, %s89
    %s104 = sphi 0, %s90
    %s108 = sphi 0, %s108
    %s110 = sphi 0, %s108
    %s111 = sphi 0, %s110
    %s125 = sphi 0, %s111
    %s131 = sphi 0, %s133
    %s134 = sphi 0, %s131
    %s135 = sphi 0, %s134
    %s151 = sphi 0, %s135
  $region4: #{tpu_custom_call.1} parent=0 // loop_header_branch
    %14 = sbr.rel (%p12) target = $region8
  $region5: #{tpu_custom_call.1} parent=0 // loop_body
    %s16 = ssub.s32 %s11, 1
    %s17 = ssub.s32 %s11, 2
    %s18 = sadd.s32 %s11, 1
    %s19 = ssub.s32 %s11, %s18
    %p20 = scmp.eq.s32.totalorder %s19, 0
    %s22 = sadd.s32 %s21, 1
    %s23 = scalar_select %p20, %s21, %s22
    %p26 = pneg %p20
    %p27 = scmp.eq.s32.totalorder %s11, 1
    %p28 = por %p26, %p27
    %p29 = scmp.ne.s32.totalorder %s21, %s24
    %p30 = scmp.eq.s32.totalorder %s11, 0
    %p31 = por %p29, %p30
    %p32 = scmp.ne.s32.totalorder %s21, %s24
    %p33 = scmp.eq.s32.totalorder %s16, 1
    %p34 = por %p32, %p33
    %p35 = scmp.ne.s32.totalorder %s24, %s25
    %p36 = scmp.eq.s32.totalorder %s16, 0
    %p37 = por %p35, %p36
    %p38 = scmp.ne.s32.totalorder %s24, %s25
    %p39 = scmp.eq.s32.totalorder %s17, 1
    %p40 = por %p38, %p39
    %p42 = scmp.ne.s32.totalorder %s25, %s41
    %p43 = scmp.eq.s32.totalorder %s17, 0
    %p44 = por %p42, %p43
    %s46 = sadd.s32 %s45, 1
    %p49 = scmp.eq.s32.totalorder %s11, 1
    %p50 = scmp.ne.s32.totalorder %s45, %s47
    %p51 = scmp.eq.s32.totalorder %s11, 0
    %p52 = por %p50, %p51
    %p53 = scmp.ne.s32.totalorder %s45, %s47
    %p54 = scmp.eq.s32.totalorder %s16, 1
    %p55 = por %p53, %p54
    %p56 = scmp.ne.s32.totalorder %s47, %s48
    %p57 = scmp.eq.s32.totalorder %s16, 0
    %p58 = por %p56, %p57
    %p59 = scmp.ne.s32.totalorder %s47, %s48
    %p60 = scmp.eq.s32.totalorder %s17, 1
    %p61 = por %p59, %p60
    %p63 = scmp.ne.s32.totalorder %s48, %s62
    %p64 = scmp.eq.s32.totalorder %s17, 0
    %p65 = por %p63, %p64
    %s67 = sadd.s32 %s66, 1
    %p70 = scmp.eq.s32.totalorder %s11, 1
    %p71 = scmp.ne.s32.totalorder %s66, %s68
    %p72 = scmp.eq.s32.totalorder %s11, 0
    %p73 = por %p71, %p72
    %p74 = scmp.ne.s32.totalorder %s66, %s68
    %p75 = scmp.eq.s32.totalorder %s16, 1
    %p76 = por %p74, %p75
    %p77 = scmp.ne.s32.totalorder %s68, %s69
    %p78 = scmp.eq.s32.totalorder %s16, 0
    %p79 = por %p77, %p78
    %p80 = scmp.ne.s32.totalorder %s68, %s69
    %p81 = scmp.eq.s32.totalorder %s17, 1
    %p82 = por %p80, %p81
    %p84 = scmp.ne.s32.totalorder %s69, %s83
    %p85 = scmp.eq.s32.totalorder %s17, 0
    %p86 = por %p84, %p85
    %s88 = sadd.s32 %s87, 1
    %p91 = scmp.eq.s32.totalorder %s11, 1
    %p92 = scmp.ne.s32.totalorder %s87, %s89
    %p93 = scmp.eq.s32.totalorder %s11, 0
    %p94 = por %p92, %p93
    %p95 = scmp.ne.s32.totalorder %s87, %s89
    %p96 = scmp.eq.s32.totalorder %s16, 1
    %p97 = por %p95, %p96
    %p98 = scmp.ne.s32.totalorder %s89, %s90
    %p99 = scmp.eq.s32.totalorder %s16, 0
    %p100 = por %p98, %p99
    %p101 = scmp.ne.s32.totalorder %s89, %s90
    %p102 = scmp.eq.s32.totalorder %s17, 1
    %p103 = por %p101, %p102
    %p105 = scmp.ne.s32.totalorder %s90, %s104
    %p106 = scmp.eq.s32.totalorder %s17, 0
    %p107 = por %p105, %p106
    %s109 = sadd.s32 %s108, 1
    %p112 = scmp.eq.s32.totalorder %s11, 1
    %p113 = scmp.ne.s32.totalorder %s108, %s110
    %p114 = scmp.eq.s32.totalorder %s11, 0
    %p115 = por %p113, %p114
    %p116 = scmp.ne.s32.totalorder %s108, %s110
    %p117 = scmp.eq.s32.totalorder %s16, 1
    %p118 = por %p116, %p117
    %p119 = scmp.ne.s32.totalorder %s110, %s111
    %p120 = scmp.eq.s32.totalorder %s16, 0
    %p121 = por %p119, %p120
    %p122 = scmp.ne.s32.totalorder %s110, %s111
    %p123 = scmp.eq.s32.totalorder %s17, 1
    %p124 = por %p122, %p123
    %p126 = scmp.ne.s32.totalorder %s111, %s125
    %p127 = scmp.eq.s32.totalorder %s17, 0
    %p128 = por %p126, %p127
    %s129 = ssub.s32 %s11, %s18
    %p130 = scmp.eq.s32.totalorder %s129, 0
    %s132 = sadd.s32 %s131, 1
    %s133 = scalar_select %p130, %s131, %s132
    %p136 = pneg %p130
    %p137 = scmp.eq.s32.totalorder %s11, 1
    %p138 = por %p136, %p137
    %p139 = scmp.ne.s32.totalorder %s131, %s134
    %p140 = scmp.eq.s32.totalorder %s11, 0
    %p141 = por %p139, %p140
    %p142 = scmp.ne.s32.totalorder %s131, %s134
    %p143 = scmp.eq.s32.totalorder %s16, 1
    %p144 = por %p142, %p143
    %p145 = scmp.ne.s32.totalorder %s134, %s135
    %p146 = scmp.eq.s32.totalorder %s16, 0
    %p147 = por %p145, %p146
    %p148 = scmp.ne.s32.totalorder %s134, %s135
    %p149 = scmp.eq.s32.totalorder %s17, 1
    %p150 = por %p148, %p149
    %p152 = scmp.ne.s32.totalorder %s135, %s151
    %p153 = scmp.eq.s32.totalorder %s17, 0
    %p154 = por %p152, %p153
    %p155 = scmp.le.s32.totalorder 1, %s11
    %p156 = scmp.lt.s32.totalorder %s11, 3
    %p157 = pnand %p155, %p156
    %p158 = pneg %p157
    // Predicated region
    $region9: #{tpu_custom_call.1} parent=5 // pred_check
      _
    $region10: #{tpu_custom_call.1} parent=5 // pred_check_branch
      %160 = sbr.rel (%p157) target = $region12
    $region11: #{tpu_custom_call.1} parent=5 // pred_region
      %s161 = ssub.s32 %s11, 1
      // Predicated region
      $region13: #{tpu_custom_call.1} parent=11 // pred_check
        %p162 = pneg %p58
      $region14: #{tpu_custom_call.1} parent=11 // pred_check_branch
        %164 = sbr.rel (%p162) target = $region16
      $region15: #{tpu_custom_call.1} parent=11 // pred_region
        _
      $region16: #{tpu_custom_call.1} parent=11 // pred_fallthru
        _
      // Predicated region
      $region17: #{tpu_custom_call.1} parent=11 // pred_check
        %p165 = pneg %p79
      $region18: #{tpu_custom_call.1} parent=11 // pred_check_branch
        %167 = sbr.rel (%p165) target = $region20
      $region19: #{tpu_custom_call.1} parent=11 // pred_region
        _
      $region20: #{tpu_custom_call.1} parent=11 // pred_fallthru
        _
      // Predicated region
      $region21: #{tpu_custom_call.1} parent=11 // pred_check
        %p168 = pneg %p100
      $region22: #{tpu_custom_call.1} parent=11 // pred_check_branch
        %170 = sbr.rel (%p168) target = $region24
      $region23: #{tpu_custom_call.1} parent=11 // pred_region
        _
      $region24: #{tpu_custom_call.1} parent=11 // pred_fallthru
        _
      // Predicated region
      $region25: #{tpu_custom_call.1} parent=11 // pred_check
        %p171 = pneg %p121
      $region26: #{tpu_custom_call.1} parent=11 // pred_check_branch
        %173 = sbr.rel (%p171) target = $region28
      $region27: #{tpu_custom_call.1} parent=11 // pred_region
        _
      $region28: #{tpu_custom_call.1} parent=11 // pred_fallthru
        _
    $region12: #{tpu_custom_call.1} parent=5 // pred_fallthru
      _
    %p174 = scmp.lt.s32.totalorder %s11, 2
    // Predicated region
    $region29: #{tpu_custom_call.1} parent=5 // pred_check
      %p175 = pneg %p174
    $region30: #{tpu_custom_call.1} parent=5 // pred_check_branch
      %177 = sbr.rel (%p175) target = $region32
    $region31: #{tpu_custom_call.1} parent=5 // pred_region
      // Predicated region
      $region33: #{tpu_custom_call.1} parent=31 // pred_check
        %p178 = pneg %p31
      $region34: #{tpu_custom_call.1} parent=31 // pred_check_branch
        %180 = sbr.rel (%p178) target = $region36
      $region35: #{tpu_custom_call.1} parent=31 // pred_region
        %p181 = scmp.lt.s32.totalorder %s11, 1
        %s182 = scalar_select %p181, %s11, 1
        %s183 = smul.addr %s182, 32
        %s184 = smul.addr %s183, 8
        %s185 = scalar_lea.vmem %s0, %s184
      $region36: #{tpu_custom_call.1} parent=31 // pred_fallthru
        _
    $region32: #{tpu_custom_call.1} parent=5 // pred_fallthru
      _
    %p186 = scmp.le.s32.totalorder 1, %s11
    %p187 = scmp.lt.s32.totalorder %s11, 3
    %p188 = pnand %p186, %p187
    %p189 = pneg %p188
    // Predicated region
    $region37: #{tpu_custom_call.1} parent=5 // pred_check
      _
    $region38: #{tpu_custom_call.1} parent=5 // pred_check_branch
      %191 = sbr.rel (%p188) target = $region40
    $region39: #{tpu_custom_call.1} parent=5 // pred_region
      %s192 = ssub.s32 %s11, 1
      %p193 = scmp.lt.s32.totalorder %s16, 1
      %s194 = scalar_select %p193, %s16, 1
      %s195 = smul.addr %s194, 32
      %s196 = smul.addr %s195, 8
      %s197 = scalar_lea.vmem %s0, %s196
      %p198 = pneg %p37
      %p199 = pneg %p34
      %p200 = pneg %p58
      %p201 = pneg %p55
      %p202 = pneg %p79
      %p203 = pneg %p76
      %p204 = pneg %p100
      %p205 = pneg %p97
      %p206 = pneg %p121
      %p207 = pneg %p118
      %p208 = pneg %p147
      %p209 = pneg %p144
      %p210 = scmp.lt.s32.totalorder %s16, 1
      %s211 = scalar_select %p210, %s16, 1
      %s212 = smul.addr %s211, 32
      %s213 = smul.addr %s212, 8
      %s214 = scalar_lea.vmem %s5, %s213
      %p215 = scmp.lt.s32.totalorder %s16, 1
      %s216 = scalar_select %p215, %s16, 1
      %s217 = smul.addr %s216, 32
      %s218 = smul.addr %s217, 8
      %s219 = scalar_lea.vmem %s0, %s218
      %p220 = scmp.lt.s32.totalorder %s16, 1
      %s221 = scalar_select %p220, %s16, 1
      %s222 = smul.addr %s221, 32
      %s223 = smul.addr %s222, 8
      %s224 = scalar_lea.vmem %s5, %s223
      %v226 = vld [vmem:[%s219] sm:$0xff]
      %v227 = vld [vmem:[%s219 + $0x8] sm:$0xff]
      %v228 = vld [vmem:[%s219 + $0x10] sm:$0xff]
      %v229 = vld [vmem:[%s219 + $0x18] sm:$0xff]
      %v230 = vld [vmem:[%s219 + $0x20] sm:$0xff]
      %v231 = vld [vmem:[%s219 + $0x28] sm:$0xff]
      %v232 = vld [vmem:[%s219 + $0x30] sm:$0xff]
      %v233 = vld [vmem:[%s219 + $0x38] sm:$0xff]
      %v234 = vld [vmem:[%s219 + $0x40] sm:$0xff]
      %v235 = vld [vmem:[%s219 + $0x48] sm:$0xff]
      %v236 = vld [vmem:[%s219 + $0x50] sm:$0xff]
      %v237 = vld [vmem:[%s219 + $0x58] sm:$0xff]
      %v238 = vld [vmem:[%s219 + $0x60] sm:$0xff]
      %v239 = vld [vmem:[%s219 + $0x68] sm:$0xff]
      %v240 = vld [vmem:[%s219 + $0x70] sm:$0xff]
      %v241 = vld [vmem:[%s219 + $0x78] sm:$0xff]
      %v242 = vld [vmem:[%s219 + $0x80] sm:$0xff]
      %v243 = vld [vmem:[%s219 + $0x88] sm:$0xff]
      %v244 = vld [vmem:[%s219 + $0x90] sm:$0xff]
      %v245 = vld [vmem:[%s219 + $0x98] sm:$0xff]
      %v246 = vld [vmem:[%s219 + $0xa0] sm:$0xff]
      %v247 = vld [vmem:[%s219 + $0xa8] sm:$0xff]
      %v248 = vld [vmem:[%s219 + $0xb0] sm:$0xff]
      %v249 = vld [vmem:[%s219 + $0xb8] sm:$0xff]
      %v250 = vld [vmem:[%s219 + $0xc0] sm:$0xff]
      %v251 = vld [vmem:[%s219 + $0xc8] sm:$0xff]
      %v252 = vld [vmem:[%s219 + $0xd0] sm:$0xff]
      %v253 = vld [vmem:[%s219 + $0xd8] sm:$0xff]
      %v254 = vld [vmem:[%s219 + $0xe0] sm:$0xff]
      %v255 = vld [vmem:[%s219 + $0xe8] sm:$0xff]
      %v256 = vld [vmem:[%s219 + $0xf0] sm:$0xff]
      %v257 = vld [vmem:[%s219 + $0xf8] sm:$0xff]
      %vm258 = vcmask 31744
      %259 = vst.msk [vmem:[#allocation2] sm:$0xff] %vm258, 0.0
      %260 = vst.msk [vmem:[#allocation2 + $0x8] sm:$0xff] %vm258, 0.0
      %vm261 = vcmask 25600
      %262 = vst.msk [vmem:[#allocation2 + $0x10] sm:$0x3] %vm261, 0.0
      %s263 = scalar_lea.vmem [#allocation2], 408
      %264 = vst.msk [vmem:[%s263] sm:$0xff] %vm258, 0.0
      %265 = vst.msk [vmem:[%s263 + $0x8] sm:$0xff] %vm258, 0.0
      %266 = vst.msk [vmem:[%s263 + $0x10] sm:$0x3] %vm261, 0.0
      %vm267 = vcmask 24576
      %268 = vst.msk [vmem:[#allocation2] sm:$0x1] %vm267, 0.0
      %269 = vst.msk [vmem:[#allocation2 + $0x18] sm:$0x1] %vm267, 0.0
      %270 = vst.msk [vmem:[#allocation2 + $0x30] sm:$0x1] %vm267, 0.0
      %271 = vst.msk [vmem:[#allocation2 + $0x48] sm:$0x1] %vm267, 0.0
      %272 = vst.msk [vmem:[#allocation2 + $0x60] sm:$0x1] %vm267, 0.0
      %273 = vst.msk [vmem:[#allocation2 + $0x78] sm:$0x1] %vm267, 0.0
      %274 = vst.msk [vmem:[#allocation2 + $0x90] sm:$0x1] %vm267, 0.0
      %275 = vst.msk [vmem:[#allocation2 + $0xa8] sm:$0x1] %vm267, 0.0
      %276 = vst.msk [vmem:[#allocation2 + $0xc0] sm:$0x1] %vm267, 0.0
      %277 = vst.msk [vmem:[#allocation2 + $0xd8] sm:$0x1] %vm267, 0.0
      %278 = vst.msk [vmem:[#allocation2 + $0xf0] sm:$0x1] %vm267, 0.0
      %279 = vst.msk [vmem:[#allocation2 + $0x108] sm:$0x1] %vm267, 0.0
      %280 = vst.msk [vmem:[#allocation2 + $0x120] sm:$0x1] %vm267, 0.0
      %281 = vst.msk [vmem:[#allocation2 + $0x138] sm:$0x1] %vm267, 0.0
      %282 = vst.msk [vmem:[#allocation2 + $0x150] sm:$0x1] %vm267, 0.0
      %283 = vst.msk [vmem:[#allocation2 + $0x168] sm:$0x1] %vm267, 0.0
      %284 = vst.msk [vmem:[#allocation2 + $0x180] sm:$0x1] %vm267, 0.0
      %285 = vst.msk [vmem:[#allocation2 + $0x198] sm:$0x1] %vm267, 0.0
      %286 = vst.msk [vmem:[#allocation2 + $0x11] sm:$0x1] %vm267, 0.0
      %287 = vst.msk [vmem:[#allocation2 + $0x29] sm:$0x1] %vm267, 0.0
      %288 = vst.msk [vmem:[#allocation2 + $0x41] sm:$0x1] %vm267, 0.0
      %289 = vst.msk [vmem:[#allocation2 + $0x59] sm:$0x1] %vm267, 0.0
      %290 = vst.msk [vmem:[#allocation2 + $0x71] sm:$0x1] %vm267, 0.0
      %291 = vst.msk [vmem:[#allocation2 + $0x89] sm:$0x1] %vm267, 0.0
      %292 = vst.msk [vmem:[#allocation2 + $0xa1] sm:$0x1] %vm267, 0.0
      %293 = vst.msk [vmem:[#allocation2 + $0xb9] sm:$0x1] %vm267, 0.0
      %294 = vst.msk [vmem:[#allocation2 + $0xd1] sm:$0x1] %vm267, 0.0
      %295 = vst.msk [vmem:[#allocation2 + $0xe9] sm:$0x1] %vm267, 0.0
      %296 = vst.msk [vmem:[#allocation2 + $0x101] sm:$0x1] %vm267, 0.0
      %297 = vst.msk [vmem:[#allocation2 + $0x119] sm:$0x1] %vm267, 0.0
      %298 = vst.msk [vmem:[#allocation2 + $0x131] sm:$0x1] %vm267, 0.0
      %299 = vst.msk [vmem:[#allocation2 + $0x149] sm:$0x1] %vm267, 0.0
      %300 = vst.msk [vmem:[#allocation2 + $0x161] sm:$0x1] %vm267, 0.0
      %301 = vst.msk [vmem:[#allocation2 + $0x179] sm:$0x1] %vm267, 0.0
      %302 = vst.msk [vmem:[#allocation2 + $0x191] sm:$0x1] %vm267, 0.0
      %303 = vst.msk [vmem:[#allocation2 + $0x1a9] sm:$0x1] %vm267, 0.0
      %v304 = vmax.f32 %v226, 0.0
      %v305 = vmax.f32 %v227, 0.0
      %v306 = vmax.f32 %v228, 0.0
      %v307 = vmax.f32 %v229, 0.0
      %v308 = vmax.f32 %v230, 0.0
      %v309 = vmax.f32 %v231, 0.0
      %v310 = vmax.f32 %v232, 0.0
      %v311 = vmax.f32 %v233, 0.0
      %v312 = vmax.f32 %v234, 0.0
      %v313 = vmax.f32 %v235, 0.0
      %v314 = vmax.f32 %v236, 0.0
      %v315 = vmax.f32 %v237, 0.0
      %v316 = vmax.f32 %v238, 0.0
      %v317 = vmax.f32 %v239, 0.0
      %v318 = vmax.f32 %v240, 0.0
      %v319 = vmax.f32 %v241, 0.0
      %v320 = vmax.f32 %v242, 0.0
      %v321 = vmax.f32 %v243, 0.0
      %v322 = vmax.f32 %v244, 0.0
      %v323 = vmax.f32 %v245, 0.0
      %v324 = vmax.f32 %v246, 0.0
      %v325 = vmax.f32 %v247, 0.0
      %v326 = vmax.f32 %v248, 0.0
      %v327 = vmax.f32 %v249, 0.0
      %v328 = vmax.f32 %v250, 0.0
      %v329 = vmax.f32 %v251, 0.0
      %v330 = vmax.f32 %v252, 0.0
      %v331 = vmax.f32 %v253, 0.0
      %v332 = vmax.f32 %v254, 0.0
      %v333 = vmax.f32 %v255, 0.0
      %v334 = vmax.f32 %v256, 0.0
      %v335 = vmax.f32 %v257, 0.0
      %s336 = scalar_lea.vmem [#allocation2], 24
      %337 = vst.msk [vmem:[%s336 + $0x1] sm:$0xff] %vm258, %v304
      %338 = vst.msk [vmem:[%s336 + $0x9] sm:$0xff] %vm258, %v305
      %339 = vst.msk [vmem:[%s336 + $0x19] sm:$0xff] %vm258, %v306
      %340 = vst.msk [vmem:[%s336 + $0x21] sm:$0xff] %vm258, %v307
      %341 = vst.msk [vmem:[%s336 + $0x31] sm:$0xff] %vm258, %v308
      %342 = vst.msk [vmem:[%s336 + $0x39] sm:$0xff] %vm258, %v309
      %343 = vst.msk [vmem:[%s336 + $0x49] sm:$0xff] %vm258, %v310
      %344 = vst.msk [vmem:[%s336 + $0x51] sm:$0xff] %vm258, %v311
      %345 = vst.msk [vmem:[%s336 + $0x61] sm:$0xff] %vm258, %v312
      %346 = vst.msk [vmem:[%s336 + $0x69] sm:$0xff] %vm258, %v313
      %347 = vst.msk [vmem:[%s336 + $0x79] sm:$0xff] %vm258, %v314
      %348 = vst.msk [vmem:[%s336 + $0x81] sm:$0xff] %vm258, %v315
      %349 = vst.msk [vmem:[%s336 + $0x91] sm:$0xff] %vm258, %v316
      %350 = vst.msk [vmem:[%s336 + $0x99] sm:$0xff] %vm258, %v317
      %351 = vst.msk [vmem:[%s336 + $0xa9] sm:$0xff] %vm258, %v318
      %352 = vst.msk [vmem:[%s336 + $0xb1] sm:$0xff] %vm258, %v319
      %353 = vst.msk [vmem:[%s336 + $0xc1] sm:$0xff] %vm258, %v320
      %354 = vst.msk [vmem:[%s336 + $0xc9] sm:$0xff] %vm258, %v321
      %355 = vst.msk [vmem:[%s336 + $0xd9] sm:$0xff] %vm258, %v322
      %356 = vst.msk [vmem:[%s336 + $0xe1] sm:$0xff] %vm258, %v323
      %357 = vst.msk [vmem:[%s336 + $0xf1] sm:$0xff] %vm258, %v324
      %358 = vst.msk [vmem:[%s336 + $0xf9] sm:$0xff] %vm258, %v325
      %359 = vst.msk [vmem:[%s336 + $0x109] sm:$0xff] %vm258, %v326
      %360 = vst.msk [vmem:[%s336 + $0x111] sm:$0xff] %vm258, %v327
      %361 = vst.msk [vmem:[%s336 + $0x121] sm:$0xff] %vm258, %v328
      %362 = vst.msk [vmem:[%s336 + $0x129] sm:$0xff] %vm258, %v329
      %363 = vst.msk [vmem:[%s336 + $0x139] sm:$0xff] %vm258, %v330
      %364 = vst.msk [vmem:[%s336 + $0x141] sm:$0xff] %vm258, %v331
      %365 = vst.msk [vmem:[%s336 + $0x151] sm:$0xff] %vm258, %v332
      %366 = vst.msk [vmem:[%s336 + $0x159] sm:$0xff] %vm258, %v333
      %367 = vst.msk [vmem:[%s336 + $0x169] sm:$0xff] %vm258, %v334
      %368 = vst.msk [vmem:[%s336 + $0x171] sm:$0xff] %vm258, %v335
      %v369 = vld [vmem:[#allocation2] sm:$0xff]
      %v370 = vld [vmem:[#allocation2 + $0x8] sm:$0xff]
      %v371 = vld [vmem:[#allocation2 + $0x10] sm:$0x3]
      %v372 = vld [vmem:[#allocation2 + $0x18] sm:$0xff]
      %v373 = vld [vmem:[#allocation2 + $0x20] sm:$0xff]
      %v374 = vld [vmem:[#allocation2 + $0x28] sm:$0x3]
      %v375 = vld [vmem:[#allocation2 + $0x30] sm:$0xff]
      %v376 = vld [vmem:[#allocation2 + $0x38] sm:$0xff]
      %v377 = vld [vmem:[#allocation2 + $0x40] sm:$0x3]
      %v378 = vld [vmem:[#allocation2 + $0x48] sm:$0xff]
      %v379 = vld [vmem:[#allocation2 + $0x50] sm:$0xff]
      %v380 = vld [vmem:[#allocation2 + $0x58] sm:$0x3]
      %v381 = vld [vmem:[#allocation2 + $0x60] sm:$0xff]
      %v382 = vld [vmem:[#allocation2 + $0x68] sm:$0xff]
      %v383 = vld [vmem:[#allocation2 + $0x70] sm:$0x3]
      %v384 = vld [vmem:[#allocation2 + $0x78] sm:$0xff]
      %v385 = vld [vmem:[#allocation2 + $0x80] sm:$0xff]
      %v386 = vld [vmem:[#allocation2 + $0x88] sm:$0x3]
      %v387 = vld [vmem:[#allocation2 + $0x90] sm:$0xff]
      %v388 = vld [vmem:[#allocation2 + $0x98] sm:$0xff]
      %v389 = vld [vmem:[#allocation2 + $0xa0] sm:$0x3]
      %v390 = vld [vmem:[#allocation2 + $0xa8] sm:$0xff]
      %v391 = vld [vmem:[#allocation2 + $0xb0] sm:$0xff]
      %v392 = vld [vmem:[#allocation2 + $0xb8] sm:$0x3]
      %v393 = vld [vmem:[#allocation2 + $0xc0] sm:$0xff]
      %v394 = vld [vmem:[#allocation2 + $0xc8] sm:$0xff]
      %v395 = vld [vmem:[#allocation2 + $0xd0] sm:$0x3]
      %v396 = vld [vmem:[#allocation2 + $0xd8] sm:$0xff]
      %v397 = vld [vmem:[#allocation2 + $0xe0] sm:$0xff]
      %v398 = vld [vmem:[#allocation2 + $0xe8] sm:$0x3]
      %v399 = vld [vmem:[#allocation2 + $0xf0] sm:$0xff]
      %v400 = vld [vmem:[#allocation2 + $0xf8] sm:$0xff]
      %v401 = vld [vmem:[#allocation2 + $0x100] sm:$0x3]
      %v402 = vld [vmem:[#allocation2 + $0x108] sm:$0xff]
      %v403 = vld [vmem:[#allocation2 + $0x110] sm:$0xff]
      %v404 = vld [vmem:[#allocation2 + $0x118] sm:$0x3]
      %v405 = vld [vmem:[#allocation2 + $0x120] sm:$0xff]
      %v406 = vld [vmem:[#allocation2 + $0x128] sm:$0xff]
      %v407 = vld [vmem:[#allocation2 + $0x130] sm:$0x3]
      %v408 = vld [vmem:[#allocation2 + $0x138] sm:$0xff]
      %v409 = vld [vmem:[#allocation2 + $0x140] sm:$0xff]
      %v410 = vld [vmem:[#allocation2 + $0x148] sm:$0x3]
      %v411 = vld [vmem:[#allocation2 + $0x150] sm:$0xff]
      %v412 = vld [vmem:[#allocation2 + $0x158] sm:$0xff]
      %v413 = vld [vmem:[#allocation2 + $0x160] sm:$0x3]
      %v414 = vld [vmem:[#allocation2 + $0x168] sm:$0xff]
      %v415 = vld [vmem:[#allocation2 + $0x170] sm:$0xff]
      %v416 = vld [vmem:[#allocation2 + $0x178] sm:$0x3]
      %v417 = vld [vmem:[#allocation2 + $0x180] sm:$0xff]
      %v418 = vld [vmem:[#allocation2 + $0x188] sm:$0xff]
      %v419 = vld [vmem:[#allocation2 + $0x190] sm:$0x3]
      %v420 = vld [vmem:[#allocation2 + $0x198] sm:$0xff]
      %v421 = vld [vmem:[#allocation2 + $0x1a0] sm:$0xff]
      %v422 = vld [vmem:[#allocation2 + $0x1a8] sm:$0x3]
      %v423 = vpack.c.bf16 %v369, %v369
      %v424 = vpack.c.bf16 %v370, %v370
      %v425 = vpack.c.bf16 %v371, %v371
      %v426 = vpack.c.bf16 %v372, %v372
      %v427 = vpack.c.bf16 %v373, %v373
      %v428 = vpack.c.bf16 %v374, %v374
      %v429 = vpack.c.bf16 %v375, %v375
      %v430 = vpack.c.bf16 %v376, %v376
      %v431 = vpack.c.bf16 %v377, %v377
      %v432 = vpack.c.bf16 %v378, %v378
      %v433 = vpack.c.bf16 %v379, %v379
      %v434 = vpack.c.bf16 %v380, %v380
      %v435 = vpack.c.bf16 %v381, %v381
      %v436 = vpack.c.bf16 %v382, %v382
      %v437 = vpack.c.bf16 %v383, %v383
      %v438 = vpack.c.bf16 %v384, %v384
      %v439 = vpack.c.bf16 %v385, %v385
      %v440 = vpack.c.bf16 %v386, %v386
      %v441 = vpack.c.bf16 %v387, %v387
      %v442 = vpack.c.bf16 %v388, %v388
      %v443 = vpack.c.bf16 %v389, %v389
      %v444 = vpack.c.bf16 %v390, %v390
      %v445 = vpack.c.bf16 %v391, %v391
      %v446 = vpack.c.bf16 %v392, %v392
      %v447 = vpack.c.bf16 %v393, %v393
      %v448 = vpack.c.bf16 %v394, %v394
      %v449 = vpack.c.bf16 %v395, %v395
      %v450 = vpack.c.bf16 %v396, %v396
      %v451 = vpack.c.bf16 %v397, %v397
      %v452 = vpack.c.bf16 %v398, %v398
      %v453 = vpack.c.bf16 %v399, %v399
      %v454 = vpack.c.bf16 %v400, %v400
      %v455 = vpack.c.bf16 %v401, %v401
      %v456 = vpack.c.bf16 %v402, %v402
      %v457 = vpack.c.bf16 %v403, %v403
      %v458 = vpack.c.bf16 %v404, %v404
      %v459 = vpack.c.bf16 %v405, %v405
      %v460 = vpack.c.bf16 %v406, %v406
      %v461 = vpack.c.bf16 %v407, %v407
      %v462 = vpack.c.bf16 %v408, %v408
      %v463 = vpack.c.bf16 %v409, %v409
      %v464 = vpack.c.bf16 %v410, %v410
      %v465 = vpack.c.bf16 %v411, %v411
      %v466 = vpack.c.bf16 %v412, %v412
      %v467 = vpack.c.bf16 %v413, %v413
      %v468 = vpack.c.bf16 %v414, %v414
      %v469 = vpack.c.bf16 %v415, %v415
      %v470 = vpack.c.bf16 %v416, %v416
      %v471 = vpack.c.bf16 %v417, %v417
      %v472 = vpack.c.bf16 %v418, %v418
      %v473 = vpack.c.bf16 %v419, %v419
      %v474 = vpack.c.bf16 %v420, %v420
      %v475 = vpack.c.bf16 %v421, %v421
      %v476 = vpack.c.bf16 %v422, %v422
      %v477 = vld [vmem:[%s1] sm:$0x3]
      %s478 = scalar_lea.vmem %s1, 2
      %v479 = vld [vmem:[%s478] sm:$0x3]
      %vm480 = vsmask.f32 3328
      %vm481 = vsmask.f32 7440
      %vm482 = vmor %vm480, %vm481
      %v484 = vshrl.u32 %v423, 16
      %v486 = vrot.slane %v484, 4
      %v487 = vshll.u32 %v423, 16
      %v489 = vrot.slane %v487, 5
      %v490 = vor.u32 %v486, %v489
      %v491 = vrot.slane %v490, 4
      %v493 = vshll.u32 %v424, 16
      %v495 = vrot.slane %v493, 5
      %v496 = vsel %vm482, %v491, %v495
      %v497 = vshrl.u32 %v424, 16
      %v499 = vrot.slane %v497, 4
      %v500 = vor.u32 %v499, %v495
      %v501 = vrot.slane %v500, 4
      %v503 = vshll.u32 %v425, 16
      %v505 = vrot.slane %v503, 5
      %v506 = vsel %vm482, %v501, %v505
      %v508 = vshrl.u32 %v426, 16
      %v510 = vrot.slane %v508, 4
      %v511 = vshll.u32 %v426, 16
      %v513 = vrot.slane %v511, 5
      %v514 = vor.u32 %v510, %v513
      %v515 = vrot.slane %v514, 4
      %v517 = vshll.u32 %v427, 16
      %v519 = vrot.slane %v517, 5
      %v520 = vsel %vm482, %v515, %v519
      %v521 = vshrl.u32 %v427, 16
      %v523 = vrot.slane %v521, 4
      %v524 = vor.u32 %v523, %v519
      %v525 = vrot.slane %v524, 4
      %v527 = vshll.u32 %v428, 16
      %v529 = vrot.slane %v527, 5
      %v530 = vsel %vm482, %v525, %v529
      %v532 = vshrl.u32 %v429, 16
      %v534 = vrot.slane %v532, 4
      %v535 = vshll.u32 %v429, 16
      %v537 = vrot.slane %v535, 5
      %v538 = vor.u32 %v534, %v537
      %v539 = vrot.slane %v538, 4
      %v541 = vshll.u32 %v430, 16
      %v543 = vrot.slane %v541, 5
      %v544 = vsel %vm482, %v539, %v543
      %v545 = vshrl.u32 %v430, 16
      %v547 = vrot.slane %v545, 4
      %v548 = vor.u32 %v547, %v543
      %v549 = vrot.slane %v548, 4
      %v551 = vshll.u32 %v431, 16
      %v553 = vrot.slane %v551, 5
      %v554 = vsel %vm482, %v549, %v553
      %v556 = vshrl.u32 %v432, 16
      %v558 = vrot.slane %v556, 4
      %v559 = vshll.u32 %v432, 16
      %v561 = vrot.slane %v559, 5
      %v562 = vor.u32 %v558, %v561
      %v563 = vrot.slane %v562, 4
      %v565 = vshll.u32 %v433, 16
      %v567 = vrot.slane %v565, 5
      %v568 = vsel %vm482, %v563, %v567
      %v569 = vshrl.u32 %v433, 16
      %v571 = vrot.slane %v569, 4
      %v572 = vor.u32 %v571, %v567
      %v573 = vrot.slane %v572, 4
      %v575 = vshll.u32 %v434, 16
      %v577 = vrot.slane %v575, 5
      %v578 = vsel %vm482, %v573, %v577
      %v580 = vshrl.u32 %v435, 16
      %v582 = vrot.slane %v580, 4
      %v583 = vshll.u32 %v435, 16
      %v585 = vrot.slane %v583, 5
      %v586 = vor.u32 %v582, %v585
      %v587 = vrot.slane %v586, 4
      %v589 = vshll.u32 %v436, 16
      %v591 = vrot.slane %v589, 5
      %v592 = vsel %vm482, %v587, %v591
      %v593 = vshrl.u32 %v436, 16
      %v595 = vrot.slane %v593, 4
      %v596 = vor.u32 %v595, %v591
      %v597 = vrot.slane %v596, 4
      %v599 = vshll.u32 %v437, 16
      %v601 = vrot.slane %v599, 5
      %v602 = vsel %vm482, %v597, %v601
      %v604 = vshrl.u32 %v438, 16
      %v606 = vrot.slane %v604, 4
      %v607 = vshll.u32 %v438, 16
      %v609 = vrot.slane %v607, 5
      %v610 = vor.u32 %v606, %v609
      %v611 = vrot.slane %v610, 4
      %v613 = vshll.u32 %v439, 16
      %v615 = vrot.slane %v613, 5
      %v616 = vsel %vm482, %v611, %v615
      %v617 = vshrl.u32 %v439, 16
      %v619 = vrot.slane %v617, 4
      %v620 = vor.u32 %v619, %v615
      %v621 = vrot.slane %v620, 4
      %v623 = vshll.u32 %v440, 16
      %v625 = vrot.slane %v623, 5
      %v626 = vsel %vm482, %v621, %v625
      %v628 = vshrl.u32 %v441, 16
      %v630 = vrot.slane %v628, 4
      %v631 = vshll.u32 %v441, 16
      %v633 = vrot.slane %v631, 5
      %v634 = vor.u32 %v630, %v633
      %v635 = vrot.slane %v634, 4
      %v637 = vshll.u32 %v442, 16
      %v639 = vrot.slane %v637, 5
      %v640 = vsel %vm482, %v635, %v639
      %v641 = vshrl.u32 %v442, 16
      %v643 = vrot.slane %v641, 4
      %v644 = vor.u32 %v643, %v639
      %v645 = vrot.slane %v644, 4
      %v647 = vshll.u32 %v443, 16
      %v649 = vrot.slane %v647, 5
      %v650 = vsel %vm482, %v645, %v649
      %v652 = vshrl.u32 %v444, 16
      %v654 = vrot.slane %v652, 4
      %v655 = vshll.u32 %v444, 16
      %v657 = vrot.slane %v655, 5
      %v658 = vor.u32 %v654, %v657
      %v659 = vrot.slane %v658, 4
      %v661 = vshll.u32 %v445, 16
      %v663 = vrot.slane %v661, 5
      %v664 = vsel %vm482, %v659, %v663
      %v665 = vshrl.u32 %v445, 16
      %v667 = vrot.slane %v665, 4
      %v668 = vor.u32 %v667, %v663
      %v669 = vrot.slane %v668, 4
      %v671 = vshll.u32 %v446, 16
      %v673 = vrot.slane %v671, 5
      %v674 = vsel %vm482, %v669, %v673
      %v676 = vshrl.u32 %v447, 16
      %v678 = vrot.slane %v676, 4
      %v679 = vshll.u32 %v447, 16
      %v681 = vrot.slane %v679, 5
      %v682 = vor.u32 %v678, %v681
      %v683 = vrot.slane %v682, 4
      %v685 = vshll.u32 %v448, 16
      %v687 = vrot.slane %v685, 5
      %v688 = vsel %vm482, %v683, %v687
      %v689 = vshrl.u32 %v448, 16
      %v691 = vrot.slane %v689, 4
      %v692 = vor.u32 %v691, %v687
      %v693 = vrot.slane %v692, 4
      %v695 = vshll.u32 %v449, 16
      %v697 = vrot.slane %v695, 5
      %v698 = vsel %vm482, %v693, %v697
      %v700 = vshrl.u32 %v450, 16
      %v702 = vrot.slane %v700, 4
      %v703 = vshll.u32 %v450, 16
      %v705 = vrot.slane %v703, 5
      %v706 = vor.u32 %v702, %v705
      %v707 = vrot.slane %v706, 4
      %v709 = vshll.u32 %v451, 16
      %v711 = vrot.slane %v709, 5
      %v712 = vsel %vm482, %v707, %v711
      %v713 = vshrl.u32 %v451, 16
      %v715 = vrot.slane %v713, 4
      %v716 = vor.u32 %v715, %v711
      %v717 = vrot.slane %v716, 4
      %v719 = vshll.u32 %v452, 16
      %v721 = vrot.slane %v719, 5
      %v722 = vsel %vm482, %v717, %v721
      %v724 = vshrl.u32 %v453, 16
      %v726 = vrot.slane %v724, 4
      %v727 = vshll.u32 %v453, 16
      %v729 = vrot.slane %v727, 5
      %v730 = vor.u32 %v726, %v729
      %v731 = vrot.slane %v730, 4
      %v733 = vshll.u32 %v454, 16
      %v735 = vrot.slane %v733, 5
      %v736 = vsel %vm482, %v731, %v735
      %v737 = vshrl.u32 %v454, 16
      %v739 = vrot.slane %v737, 4
      %v740 = vor.u32 %v739, %v735
      %v741 = vrot.slane %v740, 4
      %v743 = vshll.u32 %v455, 16
      %v745 = vrot.slane %v743, 5
      %v746 = vsel %vm482, %v741, %v745
      %v748 = vshrl.u32 %v456, 16
      %v750 = vrot.slane %v748, 4
      %v751 = vshll.u32 %v456, 16
      %v753 = vrot.slane %v751, 5
      %v754 = vor.u32 %v750, %v753
      %v755 = vrot.slane %v754, 4
      %v757 = vshll.u32 %v457, 16
      %v759 = vrot.slane %v757, 5
      %v760 = vsel %vm482, %v755, %v759
      %v761 = vshrl.u32 %v457, 16
      %v763 = vrot.slane %v761, 4
      %v764 = vor.u32 %v763, %v759
      %v765 = vrot.slane %v764, 4
      %v767 = vshll.u32 %v458, 16
      %v769 = vrot.slane %v767, 5
      %v770 = vsel %vm482, %v765, %v769
      %v772 = vshrl.u32 %v459, 16
      %v774 = vrot.slane %v772, 4
      %v775 = vshll.u32 %v459, 16
      %v777 = vrot.slane %v775, 5
      %v778 = vor.u32 %v774, %v777
      %v779 = vrot.slane %v778, 4
      %v781 = vshll.u32 %v460, 16
      %v783 = vrot.slane %v781, 5
      %v784 = vsel %vm482, %v779, %v783
      %v785 = vshrl.u32 %v460, 16
      %v787 = vrot.slane %v785, 4
      %v788 = vor.u32 %v787, %v783
      %v789 = vrot.slane %v788, 4
      %v791 = vshll.u32 %v461, 16
      %v793 = vrot.slane %v791, 5
      %v794 = vsel %vm482, %v789, %v793
      %v796 = vshrl.u32 %v462, 16
      %v798 = vrot.slane %v796, 4
      %v799 = vshll.u32 %v462, 16
      %v801 = vrot.slane %v799, 5
      %v802 = vor.u32 %v798, %v801
      %v803 = vrot.slane %v802, 4
      %v805 = vshll.u32 %v463, 16
      %v807 = vrot.slane %v805, 5
      %v808 = vsel %vm482, %v803, %v807
      %v809 = vshrl.u32 %v463, 16
      %v811 = vrot.slane %v809, 4
      %v812 = vor.u32 %v811, %v807
      %v813 = vrot.slane %v812, 4
      %v815 = vshll.u32 %v464, 16
      %v817 = vrot.slane %v815, 5
      %v818 = vsel %vm482, %v813, %v817
      %v820 = vshrl.u32 %v465, 16
      %v822 = vrot.slane %v820, 4
      %v823 = vshll.u32 %v465, 16
      %v825 = vrot.slane %v823, 5
      %v826 = vor.u32 %v822, %v825
      %v827 = vrot.slane %v826, 4
      %v829 = vshll.u32 %v466, 16
      %v831 = vrot.slane %v829, 5
      %v832 = vsel %vm482, %v827, %v831
      %v833 = vshrl.u32 %v466, 16
      %v835 = vrot.slane %v833, 4
      %v836 = vor.u32 %v835, %v831
      %v837 = vrot.slane %v836, 4
      %v839 = vshll.u32 %v467, 16
      %v841 = vrot.slane %v839, 5
      %v842 = vsel %vm482, %v837, %v841
      %v844 = vshrl.u32 %v468, 16
      %v846 = vrot.slane %v844, 4
      %v847 = vshll.u32 %v468, 16
      %v849 = vrot.slane %v847, 5
      %v850 = vor.u32 %v846, %v849
      %v851 = vrot.slane %v850, 4
      %v853 = vshll.u32 %v469, 16
      %v855 = vrot.slane %v853, 5
      %v856 = vsel %vm482, %v851, %v855
      %v857 = vshrl.u32 %v469, 16
      %v859 = vrot.slane %v857, 4
      %v860 = vor.u32 %v859, %v855
      %v861 = vrot.slane %v860, 4
      %v863 = vshll.u32 %v470, 16
      %v865 = vrot.slane %v863, 5
      %v866 = vsel %vm482, %v861, %v865
      %v867 = vunpack.c.l.b16 %v496
      %v868 = vunpack.c.l.b16 %v506
      %v869 = vunpack.c.l.b16 %v520
      %v870 = vunpack.c.l.b16 %v530
      %v871 = vunpack.c.l.b16 %v544
      %v872 = vunpack.c.l.b16 %v554
      %v873 = vunpack.c.l.b16 %v568
      %v874 = vunpack.c.l.b16 %v578
      %v875 = vunpack.c.l.b16 %v592
      %v876 = vunpack.c.l.b16 %v602
      %v877 = vunpack.c.l.b16 %v616
      %v878 = vunpack.c.l.b16 %v626
      %v879 = vunpack.c.l.b16 %v640
      %v880 = vunpack.c.l.b16 %v650
      %v881 = vunpack.c.l.b16 %v664
      %v882 = vunpack.c.l.b16 %v674
      %v883 = vunpack.c.l.b16 %v688
      %v884 = vunpack.c.l.b16 %v698
      %v885 = vunpack.c.l.b16 %v712
      %v886 = vunpack.c.l.b16 %v722
      %v887 = vunpack.c.l.b16 %v736
      %v888 = vunpack.c.l.b16 %v746
      %v889 = vunpack.c.l.b16 %v760
      %v890 = vunpack.c.l.b16 %v770
      %v891 = vunpack.c.l.b16 %v784
      %v892 = vunpack.c.l.b16 %v794
      %v893 = vunpack.c.l.b16 %v808
      %v894 = vunpack.c.l.b16 %v818
      %v895 = vunpack.c.l.b16 %v832
      %v896 = vunpack.c.l.b16 %v842
      %v897 = vunpack.c.l.b16 %v856
      %v898 = vunpack.c.l.b16 %v866
      %v899 = vpack.c.b16 %v868, %v867
      %v900 = vpack.c.b16 %v870, %v869
      %v901 = vpack.c.b16 %v872, %v871
      %v902 = vpack.c.b16 %v874, %v873
      %v903 = vpack.c.b16 %v876, %v875
      %v904 = vpack.c.b16 %v878, %v877
      %v905 = vpack.c.b16 %v880, %v879
      %v906 = vpack.c.b16 %v882, %v881
      %v907 = vpack.c.b16 %v884, %v883
      %v908 = vpack.c.b16 %v886, %v885
      %v909 = vpack.c.b16 %v888, %v887
      %v910 = vpack.c.b16 %v890, %v889
      %v911 = vpack.c.b16 %v892, %v891
      %v912 = vpack.c.b16 %v894, %v893
      %v913 = vpack.c.b16 %v896, %v895
      %v914 = vpack.c.b16 %v898, %v897
      %v916 = vsel %vm258, %v899, 0
      %v919 = vsel %vm258, %v900, 0
      %v922 = vsel %vm258, %v901, 0
      %v925 = vsel %vm258, %v902, 0
      %v928 = vsel %vm258, %v903, 0
      %v931 = vsel %vm258, %v904, 0
      %v934 = vsel %vm258, %v905, 0
      %v937 = vsel %vm258, %v906, 0
      %v940 = vsel %vm258, %v907, 0
      %v943 = vsel %vm258, %v908, 0
      %v946 = vsel %vm258, %v909, 0
      %v949 = vsel %vm258, %v910, 0
      %v952 = vsel %vm258, %v911, 0
      %v955 = vsel %vm258, %v912, 0
      %v958 = vsel %vm258, %v913, 0
      %v961 = vsel %vm258, %v914, 0
      %vm963 = vcmask 1041408
      %v965 = vsel %vm963, %v479, 0
      %967 = vmatpush.bf16.msra.mxu0 0
      %968 = vmatpush.bf16.msra.mxu0 0
      %969 = vmatpush.bf16.msra.mxu0 0
      %970 = vmatpush.bf16.msra.mxu0 0
      %971 = vmatpush.bf16.msra.mxu0 0
      %972 = vmatpush.bf16.msra.mxu0 0
      %973 = vmatpush.bf16.msra.mxu0 0
      %974 = vmatpush.bf16.msra.mxu0 %v965
      %975 = vmatmul.bf16.gmra.mxu0 %v916
      %v976 = vpop.f32.mrf.mxu0
      %v977 = vadd.f32 0.0, %v976
      %v978 = vpop.f32.mrf.mxu0
      %v979 = vadd.f32 0.0, %v978
      %980 = vmatmul.bf16.gmra.mxu0 %v919
      %v981 = vpop.f32.mrf.mxu0
      %v982 = vadd.f32 0.0, %v981
      %v983 = vpop.f32.mrf.mxu0
      %v984 = vadd.f32 0.0, %v983
      %985 = vmatmul.bf16.gmra.mxu0 %v922
      %v986 = vpop.f32.mrf.mxu0
      %v987 = vadd.f32 0.0, %v986
      %v988 = vpop.f32.mrf.mxu0
      %v989 = vadd.f32 0.0, %v988
      %990 = vmatmul.bf16.gmra.mxu0 %v925
      %v991 = vpop.f32.mrf.mxu0
      %v992 = vadd.f32 0.0, %v991
      %v993 = vpop.f32.mrf.mxu0
      %v994 = vadd.f32 0.0, %v993
      %995 = vmatmul.bf16.gmra.mxu0 %v928
      %v996 = vpop.f32.mrf.mxu0
      %v997 = vadd.f32 0.0, %v996
      %v998 = vpop.f32.mrf.mxu0
      %v999 = vadd.f32 0.0, %v998
      %1000 = vmatmul.bf16.gmra.mxu0 %v931
      %v1001 = vpop.f32.mrf.mxu0
      %v1002 = vadd.f32 0.0, %v1001
      %v1003 = vpop.f32.mrf.mxu0
      %v1004 = vadd.f32 0.0, %v1003
      %1005 = vmatmul.bf16.gmra.mxu0 %v934
      %v1006 = vpop.f32.mrf.mxu0
      %v1007 = vadd.f32 0.0, %v1006
      %v1008 = vpop.f32.mrf.mxu0
      %v1009 = vadd.f32 0.0, %v1008
      %1010 = vmatmul.bf16.gmra.mxu0 %v937
      %v1011 = vpop.f32.mrf.mxu0
      %v1012 = vadd.f32 0.0, %v1011
      %v1013 = vpop.f32.mrf.mxu0
      %v1014 = vadd.f32 0.0, %v1013
      %1015 = vmatmul.bf16.gmra.mxu0 %v940
      %v1016 = vpop.f32.mrf.mxu0
      %v1017 = vadd.f32 0.0, %v1016
      %v1018 = vpop.f32.mrf.mxu0
      %v1019 = vadd.f32 0.0, %v1018
      %1020 = vmatmul.bf16.gmra.mxu0 %v943
      %v1021 = vpop.f32.mrf.mxu0
      %v1022 = vadd.f32 0.0, %v1021
      %v1023 = vpop.f32.mrf.mxu0
      %v1024 = vadd.f32 0.0, %v1023
      %1025 = vmatmul.bf16.gmra.mxu0 %v946
      %v1026 = vpop.f32.mrf.mxu0
      %v1027 = vadd.f32 0.0, %v1026
      %v1028 = vpop.f32.mrf.mxu0
      %v1029 = vadd.f32 0.0, %v1028
      %1030 = vmatmul.bf16.gmra.mxu0 %v949
      %v1031 = vpop.f32.mrf.mxu0
      %v1032 = vadd.f32 0.0, %v1031
      %v1033 = vpop.f32.mrf.mxu0
      %v1034 = vadd.f32 0.0, %v1033
      %1035 = vmatmul.bf16.gmra.mxu0 %v952
      %v1036 = vpop.f32.mrf.mxu0
      %v1037 = vadd.f32 0.0, %v1036
      %v1038 = vpop.f32.mrf.mxu0
      %v1039 = vadd.f32 0.0, %v1038
      %1040 = vmatmul.bf16.gmra.mxu0 %v955
      %v1041 = vpop.f32.mrf.mxu0
      %v1042 = vadd.f32 0.0, %v1041
      %v1043 = vpop.f32.mrf.mxu0
      %v1044 = vadd.f32 0.0, %v1043
      %1045 = vmatmul.bf16.gmra.mxu0 %v958
      %v1046 = vpop.f32.mrf.mxu0
      %v1047 = vadd.f32 0.0, %v1046
      %v1048 = vpop.f32.mrf.mxu0
      %v1049 = vadd.f32 0.0, %v1048
      %1050 = vmatmul.bf16.gmra.mxu0 %v961
      %v1051 = vpop.f32.mrf.mxu0
      %v1052 = vadd.f32 0.0, %v1051
      %v1053 = vpop.f32.mrf.mxu0
      %v1054 = vadd.f32 0.0, %v1053
      %1055 = vdwg.mxu0
      %v1088 = vunpack.c.l.b16 %v423
      %v1089 = vunpack.c.l.b16 %v424
      %v1090 = vunpack.c.l.b16 %v426
      %v1091 = vunpack.c.l.b16 %v427
      %v1092 = vunpack.c.l.b16 %v429
      %v1093 = vunpack.c.l.b16 %v430
      %v1094 = vunpack.c.l.b16 %v432
      %v1095 = vunpack.c.l.b16 %v433
      %v1096 = vunpack.c.l.b16 %v435
      %v1097 = vunpack.c.l.b16 %v436
      %v1098 = vunpack.c.l.b16 %v438
      %v1099 = vunpack.c.l.b16 %v439
      %v1100 = vunpack.c.l.b16 %v441
      %v1101 = vunpack.c.l.b16 %v442
      %v1102 = vunpack.c.l.b16 %v444
      %v1103 = vunpack.c.l.b16 %v445
      %v1104 = vunpack.c.l.b16 %v447
      %v1105 = vunpack.c.l.b16 %v448
      %v1106 = vunpack.c.l.b16 %v450
      %v1107 = vunpack.c.l.b16 %v451
      %v1108 = vunpack.c.l.b16 %v453
      %v1109 = vunpack.c.l.b16 %v454
      %v1110 = vunpack.c.l.b16 %v456
      %v1111 = vunpack.c.l.b16 %v457
      %v1112 = vunpack.c.l.b16 %v459
      %v1113 = vunpack.c.l.b16 %v460
      %v1114 = vunpack.c.l.b16 %v462
      %v1115 = vunpack.c.l.b16 %v463
      %v1116 = vunpack.c.l.b16 %v465
      %v1117 = vunpack.c.l.b16 %v466
      %v1118 = vunpack.c.l.b16 %v468
      %v1119 = vunpack.c.l.b16 %v469
      %v1120 = vpack.c.b16 %v1089, %v1088
      %v1121 = vpack.c.b16 %v1091, %v1090
      %v1122 = vpack.c.b16 %v1093, %v1092
      %v1123 = vpack.c.b16 %v1095, %v1094
      %v1124 = vpack.c.b16 %v1097, %v1096
      %v1125 = vpack.c.b16 %v1099, %v1098
      %v1126 = vpack.c.b16 %v1101, %v1100
      %v1127 = vpack.c.b16 %v1103, %v1102
      %v1128 = vpack.c.b16 %v1105, %v1104
      %v1129 = vpack.c.b16 %v1107, %v1106
      %v1130 = vpack.c.b16 %v1109, %v1108
      %v1131 = vpack.c.b16 %v1111, %v1110
      %v1132 = vpack.c.b16 %v1113, %v1112
      %v1133 = vpack.c.b16 %v1115, %v1114
      %v1134 = vpack.c.b16 %v1117, %v1116
      %v1135 = vpack.c.b16 %v1119, %v1118
      %v1137 = vsel %vm258, %v1120, 0
      %v1140 = vsel %vm258, %v1121, 0
      %v1143 = vsel %vm258, %v1122, 0
      %v1146 = vsel %vm258, %v1123, 0
      %v1149 = vsel %vm258, %v1124, 0
      %v1152 = vsel %vm258, %v1125, 0
      %v1155 = vsel %vm258, %v1126, 0
      %v1158 = vsel %vm258, %v1127, 0
      %v1161 = vsel %vm258, %v1128, 0
      %v1164 = vsel %vm258, %v1129, 0
      %v1167 = vsel %vm258, %v1130, 0
      %v1170 = vsel %vm258, %v1131, 0
      %v1173 = vsel %vm258, %v1132, 0
      %v1176 = vsel %vm258, %v1133, 0
      %v1179 = vsel %vm258, %v1134, 0
      %v1182 = vsel %vm258, %v1135, 0
      %v1185 = vsel %vm963, %v477, 0
      %1187 = vmatpush.bf16.msra.mxu0 0
      %1188 = vmatpush.bf16.msra.mxu0 0
      %1189 = vmatpush.bf16.msra.mxu0 0
      %1190 = vmatpush.bf16.msra.mxu0 0
      %1191 = vmatpush.bf16.msra.mxu0 0
      %1192 = vmatpush.bf16.msra.mxu0 0
      %1193 = vmatpush.bf16.msra.mxu0 0
      %1194 = vmatpush.bf16.msra.mxu0 %v1185
      %1195 = vmatmul.bf16.gmra.mxu0 %v1137
      %v1196 = vpop.f32.mrf.mxu0
      %v1197 = vadd.f32 %v977, %v1196
      %v1198 = vpop.f32.mrf.mxu0
      %v1199 = vadd.f32 %v979, %v1198
      %1200 = vmatmul.bf16.gmra.mxu0 %v1140
      %v1201 = vpop.f32.mrf.mxu0
      %v1202 = vadd.f32 %v982, %v1201
      %v1203 = vpop.f32.mrf.mxu0
      %v1204 = vadd.f32 %v984, %v1203
      %1205 = vmatmul.bf16.gmra.mxu0 %v1143
      %v1206 = vpop.f32.mrf.mxu0
      %v1207 = vadd.f32 %v987, %v1206
      %v1208 = vpop.f32.mrf.mxu0
      %v1209 = vadd.f32 %v989, %v1208
      %1210 = vmatmul.bf16.gmra.mxu0 %v1146
      %v1211 = vpop.f32.mrf.mxu0
      %v1212 = vadd.f32 %v992, %v1211
      %v1213 = vpop.f32.mrf.mxu0
      %v1214 = vadd.f32 %v994, %v1213
      %1215 = vmatmul.bf16.gmra.mxu0 %v1149
      %v1216 = vpop.f32.mrf.mxu0
      %v1217 = vadd.f32 %v997, %v1216
      %v1218 = vpop.f32.mrf.mxu0
      %v1219 = vadd.f32 %v999, %v1218
      %1220 = vmatmul.bf16.gmra.mxu0 %v1152
      %v1221 = vpop.f32.mrf.mxu0
      %v1222 = vadd.f32 %v1002, %v1221
      %v1223 = vpop.f32.mrf.mxu0
      %v1224 = vadd.f32 %v1004, %v1223
      %1225 = vmatmul.bf16.gmra.mxu0 %v1155
      %v1226 = vpop.f32.mrf.mxu0
      %v1227 = vadd.f32 %v1007, %v1226
      %v1228 = vpop.f32.mrf.mxu0
      %v1229 = vadd.f32 %v1009, %v1228
      %1230 = vmatmul.bf16.gmra.mxu0 %v1158
      %v1231 = vpop.f32.mrf.mxu0
      %v1232 = vadd.f32 %v1012, %v1231
      %v1233 = vpop.f32.mrf.mxu0
      %v1234 = vadd.f32 %v1014, %v1233
      %1235 = vmatmul.bf16.gmra.mxu0 %v1161
      %v1236 = vpop.f32.mrf.mxu0
      %v1237 = vadd.f32 %v1017, %v1236
      %v1238 = vpop.f32.mrf.mxu0
      %v1239 = vadd.f32 %v1019, %v1238
      %1240 = vmatmul.bf16.gmra.mxu0 %v1164
      %v1241 = vpop.f32.mrf.mxu0
      %v1242 = vadd.f32 %v1022, %v1241
      %v1243 = vpop.f32.mrf.mxu0
      %v1244 = vadd.f32 %v1024, %v1243
      %1245 = vmatmul.bf16.gmra.mxu0 %v1167
      %v1246 = vpop.f32.mrf.mxu0
      %v1247 = vadd.f32 %v1027, %v1246
      %v1248 = vpop.f32.mrf.mxu0
      %v1249 = vadd.f32 %v1029, %v1248
      %1250 = vmatmul.bf16.gmra.mxu0 %v1170
      %v1251 = vpop.f32.mrf.mxu0
      %v1252 = vadd.f32 %v1032, %v1251
      %v1253 = vpop.f32.mrf.mxu0
      %v1254 = vadd.f32 %v1034, %v1253
      %1255 = vmatmul.bf16.gmra.mxu0 %v1173
      %v1256 = vpop.f32.mrf.mxu0
      %v1257 = vadd.f32 %v1037, %v1256
      %v1258 = vpop.f32.mrf.mxu0
      %v1259 = vadd.f32 %v1039, %v1258
      %1260 = vmatmul.bf16.gmra.mxu0 %v1176
      %v1261 = vpop.f32.mrf.mxu0
      %v1262 = vadd.f32 %v1042, %v1261
      %v1263 = vpop.f32.mrf.mxu0
      %v1264 = vadd.f32 %v1044, %v1263
      %1265 = vmatmul.bf16.gmra.mxu0 %v1179
      %v1266 = vpop.f32.mrf.mxu0
      %v1267 = vadd.f32 %v1047, %v1266
      %v1268 = vpop.f32.mrf.mxu0
      %v1269 = vadd.f32 %v1049, %v1268
      %1270 = vmatmul.bf16.gmra.mxu0 %v1182
      %v1271 = vpop.f32.mrf.mxu0
      %v1272 = vadd.f32 %v1052, %v1271
      %v1273 = vpop.f32.mrf.mxu0
      %v1274 = vadd.f32 %v1054, %v1273
      %1275 = vdwg.mxu0
      %s1276 = scalar_lea.vmem %s1, 4
      %v1277 = vld [vmem:[%s1276] sm:$0x3]
      %vm1294 = vcmask 1042432
      %vm1295 = vcmask 1046532
      %vm1296 = vmor %vm1294, %vm1295
      %v1297 = vrot.slane %v423, 5
      %v1298 = vrot.slane %v1297, 4
      %v1299 = vrot.slane %v424, 5
      %v1300 = vsel %vm1296, %v1298, %v1299
      %v1301 = vrot.slane %v1299, 4
      %v1302 = vrot.slane %v425, 5
      %v1303 = vsel %vm1296, %v1301, %v1302
      %v1304 = vrot.slane %v426, 5
      %v1305 = vrot.slane %v1304, 4
      %v1306 = vrot.slane %v427, 5
      %v1307 = vsel %vm1296, %v1305, %v1306
      %v1308 = vrot.slane %v1306, 4
      %v1309 = vrot.slane %v428, 5
      %v1310 = vsel %vm1296, %v1308, %v1309
      %v1311 = vrot.slane %v429, 5
      %v1312 = vrot.slane %v1311, 4
      %v1313 = vrot.slane %v430, 5
      %v1314 = vsel %vm1296, %v1312, %v1313
      %v1315 = vrot.slane %v1313, 4
      %v1316 = vrot.slane %v431, 5
      %v1317 = vsel %vm1296, %v1315, %v1316
      %v1318 = vrot.slane %v432, 5
      %v1319 = vrot.slane %v1318, 4
      %v1320 = vrot.slane %v433, 5
      %v1321 = vsel %vm1296, %v1319, %v1320
      %v1322 = vrot.slane %v1320, 4
      %v1323 = vrot.slane %v434, 5
      %v1324 = vsel %vm1296, %v1322, %v1323
      %v1325 = vrot.slane %v435, 5
      %v1326 = vrot.slane %v1325, 4
      %v1327 = vrot.slane %v436, 5
      %v1328 = vsel %vm1296, %v1326, %v1327
      %v1329 = vrot.slane %v1327, 4
      %v1330 = vrot.slane %v437, 5
      %v1331 = vsel %vm1296, %v1329, %v1330
      %v1332 = vrot.slane %v438, 5
      %v1333 = vrot.slane %v1332, 4
      %v1334 = vrot.slane %v439, 5
      %v1335 = vsel %vm1296, %v1333, %v1334
      %v1336 = vrot.slane %v1334, 4
      %v1337 = vrot.slane %v440, 5
      %v1338 = vsel %vm1296, %v1336, %v1337
      %v1339 = vrot.slane %v441, 5
      %v1340 = vrot.slane %v1339, 4
      %v1341 = vrot.slane %v442, 5
      %v1342 = vsel %vm1296, %v1340, %v1341
      %v1343 = vrot.slane %v1341, 4
      %v1344 = vrot.slane %v443, 5
      %v1345 = vsel %vm1296, %v1343, %v1344
      %v1346 = vrot.slane %v444, 5
      %v1347 = vrot.slane %v1346, 4
      %v1348 = vrot.slane %v445, 5
      %v1349 = vsel %vm1296, %v1347, %v1348
      %v1350 = vrot.slane %v1348, 4
      %v1351 = vrot.slane %v446, 5
      %v1352 = vsel %vm1296, %v1350, %v1351
      %v1353 = vrot.slane %v447, 5
      %v1354 = vrot.slane %v1353, 4
      %v1355 = vrot.slane %v448, 5
      %v1356 = vsel %vm1296, %v1354, %v1355
      %v1357 = vrot.slane %v1355, 4
      %v1358 = vrot.slane %v449, 5
      %v1359 = vsel %vm1296, %v1357, %v1358
      %v1360 = vrot.slane %v450, 5
      %v1361 = vrot.slane %v1360, 4
      %v1362 = vrot.slane %v451, 5
      %v1363 = vsel %vm1296, %v1361, %v1362
      %v1364 = vrot.slane %v1362, 4
      %v1365 = vrot.slane %v452, 5
      %v1366 = vsel %vm1296, %v1364, %v1365
      %v1367 = vrot.slane %v453, 5
      %v1368 = vrot.slane %v1367, 4
      %v1369 = vrot.slane %v454, 5
      %v1370 = vsel %vm1296, %v1368, %v1369
      %v1371 = vrot.slane %v1369, 4
      %v1372 = vrot.slane %v455, 5
      %v1373 = vsel %vm1296, %v1371, %v1372
      %v1374 = vrot.slane %v456, 5
      %v1375 = vrot.slane %v1374, 4
      %v1376 = vrot.slane %v457, 5
      %v1377 = vsel %vm1296, %v1375, %v1376
      %v1378 = vrot.slane %v1376, 4
      %v1379 = vrot.slane %v458, 5
      %v1380 = vsel %vm1296, %v1378, %v1379
      %v1381 = vrot.slane %v459, 5
      %v1382 = vrot.slane %v1381, 4
      %v1383 = vrot.slane %v460, 5
      %v1384 = vsel %vm1296, %v1382, %v1383
      %v1385 = vrot.slane %v1383, 4
      %v1386 = vrot.slane %v461, 5
      %v1387 = vsel %vm1296, %v1385, %v1386
      %v1388 = vrot.slane %v462, 5
      %v1389 = vrot.slane %v1388, 4
      %v1390 = vrot.slane %v463, 5
      %v1391 = vsel %vm1296, %v1389, %v1390
      %v1392 = vrot.slane %v1390, 4
      %v1393 = vrot.slane %v464, 5
      %v1394 = vsel %vm1296, %v1392, %v1393
      %v1395 = vrot.slane %v465, 5
      %v1396 = vrot.slane %v1395, 4
      %v1397 = vrot.slane %v466, 5
      %v1398 = vsel %vm1296, %v1396, %v1397
      %v1399 = vrot.slane %v1397, 4
      %v1400 = vrot.slane %v467, 5
      %v1401 = vsel %vm1296, %v1399, %v1400
      %v1402 = vrot.slane %v468, 5
      %v1403 = vrot.slane %v1402, 4
      %v1404 = vrot.slane %v469, 5
      %v1405 = vsel %vm1296, %v1403, %v1404
      %v1406 = vrot.slane %v1404, 4
      %v1407 = vrot.slane %v470, 5
      %v1408 = vsel %vm1296, %v1406, %v1407
      %v1409 = vunpack.c.l.b16 %v1300
      %v1410 = vunpack.c.l.b16 %v1303
      %v1411 = vunpack.c.l.b16 %v1307
      %v1412 = vunpack.c.l.b16 %v1310
      %v1413 = vunpack.c.l.b16 %v1314
      %v1414 = vunpack.c.l.b16 %v1317
      %v1415 = vunpack.c.l.b16 %v1321
      %v1416 = vunpack.c.l.b16 %v1324
      %v1417 = vunpack.c.l.b16 %v1328
      %v1418 = vunpack.c.l.b16 %v1331
      %v1419 = vunpack.c.l.b16 %v1335
      %v1420 = vunpack.c.l.b16 %v1338
      %v1421 = vunpack.c.l.b16 %v1342
      %v1422 = vunpack.c.l.b16 %v1345
      %v1423 = vunpack.c.l.b16 %v1349
      %v1424 = vunpack.c.l.b16 %v1352
      %v1425 = vunpack.c.l.b16 %v1356
      %v1426 = vunpack.c.l.b16 %v1359
      %v1427 = vunpack.c.l.b16 %v1363
      %v1428 = vunpack.c.l.b16 %v1366
      %v1429 = vunpack.c.l.b16 %v1370
      %v1430 = vunpack.c.l.b16 %v1373
      %v1431 = vunpack.c.l.b16 %v1377
      %v1432 = vunpack.c.l.b16 %v1380
      %v1433 = vunpack.c.l.b16 %v1384
      %v1434 = vunpack.c.l.b16 %v1387
      %v1435 = vunpack.c.l.b16 %v1391
      %v1436 = vunpack.c.l.b16 %v1394
      %v1437 = vunpack.c.l.b16 %v1398
      %v1438 = vunpack.c.l.b16 %v1401
      %v1439 = vunpack.c.l.b16 %v1405
      %v1440 = vunpack.c.l.b16 %v1408
      %v1441 = vpack.c.b16 %v1410, %v1409
      %v1442 = vpack.c.b16 %v1412, %v1411
      %v1443 = vpack.c.b16 %v1414, %v1413
      %v1444 = vpack.c.b16 %v1416, %v1415
      %v1445 = vpack.c.b16 %v1418, %v1417
      %v1446 = vpack.c.b16 %v1420, %v1419
      %v1447 = vpack.c.b16 %v1422, %v1421
      %v1448 = vpack.c.b16 %v1424, %v1423
      %v1449 = vpack.c.b16 %v1426, %v1425
      %v1450 = vpack.c.b16 %v1428, %v1427
      %v1451 = vpack.c.b16 %v1430, %v1429
      %v1452 = vpack.c.b16 %v1432, %v1431
      %v1453 = vpack.c.b16 %v1434, %v1433
      %v1454 = vpack.c.b16 %v1436, %v1435
      %v1455 = vpack.c.b16 %v1438, %v1437
      %v1456 = vpack.c.b16 %v1440, %v1439
      %v1458 = vsel %vm258, %v1441, 0
      %v1461 = vsel %vm258, %v1442, 0
      %v1464 = vsel %vm258, %v1443, 0
      %v1467 = vsel %vm258, %v1444, 0
      %v1470 = vsel %vm258, %v1445, 0
      %v1473 = vsel %vm258, %v1446, 0
      %v1476 = vsel %vm258, %v1447, 0
      %v1479 = vsel %vm258, %v1448, 0
      %v1482 = vsel %vm258, %v1449, 0
      %v1485 = vsel %vm258, %v1450, 0
      %v1488 = vsel %vm258, %v1451, 0
      %v1491 = vsel %vm258, %v1452, 0
      %v1494 = vsel %vm258, %v1453, 0
      %v1497 = vsel %vm258, %v1454, 0
      %v1500 = vsel %vm258, %v1455, 0
      %v1503 = vsel %vm258, %v1456, 0
      %v1506 = vsel %vm963, %v1277, 0
      %1508 = vmatpush.bf16.msra.mxu0 0
      %1509 = vmatpush.bf16.msra.mxu0 0
      %1510 = vmatpush.bf16.msra.mxu0 0
      %1511 = vmatpush.bf16.msra.mxu0 0
      %1512 = vmatpush.bf16.msra.mxu0 0
      %1513 = vmatpush.bf16.msra.mxu0 0
      %1514 = vmatpush.bf16.msra.mxu0 0
      %1515 = vmatpush.bf16.msra.mxu0 %v1506
      %1516 = vmatmul.bf16.gmra.mxu0 %v1458
      %v1517 = vpop.f32.mrf.mxu0
      %v1518 = vadd.f32 0.0, %v1517
      %v1519 = vpop.f32.mrf.mxu0
      %v1520 = vadd.f32 0.0, %v1519
      %1521 = vmatmul.bf16.gmra.mxu0 %v1461
      %v1522 = vpop.f32.mrf.mxu0
      %v1523 = vadd.f32 0.0, %v1522
      %v1524 = vpop.f32.mrf.mxu0
      %v1525 = vadd.f32 0.0, %v1524
      %1526 = vmatmul.bf16.gmra.mxu0 %v1464
      %v1527 = vpop.f32.mrf.mxu0
      %v1528 = vadd.f32 0.0, %v1527
      %v1529 = vpop.f32.mrf.mxu0
      %v1530 = vadd.f32 0.0, %v1529
      %1531 = vmatmul.bf16.gmra.mxu0 %v1467
      %v1532 = vpop.f32.mrf.mxu0
      %v1533 = vadd.f32 0.0, %v1532
      %v1534 = vpop.f32.mrf.mxu0
      %v1535 = vadd.f32 0.0, %v1534
      %1536 = vmatmul.bf16.gmra.mxu0 %v1470
      %v1537 = vpop.f32.mrf.mxu0
      %v1538 = vadd.f32 0.0, %v1537
      %v1539 = vpop.f32.mrf.mxu0
      %v1540 = vadd.f32 0.0, %v1539
      %1541 = vmatmul.bf16.gmra.mxu0 %v1473
      %v1542 = vpop.f32.mrf.mxu0
      %v1543 = vadd.f32 0.0, %v1542
      %v1544 = vpop.f32.mrf.mxu0
      %v1545 = vadd.f32 0.0, %v1544
      %1546 = vmatmul.bf16.gmra.mxu0 %v1476
      %v1547 = vpop.f32.mrf.mxu0
      %v1548 = vadd.f32 0.0, %v1547
      %v1549 = vpop.f32.mrf.mxu0
      %v1550 = vadd.f32 0.0, %v1549
      %1551 = vmatmul.bf16.gmra.mxu0 %v1479
      %v1552 = vpop.f32.mrf.mxu0
      %v1553 = vadd.f32 0.0, %v1552
      %v1554 = vpop.f32.mrf.mxu0
      %v1555 = vadd.f32 0.0, %v1554
      %1556 = vmatmul.bf16.gmra.mxu0 %v1482
      %v1557 = vpop.f32.mrf.mxu0
      %v1558 = vadd.f32 0.0, %v1557
      %v1559 = vpop.f32.mrf.mxu0
      %v1560 = vadd.f32 0.0, %v1559
      %1561 = vmatmul.bf16.gmra.mxu0 %v1485
      %v1562 = vpop.f32.mrf.mxu0
      %v1563 = vadd.f32 0.0, %v1562
      %v1564 = vpop.f32.mrf.mxu0
      %v1565 = vadd.f32 0.0, %v1564
      %1566 = vmatmul.bf16.gmra.mxu0 %v1488
      %v1567 = vpop.f32.mrf.mxu0
      %v1568 = vadd.f32 0.0, %v1567
      %v1569 = vpop.f32.mrf.mxu0
      %v1570 = vadd.f32 0.0, %v1569
      %1571 = vmatmul.bf16.gmra.mxu0 %v1491
      %v1572 = vpop.f32.mrf.mxu0
      %v1573 = vadd.f32 0.0, %v1572
      %v1574 = vpop.f32.mrf.mxu0
      %v1575 = vadd.f32 0.0, %v1574
      %1576 = vmatmul.bf16.gmra.mxu0 %v1494
      %v1577 = vpop.f32.mrf.mxu0
      %v1578 = vadd.f32 0.0, %v1577
      %v1579 = vpop.f32.mrf.mxu0
      %v1580 = vadd.f32 0.0, %v1579
      %1581 = vmatmul.bf16.gmra.mxu0 %v1497
      %v1582 = vpop.f32.mrf.mxu0
      %v1583 = vadd.f32 0.0, %v1582
      %v1584 = vpop.f32.mrf.mxu0
      %v1585 = vadd.f32 0.0, %v1584
      %1586 = vmatmul.bf16.gmra.mxu0 %v1500
      %v1587 = vpop.f32.mrf.mxu0
      %v1588 = vadd.f32 0.0, %v1587
      %v1589 = vpop.f32.mrf.mxu0
      %v1590 = vadd.f32 0.0, %v1589
      %1591 = vmatmul.bf16.gmra.mxu0 %v1503
      %v1592 = vpop.f32.mrf.mxu0
      %v1593 = vadd.f32 0.0, %v1592
      %v1594 = vpop.f32.mrf.mxu0
      %v1595 = vadd.f32 0.0, %v1594
      %1596 = vdwg.mxu0
      %v1597 = vadd.f32 %v1197, %v1518
      %v1598 = vadd.f32 %v1199, %v1520
      %v1599 = vadd.f32 %v1202, %v1523
      %v1600 = vadd.f32 %v1204, %v1525
      %v1601 = vadd.f32 %v1207, %v1528
      %v1602 = vadd.f32 %v1209, %v1530
      %v1603 = vadd.f32 %v1212, %v1533
      %v1604 = vadd.f32 %v1214, %v1535
      %v1605 = vadd.f32 %v1217, %v1538
      %v1606 = vadd.f32 %v1219, %v1540
      %v1607 = vadd.f32 %v1222, %v1543
      %v1608 = vadd.f32 %v1224, %v1545
      %v1609 = vadd.f32 %v1227, %v1548
      %v1610 = vadd.f32 %v1229, %v1550
      %v1611 = vadd.f32 %v1232, %v1553
      %v1612 = vadd.f32 %v1234, %v1555
      %v1613 = vadd.f32 %v1237, %v1558
      %v1614 = vadd.f32 %v1239, %v1560
      %v1615 = vadd.f32 %v1242, %v1563
      %v1616 = vadd.f32 %v1244, %v1565
      %v1617 = vadd.f32 %v1247, %v1568
      %v1618 = vadd.f32 %v1249, %v1570
      %v1619 = vadd.f32 %v1252, %v1573
      %v1620 = vadd.f32 %v1254, %v1575
      %v1621 = vadd.f32 %v1257, %v1578
      %v1622 = vadd.f32 %v1259, %v1580
      %v1623 = vadd.f32 %v1262, %v1583
      %v1624 = vadd.f32 %v1264, %v1585
      %v1625 = vadd.f32 %v1267, %v1588
      %v1626 = vadd.f32 %v1269, %v1590
      %v1627 = vadd.f32 %v1272, %v1593
      %v1628 = vadd.f32 %v1274, %v1595
      %s1629 = scalar_lea.vmem %s1, 6
      %v1630 = vld [vmem:[%s1629] sm:$0x3]
      %v1633 = vunpack.c.l.b16 %v471
      %v1634 = vunpack.c.l.b16 %v472
      %v1635 = vpack.c.b16 %v1634, %v1633
      %v1637 = vsel %vm258, %v1635, 0
      %v1640 = vsel %vm963, %v1630, 0
      %1642 = vmatpush.bf16.msra.mxu0 0
      %1643 = vmatpush.bf16.msra.mxu0 0
      %1644 = vmatpush.bf16.msra.mxu0 0
      %1645 = vmatpush.bf16.msra.mxu0 0
      %1646 = vmatpush.bf16.msra.mxu0 0
      %1647 = vmatpush.bf16.msra.mxu0 0
      %1648 = vmatpush.bf16.msra.mxu0 0
      %1649 = vmatpush.bf16.msra.mxu0 %v1640
      %1650 = vmatmul.bf16.gmra.mxu0 %v1140
      %v1651 = vpop.f32.mrf.mxu0
      %v1652 = vadd.f32 0.0, %v1651
      %v1653 = vpop.f32.mrf.mxu0
      %v1654 = vadd.f32 0.0, %v1653
      %1655 = vmatmul.bf16.gmra.mxu0 %v1143
      %v1656 = vpop.f32.mrf.mxu0
      %v1657 = vadd.f32 0.0, %v1656
      %v1658 = vpop.f32.mrf.mxu0
      %v1659 = vadd.f32 0.0, %v1658
      %1660 = vmatmul.bf16.gmra.mxu0 %v1146
      %v1661 = vpop.f32.mrf.mxu0
      %v1662 = vadd.f32 0.0, %v1661
      %v1663 = vpop.f32.mrf.mxu0
      %v1664 = vadd.f32 0.0, %v1663
      %1665 = vmatmul.bf16.gmra.mxu0 %v1149
      %v1666 = vpop.f32.mrf.mxu0
      %v1667 = vadd.f32 0.0, %v1666
      %v1668 = vpop.f32.mrf.mxu0
      %v1669 = vadd.f32 0.0, %v1668
      %1670 = vmatmul.bf16.gmra.mxu0 %v1152
      %v1671 = vpop.f32.mrf.mxu0
      %v1672 = vadd.f32 0.0, %v1671
      %v1673 = vpop.f32.mrf.mxu0
      %v1674 = vadd.f32 0.0, %v1673
      %1675 = vmatmul.bf16.gmra.mxu0 %v1155
      %v1676 = vpop.f32.mrf.mxu0
      %v1677 = vadd.f32 0.0, %v1676
      %v1678 = vpop.f32.mrf.mxu0
      %v1679 = vadd.f32 0.0, %v1678
      %1680 = vmatmul.bf16.gmra.mxu0 %v1158
      %v1681 = vpop.f32.mrf.mxu0
      %v1682 = vadd.f32 0.0, %v1681
      %v1683 = vpop.f32.mrf.mxu0
      %v1684 = vadd.f32 0.0, %v1683
      %1685 = vmatmul.bf16.gmra.mxu0 %v1161
      %v1686 = vpop.f32.mrf.mxu0
      %v1687 = vadd.f32 0.0, %v1686
      %v1688 = vpop.f32.mrf.mxu0
      %v1689 = vadd.f32 0.0, %v1688
      %1690 = vmatmul.bf16.gmra.mxu0 %v1164
      %v1691 = vpop.f32.mrf.mxu0
      %v1692 = vadd.f32 0.0, %v1691
      %v1693 = vpop.f32.mrf.mxu0
      %v1694 = vadd.f32 0.0, %v1693
      %1695 = vmatmul.bf16.gmra.mxu0 %v1167
      %v1696 = vpop.f32.mrf.mxu0
      %v1697 = vadd.f32 0.0, %v1696
      %v1698 = vpop.f32.mrf.mxu0
      %v1699 = vadd.f32 0.0, %v1698
      %1700 = vmatmul.bf16.gmra.mxu0 %v1170
      %v1701 = vpop.f32.mrf.mxu0
      %v1702 = vadd.f32 0.0, %v1701
      %v1703 = vpop.f32.mrf.mxu0
      %v1704 = vadd.f32 0.0, %v1703
      %1705 = vmatmul.bf16.gmra.mxu0 %v1173
      %v1706 = vpop.f32.mrf.mxu0
      %v1707 = vadd.f32 0.0, %v1706
      %v1708 = vpop.f32.mrf.mxu0
      %v1709 = vadd.f32 0.0, %v1708
      %1710 = vmatmul.bf16.gmra.mxu0 %v1176
      %v1711 = vpop.f32.mrf.mxu0
      %v1712 = vadd.f32 0.0, %v1711
      %v1713 = vpop.f32.mrf.mxu0
      %v1714 = vadd.f32 0.0, %v1713
      %1715 = vmatmul.bf16.gmra.mxu0 %v1179
      %v1716 = vpop.f32.mrf.mxu0
      %v1717 = vadd.f32 0.0, %v1716
      %v1718 = vpop.f32.mrf.mxu0
      %v1719 = vadd.f32 0.0, %v1718
      %1720 = vmatmul.bf16.gmra.mxu0 %v1182
      %v1721 = vpop.f32.mrf.mxu0
      %v1722 = vadd.f32 0.0, %v1721
      %v1723 = vpop.f32.mrf.mxu0
      %v1724 = vadd.f32 0.0, %v1723
      %1725 = vmatmul.bf16.gmra.mxu0 %v1637
      %v1726 = vpop.f32.mrf.mxu0
      %v1727 = vadd.f32 0.0, %v1726
      %v1728 = vpop.f32.mrf.mxu0
      %v1729 = vadd.f32 0.0, %v1728
      %1730 = vdwg.mxu0
      %v1731 = vadd.f32 %v1597, %v1652
      %v1732 = vadd.f32 %v1598, %v1654
      %v1733 = vadd.f32 %v1599, %v1657
      %v1734 = vadd.f32 %v1600, %v1659
      %v1735 = vadd.f32 %v1601, %v1662
      %v1736 = vadd.f32 %v1602, %v1664
      %v1737 = vadd.f32 %v1603, %v1667
      %v1738 = vadd.f32 %v1604, %v1669
      %v1739 = vadd.f32 %v1605, %v1672
      %v1740 = vadd.f32 %v1606, %v1674
      %v1741 = vadd.f32 %v1607, %v1677
      %v1742 = vadd.f32 %v1608, %v1679
      %v1743 = vadd.f32 %v1609, %v1682
      %v1744 = vadd.f32 %v1610, %v1684
      %v1745 = vadd.f32 %v1611, %v1687
      %v1746 = vadd.f32 %v1612, %v1689
      %v1747 = vadd.f32 %v1613, %v1692
      %v1748 = vadd.f32 %v1614, %v1694
      %v1749 = vadd.f32 %v1615, %v1697
      %v1750 = vadd.f32 %v1616, %v1699
      %v1751 = vadd.f32 %v1617, %v1702
      %v1752 = vadd.f32 %v1618, %v1704
      %v1753 = vadd.f32 %v1619, %v1707
      %v1754 = vadd.f32 %v1620, %v1709
      %v1755 = vadd.f32 %v1621, %v1712
      %v1756 = vadd.f32 %v1622, %v1714
      %v1757 = vadd.f32 %v1623, %v1717
      %v1758 = vadd.f32 %v1624, %v1719
      %v1759 = vadd.f32 %v1625, %v1722
      %v1760 = vadd.f32 %v1626, %v1724
      %v1761 = vadd.f32 %v1627, %v1727
      %v1762 = vadd.f32 %v1628, %v1729
      %s1763 = scalar_lea.vmem %s1, 8
      %v1764 = vld [vmem:[%s1763] sm:$0x3]
      %v1766 = vshrl.u32 %v471, 16
      %v1768 = vrot.slane %v1766, 4
      %v1769 = vshll.u32 %v471, 16
      %v1771 = vrot.slane %v1769, 5
      %v1772 = vor.u32 %v1768, %v1771
      %v1773 = vrot.slane %v1772, 4
      %v1775 = vshll.u32 %v472, 16
      %v1777 = vrot.slane %v1775, 5
      %v1778 = vsel %vm482, %v1773, %v1777
      %v1779 = vshrl.u32 %v472, 16
      %v1781 = vrot.slane %v1779, 4
      %v1782 = vor.u32 %v1781, %v1777
      %v1783 = vrot.slane %v1782, 4
      %v1785 = vshll.u32 %v473, 16
      %v1787 = vrot.slane %v1785, 5
      %v1788 = vsel %vm482, %v1783, %v1787
      %v1789 = vunpack.c.l.b16 %v1778
      %v1790 = vunpack.c.l.b16 %v1788
      %v1791 = vpack.c.b16 %v1790, %v1789
      %v1793 = vsel %vm258, %v1791, 0
      %v1796 = vsel %vm963, %v1764, 0
      %1798 = vmatpush.bf16.msra.mxu0 0
      %1799 = vmatpush.bf16.msra.mxu0 0
      %1800 = vmatpush.bf16.msra.mxu0 0
      %1801 = vmatpush.bf16.msra.mxu0 0
      %1802 = vmatpush.bf16.msra.mxu0 0
      %1803 = vmatpush.bf16.msra.mxu0 0
      %1804 = vmatpush.bf16.msra.mxu0 0
      %1805 = vmatpush.bf16.msra.mxu0 %v1796
      %1806 = vmatmul.bf16.gmra.mxu0 %v919
      %v1807 = vpop.f32.mrf.mxu0
      %v1808 = vadd.f32 0.0, %v1807
      %v1809 = vpop.f32.mrf.mxu0
      %v1810 = vadd.f32 0.0, %v1809
      %1811 = vmatmul.bf16.gmra.mxu0 %v922
      %v1812 = vpop.f32.mrf.mxu0
      %v1813 = vadd.f32 0.0, %v1812
      %v1814 = vpop.f32.mrf.mxu0
      %v1815 = vadd.f32 0.0, %v1814
      %1816 = vmatmul.bf16.gmra.mxu0 %v925
      %v1817 = vpop.f32.mrf.mxu0
      %v1818 = vadd.f32 0.0, %v1817
      %v1819 = vpop.f32.mrf.mxu0
      %v1820 = vadd.f32 0.0, %v1819
      %1821 = vmatmul.bf16.gmra.mxu0 %v928
      %v1822 = vpop.f32.mrf.mxu0
      %v1823 = vadd.f32 0.0, %v1822
      %v1824 = vpop.f32.mrf.mxu0
      %v1825 = vadd.f32 0.0, %v1824
      %1826 = vmatmul.bf16.gmra.mxu0 %v931
      %v1827 = vpop.f32.mrf.mxu0
      %v1828 = vadd.f32 0.0, %v1827
      %v1829 = vpop.f32.mrf.mxu0
      %v1830 = vadd.f32 0.0, %v1829
      %1831 = vmatmul.bf16.gmra.mxu0 %v934
      %v1832 = vpop.f32.mrf.mxu0
      %v1833 = vadd.f32 0.0, %v1832
      %v1834 = vpop.f32.mrf.mxu0
      %v1835 = vadd.f32 0.0, %v1834
      %1836 = vmatmul.bf16.gmra.mxu0 %v937
      %v1837 = vpop.f32.mrf.mxu0
      %v1838 = vadd.f32 0.0, %v1837
      %v1839 = vpop.f32.mrf.mxu0
      %v1840 = vadd.f32 0.0, %v1839
      %1841 = vmatmul.bf16.gmra.mxu0 %v940
      %v1842 = vpop.f32.mrf.mxu0
      %v1843 = vadd.f32 0.0, %v1842
      %v1844 = vpop.f32.mrf.mxu0
      %v1845 = vadd.f32 0.0, %v1844
      %1846 = vmatmul.bf16.gmra.mxu0 %v943
      %v1847 = vpop.f32.mrf.mxu0
      %v1848 = vadd.f32 0.0, %v1847
      %v1849 = vpop.f32.mrf.mxu0
      %v1850 = vadd.f32 0.0, %v1849
      %1851 = vmatmul.bf16.gmra.mxu0 %v946
      %v1852 = vpop.f32.mrf.mxu0
      %v1853 = vadd.f32 0.0, %v1852
      %v1854 = vpop.f32.mrf.mxu0
      %v1855 = vadd.f32 0.0, %v1854
      %1856 = vmatmul.bf16.gmra.mxu0 %v949
      %v1857 = vpop.f32.mrf.mxu0
      %v1858 = vadd.f32 0.0, %v1857
      %v1859 = vpop.f32.mrf.mxu0
      %v1860 = vadd.f32 0.0, %v1859
      %1861 = vmatmul.bf16.gmra.mxu0 %v952
      %v1862 = vpop.f32.mrf.mxu0
      %v1863 = vadd.f32 0.0, %v1862
      %v1864 = vpop.f32.mrf.mxu0
      %v1865 = vadd.f32 0.0, %v1864
      %1866 = vmatmul.bf16.gmra.mxu0 %v955
      %v1867 = vpop.f32.mrf.mxu0
      %v1868 = vadd.f32 0.0, %v1867
      %v1869 = vpop.f32.mrf.mxu0
      %v1870 = vadd.f32 0.0, %v1869
      %1871 = vmatmul.bf16.gmra.mxu0 %v958
      %v1872 = vpop.f32.mrf.mxu0
      %v1873 = vadd.f32 0.0, %v1872
      %v1874 = vpop.f32.mrf.mxu0
      %v1875 = vadd.f32 0.0, %v1874
      %1876 = vmatmul.bf16.gmra.mxu0 %v961
      %v1877 = vpop.f32.mrf.mxu0
      %v1878 = vadd.f32 0.0, %v1877
      %v1879 = vpop.f32.mrf.mxu0
      %v1880 = vadd.f32 0.0, %v1879
      %1881 = vmatmul.bf16.gmra.mxu0 %v1793
      %v1882 = vpop.f32.mrf.mxu0
      %v1883 = vadd.f32 0.0, %v1882
      %v1884 = vpop.f32.mrf.mxu0
      %v1885 = vadd.f32 0.0, %v1884
      %1886 = vdwg.mxu0
      %v1887 = vadd.f32 %v1731, %v1808
      %v1888 = vadd.f32 %v1732, %v1810
      %v1889 = vadd.f32 %v1733, %v1813
      %v1890 = vadd.f32 %v1734, %v1815
      %v1891 = vadd.f32 %v1735, %v1818
      %v1892 = vadd.f32 %v1736, %v1820
      %v1893 = vadd.f32 %v1737, %v1823
      %v1894 = vadd.f32 %v1738, %v1825
      %v1895 = vadd.f32 %v1739, %v1828
      %v1896 = vadd.f32 %v1740, %v1830
      %v1897 = vadd.f32 %v1741, %v1833
      %v1898 = vadd.f32 %v1742, %v1835
      %v1899 = vadd.f32 %v1743, %v1838
      %v1900 = vadd.f32 %v1744, %v1840
      %v1901 = vadd.f32 %v1745, %v1843
      %v1902 = vadd.f32 %v1746, %v1845
      %v1903 = vadd.f32 %v1747, %v1848
      %v1904 = vadd.f32 %v1748, %v1850
      %v1905 = vadd.f32 %v1749, %v1853
      %v1906 = vadd.f32 %v1750, %v1855
      %v1907 = vadd.f32 %v1751, %v1858
      %v1908 = vadd.f32 %v1752, %v1860
      %v1909 = vadd.f32 %v1753, %v1863
      %v1910 = vadd.f32 %v1754, %v1865
      %v1911 = vadd.f32 %v1755, %v1868
      %v1912 = vadd.f32 %v1756, %v1870
      %v1913 = vadd.f32 %v1757, %v1873
      %v1914 = vadd.f32 %v1758, %v1875
      %v1915 = vadd.f32 %v1759, %v1878
      %v1916 = vadd.f32 %v1760, %v1880
      %v1917 = vadd.f32 %v1761, %v1883
      %v1918 = vadd.f32 %v1762, %v1885
      %s1919 = scalar_lea.vmem %s1, 10
      %v1920 = vld [vmem:[%s1919] sm:$0x3]
      %v1922 = vrot.slane %v471, 5
      %v1923 = vrot.slane %v1922, 4
      %v1924 = vrot.slane %v472, 5
      %v1925 = vsel %vm1296, %v1923, %v1924
      %v1926 = vrot.slane %v1924, 4
      %v1927 = vrot.slane %v473, 5
      %v1928 = vsel %vm1296, %v1926, %v1927
      %v1929 = vunpack.c.l.b16 %v1925
      %v1930 = vunpack.c.l.b16 %v1928
      %v1931 = vpack.c.b16 %v1930, %v1929
      %v1933 = vsel %vm258, %v1931, 0
      %v1936 = vsel %vm963, %v1920, 0
      %1938 = vmatpush.bf16.msra.mxu0 0
      %1939 = vmatpush.bf16.msra.mxu0 0
      %1940 = vmatpush.bf16.msra.mxu0 0
      %1941 = vmatpush.bf16.msra.mxu0 0
      %1942 = vmatpush.bf16.msra.mxu0 0
      %1943 = vmatpush.bf16.msra.mxu0 0
      %1944 = vmatpush.bf16.msra.mxu0 0
      %1945 = vmatpush.bf16.msra.mxu0 %v1936
      %1946 = vmatmul.bf16.gmra.mxu0 %v1461
      %v1947 = vpop.f32.mrf.mxu0
      %v1948 = vadd.f32 0.0, %v1947
      %v1949 = vpop.f32.mrf.mxu0
      %v1950 = vadd.f32 0.0, %v1949
      %1951 = vmatmul.bf16.gmra.mxu0 %v1464
      %v1952 = vpop.f32.mrf.mxu0
      %v1953 = vadd.f32 0.0, %v1952
      %v1954 = vpop.f32.mrf.mxu0
      %v1955 = vadd.f32 0.0, %v1954
      %1956 = vmatmul.bf16.gmra.mxu0 %v1467
      %v1957 = vpop.f32.mrf.mxu0
      %v1958 = vadd.f32 0.0, %v1957
      %v1959 = vpop.f32.mrf.mxu0
      %v1960 = vadd.f32 0.0, %v1959
      %1961 = vmatmul.bf16.gmra.mxu0 %v1470
      %v1962 = vpop.f32.mrf.mxu0
      %v1963 = vadd.f32 0.0, %v1962
      %v1964 = vpop.f32.mrf.mxu0
      %v1965 = vadd.f32 0.0, %v1964
      %1966 = vmatmul.bf16.gmra.mxu0 %v1473
      %v1967 = vpop.f32.mrf.mxu0
      %v1968 = vadd.f32 0.0, %v1967
      %v1969 = vpop.f32.mrf.mxu0
      %v1970 = vadd.f32 0.0, %v1969
      %1971 = vmatmul.bf16.gmra.mxu0 %v1476
      %v1972 = vpop.f32.mrf.mxu0
      %v1973 = vadd.f32 0.0, %v1972
      %v1974 = vpop.f32.mrf.mxu0
      %v1975 = vadd.f32 0.0, %v1974
      %1976 = vmatmul.bf16.gmra.mxu0 %v1479
      %v1977 = vpop.f32.mrf.mxu0
      %v1978 = vadd.f32 0.0, %v1977
      %v1979 = vpop.f32.mrf.mxu0
      %v1980 = vadd.f32 0.0, %v1979
      %1981 = vmatmul.bf16.gmra.mxu0 %v1482
      %v1982 = vpop.f32.mrf.mxu0
      %v1983 = vadd.f32 0.0, %v1982
      %v1984 = vpop.f32.mrf.mxu0
      %v1985 = vadd.f32 0.0, %v1984
      %1986 = vmatmul.bf16.gmra.mxu0 %v1485
      %v1987 = vpop.f32.mrf.mxu0
      %v1988 = vadd.f32 0.0, %v1987
      %v1989 = vpop.f32.mrf.mxu0
      %v1990 = vadd.f32 0.0, %v1989
      %1991 = vmatmul.bf16.gmra.mxu0 %v1488
      %v1992 = vpop.f32.mrf.mxu0
      %v1993 = vadd.f32 0.0, %v1992
      %v1994 = vpop.f32.mrf.mxu0
      %v1995 = vadd.f32 0.0, %v1994
      %1996 = vmatmul.bf16.gmra.mxu0 %v1491
      %v1997 = vpop.f32.mrf.mxu0
      %v1998 = vadd.f32 0.0, %v1997
      %v1999 = vpop.f32.mrf.mxu0
      %v2000 = vadd.f32 0.0, %v1999
      %2001 = vmatmul.bf16.gmra.mxu0 %v1494
      %v2002 = vpop.f32.mrf.mxu0
      %v2003 = vadd.f32 0.0, %v2002
      %v2004 = vpop.f32.mrf.mxu0
      %v2005 = vadd.f32 0.0, %v2004
      %2006 = vmatmul.bf16.gmra.mxu0 %v1497
      %v2007 = vpop.f32.mrf.mxu0
      %v2008 = vadd.f32 0.0, %v2007
      %v2009 = vpop.f32.mrf.mxu0
      %v2010 = vadd.f32 0.0, %v2009
      %2011 = vmatmul.bf16.gmra.mxu0 %v1500
      %v2012 = vpop.f32.mrf.mxu0
      %v2013 = vadd.f32 0.0, %v2012
      %v2014 = vpop.f32.mrf.mxu0
      %v2015 = vadd.f32 0.0, %v2014
      %2016 = vmatmul.bf16.gmra.mxu0 %v1503
      %v2017 = vpop.f32.mrf.mxu0
      %v2018 = vadd.f32 0.0, %v2017
      %v2019 = vpop.f32.mrf.mxu0
      %v2020 = vadd.f32 0.0, %v2019
      %2021 = vmatmul.bf16.gmra.mxu0 %v1933
      %v2022 = vpop.f32.mrf.mxu0
      %v2023 = vadd.f32 0.0, %v2022
      %v2024 = vpop.f32.mrf.mxu0
      %v2025 = vadd.f32 0.0, %v2024
      %2026 = vdwg.mxu0
      %v2027 = vadd.f32 %v1887, %v1948
      %v2028 = vadd.f32 %v1888, %v1950
      %v2029 = vadd.f32 %v1889, %v1953
      %v2030 = vadd.f32 %v1890, %v1955
      %v2031 = vadd.f32 %v1891, %v1958
      %v2032 = vadd.f32 %v1892, %v1960
      %v2033 = vadd.f32 %v1893, %v1963
      %v2034 = vadd.f32 %v1894, %v1965
      %v2035 = vadd.f32 %v1895, %v1968
      %v2036 = vadd.f32 %v1896, %v1970
      %v2037 = vadd.f32 %v1897, %v1973
      %v2038 = vadd.f32 %v1898, %v1975
      %v2039 = vadd.f32 %v1899, %v1978
      %v2040 = vadd.f32 %v1900, %v1980
      %v2041 = vadd.f32 %v1901, %v1983
      %v2042 = vadd.f32 %v1902, %v1985
      %v2043 = vadd.f32 %v1903, %v1988
      %v2044 = vadd.f32 %v1904, %v1990
      %v2045 = vadd.f32 %v1905, %v1993
      %v2046 = vadd.f32 %v1906, %v1995
      %v2047 = vadd.f32 %v1907, %v1998
      %v2048 = vadd.f32 %v1908, %v2000
      %v2049 = vadd.f32 %v1909, %v2003
      %v2050 = vadd.f32 %v1910, %v2005
      %v2051 = vadd.f32 %v1911, %v2008
      %v2052 = vadd.f32 %v1912, %v2010
      %v2053 = vadd.f32 %v1913, %v2013
      %v2054 = vadd.f32 %v1914, %v2015
      %v2055 = vadd.f32 %v1915, %v2018
      %v2056 = vadd.f32 %v1916, %v2020
      %v2057 = vadd.f32 %v1917, %v2023
      %v2058 = vadd.f32 %v1918, %v2025
      %s2059 = scalar_lea.vmem %s1, 12
      %v2060 = vld [vmem:[%s2059] sm:$0x3]
      %v2063 = vunpack.c.l.b16 %v474
      %v2064 = vunpack.c.l.b16 %v475
      %v2065 = vpack.c.b16 %v2064, %v2063
      %v2067 = vsel %vm258, %v2065, 0
      %v2070 = vsel %vm963, %v2060, 0
      %2072 = vmatpush.bf16.msra.mxu0 0
      %2073 = vmatpush.bf16.msra.mxu0 0
      %2074 = vmatpush.bf16.msra.mxu0 0
      %2075 = vmatpush.bf16.msra.mxu0 0
      %2076 = vmatpush.bf16.msra.mxu0 0
      %2077 = vmatpush.bf16.msra.mxu0 0
      %2078 = vmatpush.bf16.msra.mxu0 0
      %2079 = vmatpush.bf16.msra.mxu0 %v2070
      %2080 = vmatmul.bf16.gmra.mxu0 %v1143
      %v2081 = vpop.f32.mrf.mxu0
      %v2082 = vadd.f32 0.0, %v2081
      %v2083 = vpop.f32.mrf.mxu0
      %v2084 = vadd.f32 0.0, %v2083
      %2085 = vmatmul.bf16.gmra.mxu0 %v1146
      %v2086 = vpop.f32.mrf.mxu0
      %v2087 = vadd.f32 0.0, %v2086
      %v2088 = vpop.f32.mrf.mxu0
      %v2089 = vadd.f32 0.0, %v2088
      %2090 = vmatmul.bf16.gmra.mxu0 %v1149
      %v2091 = vpop.f32.mrf.mxu0
      %v2092 = vadd.f32 0.0, %v2091
      %v2093 = vpop.f32.mrf.mxu0
      %v2094 = vadd.f32 0.0, %v2093
      %2095 = vmatmul.bf16.gmra.mxu0 %v1152
      %v2096 = vpop.f32.mrf.mxu0
      %v2097 = vadd.f32 0.0, %v2096
      %v2098 = vpop.f32.mrf.mxu0
      %v2099 = vadd.f32 0.0, %v2098
      %2100 = vmatmul.bf16.gmra.mxu0 %v1155
      %v2101 = vpop.f32.mrf.mxu0
      %v2102 = vadd.f32 0.0, %v2101
      %v2103 = vpop.f32.mrf.mxu0
      %v2104 = vadd.f32 0.0, %v2103
      %2105 = vmatmul.bf16.gmra.mxu0 %v1158
      %v2106 = vpop.f32.mrf.mxu0
      %v2107 = vadd.f32 0.0, %v2106
      %v2108 = vpop.f32.mrf.mxu0
      %v2109 = vadd.f32 0.0, %v2108
      %2110 = vmatmul.bf16.gmra.mxu0 %v1161
      %v2111 = vpop.f32.mrf.mxu0
      %v2112 = vadd.f32 0.0, %v2111
      %v2113 = vpop.f32.mrf.mxu0
      %v2114 = vadd.f32 0.0, %v2113
      %2115 = vmatmul.bf16.gmra.mxu0 %v1164
      %v2116 = vpop.f32.mrf.mxu0
      %v2117 = vadd.f32 0.0, %v2116
      %v2118 = vpop.f32.mrf.mxu0
      %v2119 = vadd.f32 0.0, %v2118
      %2120 = vmatmul.bf16.gmra.mxu0 %v1167
      %v2121 = vpop.f32.mrf.mxu0
      %v2122 = vadd.f32 0.0, %v2121
      %v2123 = vpop.f32.mrf.mxu0
      %v2124 = vadd.f32 0.0, %v2123
      %2125 = vmatmul.bf16.gmra.mxu0 %v1170
      %v2126 = vpop.f32.mrf.mxu0
      %v2127 = vadd.f32 0.0, %v2126
      %v2128 = vpop.f32.mrf.mxu0
      %v2129 = vadd.f32 0.0, %v2128
      %2130 = vmatmul.bf16.gmra.mxu0 %v1173
      %v2131 = vpop.f32.mrf.mxu0
      %v2132 = vadd.f32 0.0, %v2131
      %v2133 = vpop.f32.mrf.mxu0
      %v2134 = vadd.f32 0.0, %v2133
      %2135 = vmatmul.bf16.gmra.mxu0 %v1176
      %v2136 = vpop.f32.mrf.mxu0
      %v2137 = vadd.f32 0.0, %v2136
      %v2138 = vpop.f32.mrf.mxu0
      %v2139 = vadd.f32 0.0, %v2138
      %2140 = vmatmul.bf16.gmra.mxu0 %v1179
      %v2141 = vpop.f32.mrf.mxu0
      %v2142 = vadd.f32 0.0, %v2141
      %v2143 = vpop.f32.mrf.mxu0
      %v2144 = vadd.f32 0.0, %v2143
      %2145 = vmatmul.bf16.gmra.mxu0 %v1182
      %v2146 = vpop.f32.mrf.mxu0
      %v2147 = vadd.f32 0.0, %v2146
      %v2148 = vpop.f32.mrf.mxu0
      %v2149 = vadd.f32 0.0, %v2148
      %2150 = vmatmul.bf16.gmra.mxu0 %v1637
      %v2151 = vpop.f32.mrf.mxu0
      %v2152 = vadd.f32 0.0, %v2151
      %v2153 = vpop.f32.mrf.mxu0
      %v2154 = vadd.f32 0.0, %v2153
      %2155 = vmatmul.bf16.gmra.mxu0 %v2067
      %v2156 = vpop.f32.mrf.mxu0
      %v2157 = vadd.f32 0.0, %v2156
      %v2158 = vpop.f32.mrf.mxu0
      %v2159 = vadd.f32 0.0, %v2158
      %2160 = vdwg.mxu0
      %v2161 = vadd.f32 %v2027, %v2082
      %v2162 = vadd.f32 %v2028, %v2084
      %v2163 = vadd.f32 %v2029, %v2087
      %v2164 = vadd.f32 %v2030, %v2089
      %v2165 = vadd.f32 %v2031, %v2092
      %v2166 = vadd.f32 %v2032, %v2094
      %v2167 = vadd.f32 %v2033, %v2097
      %v2168 = vadd.f32 %v2034, %v2099
      %v2169 = vadd.f32 %v2035, %v2102
      %v2170 = vadd.f32 %v2036, %v2104
      %v2171 = vadd.f32 %v2037, %v2107
      %v2172 = vadd.f32 %v2038, %v2109
      %v2173 = vadd.f32 %v2039, %v2112
      %v2174 = vadd.f32 %v2040, %v2114
      %v2175 = vadd.f32 %v2041, %v2117
      %v2176 = vadd.f32 %v2042, %v2119
      %v2177 = vadd.f32 %v2043, %v2122
      %v2178 = vadd.f32 %v2044, %v2124
      %v2179 = vadd.f32 %v2045, %v2127
      %v2180 = vadd.f32 %v2046, %v2129
      %v2181 = vadd.f32 %v2047, %v2132
      %v2182 = vadd.f32 %v2048, %v2134
      %v2183 = vadd.f32 %v2049, %v2137
      %v2184 = vadd.f32 %v2050, %v2139
      %v2185 = vadd.f32 %v2051, %v2142
      %v2186 = vadd.f32 %v2052, %v2144
      %v2187 = vadd.f32 %v2053, %v2147
      %v2188 = vadd.f32 %v2054, %v2149
      %v2189 = vadd.f32 %v2055, %v2152
      %v2190 = vadd.f32 %v2056, %v2154
      %v2191 = vadd.f32 %v2057, %v2157
      %v2192 = vadd.f32 %v2058, %v2159
      %s2193 = scalar_lea.vmem %s1, 14
      %v2194 = vld [vmem:[%s2193] sm:$0x3]
      %v2196 = vshrl.u32 %v474, 16
      %v2198 = vrot.slane %v2196, 4
      %v2199 = vshll.u32 %v474, 16
      %v2201 = vrot.slane %v2199, 5
      %v2202 = vor.u32 %v2198, %v2201
      %v2203 = vrot.slane %v2202, 4
      %v2205 = vshll.u32 %v475, 16
      %v2207 = vrot.slane %v2205, 5
      %v2208 = vsel %vm482, %v2203, %v2207
      %v2209 = vshrl.u32 %v475, 16
      %v2211 = vrot.slane %v2209, 4
      %v2212 = vor.u32 %v2211, %v2207
      %v2213 = vrot.slane %v2212, 4
      %v2215 = vshll.u32 %v476, 16
      %v2217 = vrot.slane %v2215, 5
      %v2218 = vsel %vm482, %v2213, %v2217
      %v2219 = vunpack.c.l.b16 %v2208
      %v2220 = vunpack.c.l.b16 %v2218
      %v2221 = vpack.c.b16 %v2220, %v2219
      %v2223 = vsel %vm258, %v2221, 0
      %v2226 = vsel %vm963, %v2194, 0
      %2228 = vmatpush.bf16.msra.mxu0 0
      %2229 = vmatpush.bf16.msra.mxu0 0
      %2230 = vmatpush.bf16.msra.mxu0 0
      %2231 = vmatpush.bf16.msra.mxu0 0
      %2232 = vmatpush.bf16.msra.mxu0 0
      %2233 = vmatpush.bf16.msra.mxu0 0
      %2234 = vmatpush.bf16.msra.mxu0 0
      %2235 = vmatpush.bf16.msra.mxu0 %v2226
      %2236 = vmatmul.bf16.gmra.mxu0 %v922
      %v2237 = vpop.f32.mrf.mxu0
      %v2238 = vadd.f32 0.0, %v2237
      %v2239 = vpop.f32.mrf.mxu0
      %v2240 = vadd.f32 0.0, %v2239
      %2241 = vmatmul.bf16.gmra.mxu0 %v925
      %v2242 = vpop.f32.mrf.mxu0
      %v2243 = vadd.f32 0.0, %v2242
      %v2244 = vpop.f32.mrf.mxu0
      %v2245 = vadd.f32 0.0, %v2244
      %2246 = vmatmul.bf16.gmra.mxu0 %v928
      %v2247 = vpop.f32.mrf.mxu0
      %v2248 = vadd.f32 0.0, %v2247
      %v2249 = vpop.f32.mrf.mxu0
      %v2250 = vadd.f32 0.0, %v2249
      %2251 = vmatmul.bf16.gmra.mxu0 %v931
      %v2252 = vpop.f32.mrf.mxu0
      %v2253 = vadd.f32 0.0, %v2252
      %v2254 = vpop.f32.mrf.mxu0
      %v2255 = vadd.f32 0.0, %v2254
      %2256 = vmatmul.bf16.gmra.mxu0 %v934
      %v2257 = vpop.f32.mrf.mxu0
      %v2258 = vadd.f32 0.0, %v2257
      %v2259 = vpop.f32.mrf.mxu0
      %v2260 = vadd.f32 0.0, %v2259
      %2261 = vmatmul.bf16.gmra.mxu0 %v937
      %v2262 = vpop.f32.mrf.mxu0
      %v2263 = vadd.f32 0.0, %v2262
      %v2264 = vpop.f32.mrf.mxu0
      %v2265 = vadd.f32 0.0, %v2264
      %2266 = vmatmul.bf16.gmra.mxu0 %v940
      %v2267 = vpop.f32.mrf.mxu0
      %v2268 = vadd.f32 0.0, %v2267
      %v2269 = vpop.f32.mrf.mxu0
      %v2270 = vadd.f32 0.0, %v2269
      %2271 = vmatmul.bf16.gmra.mxu0 %v943
      %v2272 = vpop.f32.mrf.mxu0
      %v2273 = vadd.f32 0.0, %v2272
      %v2274 = vpop.f32.mrf.mxu0
      %v2275 = vadd.f32 0.0, %v2274
      %2276 = vmatmul.bf16.gmra.mxu0 %v946
      %v2277 = vpop.f32.mrf.mxu0
      %v2278 = vadd.f32 0.0, %v2277
      %v2279 = vpop.f32.mrf.mxu0
      %v2280 = vadd.f32 0.0, %v2279
      %2281 = vmatmul.bf16.gmra.mxu0 %v949
      %v2282 = vpop.f32.mrf.mxu0
      %v2283 = vadd.f32 0.0, %v2282
      %v2284 = vpop.f32.mrf.mxu0
      %v2285 = vadd.f32 0.0, %v2284
      %2286 = vmatmul.bf16.gmra.mxu0 %v952
      %v2287 = vpop.f32.mrf.mxu0
      %v2288 = vadd.f32 0.0, %v2287
      %v2289 = vpop.f32.mrf.mxu0
      %v2290 = vadd.f32 0.0, %v2289
      %2291 = vmatmul.bf16.gmra.mxu0 %v955
      %v2292 = vpop.f32.mrf.mxu0
      %v2293 = vadd.f32 0.0, %v2292
      %v2294 = vpop.f32.mrf.mxu0
      %v2295 = vadd.f32 0.0, %v2294
      %2296 = vmatmul.bf16.gmra.mxu0 %v958
      %v2297 = vpop.f32.mrf.mxu0
      %v2298 = vadd.f32 0.0, %v2297
      %v2299 = vpop.f32.mrf.mxu0
      %v2300 = vadd.f32 0.0, %v2299
      %2301 = vmatmul.bf16.gmra.mxu0 %v961
      %v2302 = vpop.f32.mrf.mxu0
      %v2303 = vadd.f32 0.0, %v2302
      %v2304 = vpop.f32.mrf.mxu0
      %v2305 = vadd.f32 0.0, %v2304
      %2306 = vmatmul.bf16.gmra.mxu0 %v1793
      %v2307 = vpop.f32.mrf.mxu0
      %v2308 = vadd.f32 0.0, %v2307
      %v2309 = vpop.f32.mrf.mxu0
      %v2310 = vadd.f32 0.0, %v2309
      %2311 = vmatmul.bf16.gmra.mxu0 %v2223
      %v2312 = vpop.f32.mrf.mxu0
      %v2313 = vadd.f32 0.0, %v2312
      %v2314 = vpop.f32.mrf.mxu0
      %v2315 = vadd.f32 0.0, %v2314
      %2316 = vdwg.mxu0
      %v2317 = vadd.f32 %v2161, %v2238
      %v2318 = vadd.f32 %v2162, %v2240
      %v2319 = vadd.f32 %v2163, %v2243
      %v2320 = vadd.f32 %v2164, %v2245
      %v2321 = vadd.f32 %v2165, %v2248
      %v2322 = vadd.f32 %v2166, %v2250
      %v2323 = vadd.f32 %v2167, %v2253
      %v2324 = vadd.f32 %v2168, %v2255
      %v2325 = vadd.f32 %v2169, %v2258
      %v2326 = vadd.f32 %v2170, %v2260
      %v2327 = vadd.f32 %v2171, %v2263
      %v2328 = vadd.f32 %v2172, %v2265
      %v2329 = vadd.f32 %v2173, %v2268
      %v2330 = vadd.f32 %v2174, %v2270
      %v2331 = vadd.f32 %v2175, %v2273
      %v2332 = vadd.f32 %v2176, %v2275
      %v2333 = vadd.f32 %v2177, %v2278
      %v2334 = vadd.f32 %v2178, %v2280
      %v2335 = vadd.f32 %v2179, %v2283
      %v2336 = vadd.f32 %v2180, %v2285
      %v2337 = vadd.f32 %v2181, %v2288
      %v2338 = vadd.f32 %v2182, %v2290
      %v2339 = vadd.f32 %v2183, %v2293
      %v2340 = vadd.f32 %v2184, %v2295
      %v2341 = vadd.f32 %v2185, %v2298
      %v2342 = vadd.f32 %v2186, %v2300
      %v2343 = vadd.f32 %v2187, %v2303
      %v2344 = vadd.f32 %v2188, %v2305
      %v2345 = vadd.f32 %v2189, %v2308
      %v2346 = vadd.f32 %v2190, %v2310
      %v2347 = vadd.f32 %v2191, %v2313
      %v2348 = vadd.f32 %v2192, %v2315
      %s2349 = scalar_lea.vmem %s1, 16
      %v2350 = vld [vmem:[%s2349] sm:$0x3]
      %v2352 = vrot.slane %v474, 5
      %v2353 = vrot.slane %v2352, 4
      %v2354 = vrot.slane %v475, 5
      %v2355 = vsel %vm1296, %v2353, %v2354
      %v2356 = vrot.slane %v2354, 4
      %v2357 = vrot.slane %v476, 5
      %v2358 = vsel %vm1296, %v2356, %v2357
      %v2359 = vunpack.c.l.b16 %v2355
      %v2360 = vunpack.c.l.b16 %v2358
      %v2361 = vpack.c.b16 %v2360, %v2359
      %v2363 = vsel %vm258, %v2361, 0
      %v2366 = vsel %vm963, %v2350, 0
      %2368 = vmatpush.bf16.msra.mxu0 0
      %2369 = vmatpush.bf16.msra.mxu0 0
      %2370 = vmatpush.bf16.msra.mxu0 0
      %2371 = vmatpush.bf16.msra.mxu0 0
      %2372 = vmatpush.bf16.msra.mxu0 0
      %2373 = vmatpush.bf16.msra.mxu0 0
      %2374 = vmatpush.bf16.msra.mxu0 0
      %2375 = vmatpush.bf16.msra.mxu0 %v2366
      %2376 = vmatmul.bf16.gmra.mxu0 %v1464
      %v2377 = vpop.f32.mrf.mxu0
      %v2378 = vadd.f32 0.0, %v2377
      %v2379 = vpop.f32.mrf.mxu0
      %v2380 = vadd.f32 0.0, %v2379
      %2381 = vmatmul.bf16.gmra.mxu0 %v1467
      %v2382 = vpop.f32.mrf.mxu0
      %v2383 = vadd.f32 0.0, %v2382
      %v2384 = vpop.f32.mrf.mxu0
      %v2385 = vadd.f32 0.0, %v2384
      %2386 = vmatmul.bf16.gmra.mxu0 %v1470
      %v2387 = vpop.f32.mrf.mxu0
      %v2388 = vadd.f32 0.0, %v2387
      %v2389 = vpop.f32.mrf.mxu0
      %v2390 = vadd.f32 0.0, %v2389
      %2391 = vmatmul.bf16.gmra.mxu0 %v1473
      %v2392 = vpop.f32.mrf.mxu0
      %v2393 = vadd.f32 0.0, %v2392
      %v2394 = vpop.f32.mrf.mxu0
      %v2395 = vadd.f32 0.0, %v2394
      %2396 = vmatmul.bf16.gmra.mxu0 %v1476
      %v2397 = vpop.f32.mrf.mxu0
      %v2398 = vadd.f32 0.0, %v2397
      %v2399 = vpop.f32.mrf.mxu0
      %v2400 = vadd.f32 0.0, %v2399
      %2401 = vmatmul.bf16.gmra.mxu0 %v1479
      %v2402 = vpop.f32.mrf.mxu0
      %v2403 = vadd.f32 0.0, %v2402
      %v2404 = vpop.f32.mrf.mxu0
      %v2405 = vadd.f32 0.0, %v2404
      %2406 = vmatmul.bf16.gmra.mxu0 %v1482
      %v2407 = vpop.f32.mrf.mxu0
      %v2408 = vadd.f32 0.0, %v2407
      %v2409 = vpop.f32.mrf.mxu0
      %v2410 = vadd.f32 0.0, %v2409
      %2411 = vmatmul.bf16.gmra.mxu0 %v1485
      %v2412 = vpop.f32.mrf.mxu0
      %v2413 = vadd.f32 0.0, %v2412
      %v2414 = vpop.f32.mrf.mxu0
      %v2415 = vadd.f32 0.0, %v2414
      %2416 = vmatmul.bf16.gmra.mxu0 %v1488
      %v2417 = vpop.f32.mrf.mxu0
      %v2418 = vadd.f32 0.0, %v2417
      %v2419 = vpop.f32.mrf.mxu0
      %v2420 = vadd.f32 0.0, %v2419
      %2421 = vmatmul.bf16.gmra.mxu0 %v1491
      %v2422 = vpop.f32.mrf.mxu0
      %v2423 = vadd.f32 0.0, %v2422
      %v2424 = vpop.f32.mrf.mxu0
      %v2425 = vadd.f32 0.0, %v2424
      %2426 = vmatmul.bf16.gmra.mxu0 %v1494
      %v2427 = vpop.f32.mrf.mxu0
      %v2428 = vadd.f32 0.0, %v2427
      %v2429 = vpop.f32.mrf.mxu0
      %v2430 = vadd.f32 0.0, %v2429
      %2431 = vmatmul.bf16.gmra.mxu0 %v1497
      %v2432 = vpop.f32.mrf.mxu0
      %v2433 = vadd.f32 0.0, %v2432
      %v2434 = vpop.f32.mrf.mxu0
      %v2435 = vadd.f32 0.0, %v2434
      %2436 = vmatmul.bf16.gmra.mxu0 %v1500
      %v2437 = vpop.f32.mrf.mxu0
      %v2438 = vadd.f32 0.0, %v2437
      %v2439 = vpop.f32.mrf.mxu0
      %v2440 = vadd.f32 0.0, %v2439
      %2441 = vmatmul.bf16.gmra.mxu0 %v1503
      %v2442 = vpop.f32.mrf.mxu0
      %v2443 = vadd.f32 0.0, %v2442
      %v2444 = vpop.f32.mrf.mxu0
      %v2445 = vadd.f32 0.0, %v2444
      %2446 = vmatmul.bf16.gmra.mxu0 %v1933
      %v2447 = vpop.f32.mrf.mxu0
      %v2448 = vadd.f32 0.0, %v2447
      %v2449 = vpop.f32.mrf.mxu0
      %v2450 = vadd.f32 0.0, %v2449
      %2451 = vmatmul.bf16.gmra.mxu0 %v2363
      %v2452 = vpop.f32.mrf.mxu0
      %v2453 = vadd.f32 0.0, %v2452
      %v2454 = vpop.f32.mrf.mxu0
      %v2455 = vadd.f32 0.0, %v2454
      %2456 = vdwg.mxu0
      %v2457 = vadd.f32 %v2317, %v2378
      %v2458 = vadd.f32 %v2318, %v2380
      %v2459 = vadd.f32 %v2319, %v2383
      %v2460 = vadd.f32 %v2320, %v2385
      %v2461 = vadd.f32 %v2321, %v2388
      %v2462 = vadd.f32 %v2322, %v2390
      %v2463 = vadd.f32 %v2323, %v2393
      %v2464 = vadd.f32 %v2324, %v2395
      %v2465 = vadd.f32 %v2325, %v2398
      %v2466 = vadd.f32 %v2326, %v2400
      %v2467 = vadd.f32 %v2327, %v2403
      %v2468 = vadd.f32 %v2328, %v2405
      %v2469 = vadd.f32 %v2329, %v2408
      %v2470 = vadd.f32 %v2330, %v2410
      %v2471 = vadd.f32 %v2331, %v2413
      %v2472 = vadd.f32 %v2332, %v2415
      %v2473 = vadd.f32 %v2333, %v2418
      %v2474 = vadd.f32 %v2334, %v2420
      %v2475 = vadd.f32 %v2335, %v2423
      %v2476 = vadd.f32 %v2336, %v2425
      %v2477 = vadd.f32 %v2337, %v2428
      %v2478 = vadd.f32 %v2338, %v2430
      %v2479 = vadd.f32 %v2339, %v2433
      %v2480 = vadd.f32 %v2340, %v2435
      %v2481 = vadd.f32 %v2341, %v2438
      %v2482 = vadd.f32 %v2342, %v2440
      %v2483 = vadd.f32 %v2343, %v2443
      %v2484 = vadd.f32 %v2344, %v2445
      %v2485 = vadd.f32 %v2345, %v2448
      %v2486 = vadd.f32 %v2346, %v2450
      %v2487 = vadd.f32 %v2347, %v2453
      %v2488 = vadd.f32 %v2348, %v2455
      %v2489 = vld [vmem:[%s2] sm:$0x1]
      %v2491 = vperm.slane %v2489, 0
      %v2493 = vadd.f32 %v2457, %v2491
      %v2494 = vadd.f32 %v2458, %v2491
      %v2495 = vadd.f32 %v2459, %v2491
      %v2496 = vadd.f32 %v2460, %v2491
      %v2497 = vadd.f32 %v2461, %v2491
      %v2498 = vadd.f32 %v2462, %v2491
      %v2499 = vadd.f32 %v2463, %v2491
      %v2500 = vadd.f32 %v2464, %v2491
      %v2501 = vadd.f32 %v2465, %v2491
      %v2502 = vadd.f32 %v2466, %v2491
      %v2503 = vadd.f32 %v2467, %v2491
      %v2504 = vadd.f32 %v2468, %v2491
      %v2505 = vadd.f32 %v2469, %v2491
      %v2506 = vadd.f32 %v2470, %v2491
      %v2507 = vadd.f32 %v2471, %v2491
      %v2508 = vadd.f32 %v2472, %v2491
      %v2509 = vadd.f32 %v2473, %v2491
      %v2510 = vadd.f32 %v2474, %v2491
      %v2511 = vadd.f32 %v2475, %v2491
      %v2512 = vadd.f32 %v2476, %v2491
      %v2513 = vadd.f32 %v2477, %v2491
      %v2514 = vadd.f32 %v2478, %v2491
      %v2515 = vadd.f32 %v2479, %v2491
      %v2516 = vadd.f32 %v2480, %v2491
      %v2517 = vadd.f32 %v2481, %v2491
      %v2518 = vadd.f32 %v2482, %v2491
      %v2519 = vadd.f32 %v2483, %v2491
      %v2520 = vadd.f32 %v2484, %v2491
      %v2521 = vadd.f32 %v2485, %v2491
      %v2522 = vadd.f32 %v2486, %v2491
      %v2523 = vadd.f32 %v2487, %v2491
      %v2524 = vadd.f32 %v2488, %v2491
      %v2525 = vmax.f32 %v2493, 0.0
      %v2526 = vmax.f32 %v2494, 0.0
      %v2527 = vmax.f32 %v2495, 0.0
      %v2528 = vmax.f32 %v2496, 0.0
      %v2529 = vmax.f32 %v2497, 0.0
      %v2530 = vmax.f32 %v2498, 0.0
      %v2531 = vmax.f32 %v2499, 0.0
      %v2532 = vmax.f32 %v2500, 0.0
      %v2533 = vmax.f32 %v2501, 0.0
      %v2534 = vmax.f32 %v2502, 0.0
      %v2535 = vmax.f32 %v2503, 0.0
      %v2536 = vmax.f32 %v2504, 0.0
      %v2537 = vmax.f32 %v2505, 0.0
      %v2538 = vmax.f32 %v2506, 0.0
      %v2539 = vmax.f32 %v2507, 0.0
      %v2540 = vmax.f32 %v2508, 0.0
      %v2541 = vmax.f32 %v2509, 0.0
      %v2542 = vmax.f32 %v2510, 0.0
      %v2543 = vmax.f32 %v2511, 0.0
      %v2544 = vmax.f32 %v2512, 0.0
      %v2545 = vmax.f32 %v2513, 0.0
      %v2546 = vmax.f32 %v2514, 0.0
      %v2547 = vmax.f32 %v2515, 0.0
      %v2548 = vmax.f32 %v2516, 0.0
      %v2549 = vmax.f32 %v2517, 0.0
      %v2550 = vmax.f32 %v2518, 0.0
      %v2551 = vmax.f32 %v2519, 0.0
      %v2552 = vmax.f32 %v2520, 0.0
      %v2553 = vmax.f32 %v2521, 0.0
      %v2554 = vmax.f32 %v2522, 0.0
      %v2555 = vmax.f32 %v2523, 0.0
      %v2556 = vmax.f32 %v2524, 0.0
      %2557 = vst.msk [vmem:[%s336 + $0x1] sm:$0xff] %vm258, %v2525
      %2558 = vst.msk [vmem:[%s336 + $0x9] sm:$0xff] %vm258, %v2526
      %2559 = vst.msk [vmem:[%s336 + $0x19] sm:$0xff] %vm258, %v2527
      %2560 = vst.msk [vmem:[%s336 + $0x21] sm:$0xff] %vm258, %v2528
      %2561 = vst.msk [vmem:[%s336 + $0x31] sm:$0xff] %vm258, %v2529
      %2562 = vst.msk [vmem:[%s336 + $0x39] sm:$0xff] %vm258, %v2530
      %2563 = vst.msk [vmem:[%s336 + $0x49] sm:$0xff] %vm258, %v2531
      %2564 = vst.msk [vmem:[%s336 + $0x51] sm:$0xff] %vm258, %v2532
      %2565 = vst.msk [vmem:[%s336 + $0x61] sm:$0xff] %vm258, %v2533
      %2566 = vst.msk [vmem:[%s336 + $0x69] sm:$0xff] %vm258, %v2534
      %2567 = vst.msk [vmem:[%s336 + $0x79] sm:$0xff] %vm258, %v2535
      %2568 = vst.msk [vmem:[%s336 + $0x81] sm:$0xff] %vm258, %v2536
      %2569 = vst.msk [vmem:[%s336 + $0x91] sm:$0xff] %vm258, %v2537
      %2570 = vst.msk [vmem:[%s336 + $0x99] sm:$0xff] %vm258, %v2538
      %2571 = vst.msk [vmem:[%s336 + $0xa9] sm:$0xff] %vm258, %v2539
      %2572 = vst.msk [vmem:[%s336 + $0xb1] sm:$0xff] %vm258, %v2540
      %2573 = vst.msk [vmem:[%s336 + $0xc1] sm:$0xff] %vm258, %v2541
      %2574 = vst.msk [vmem:[%s336 + $0xc9] sm:$0xff] %vm258, %v2542
      %2575 = vst.msk [vmem:[%s336 + $0xd9] sm:$0xff] %vm258, %v2543
      %2576 = vst.msk [vmem:[%s336 + $0xe1] sm:$0xff] %vm258, %v2544
      %2577 = vst.msk [vmem:[%s336 + $0xf1] sm:$0xff] %vm258, %v2545
      %2578 = vst.msk [vmem:[%s336 + $0xf9] sm:$0xff] %vm258, %v2546
      %2579 = vst.msk [vmem:[%s336 + $0x109] sm:$0xff] %vm258, %v2547
      %2580 = vst.msk [vmem:[%s336 + $0x111] sm:$0xff] %vm258, %v2548
      %2581 = vst.msk [vmem:[%s336 + $0x121] sm:$0xff] %vm258, %v2549
      %2582 = vst.msk [vmem:[%s336 + $0x129] sm:$0xff] %vm258, %v2550
      %2583 = vst.msk [vmem:[%s336 + $0x139] sm:$0xff] %vm258, %v2551
      %2584 = vst.msk [vmem:[%s336 + $0x141] sm:$0xff] %vm258, %v2552
      %2585 = vst.msk [vmem:[%s336 + $0x151] sm:$0xff] %vm258, %v2553
      %2586 = vst.msk [vmem:[%s336 + $0x159] sm:$0xff] %vm258, %v2554
      %2587 = vst.msk [vmem:[%s336 + $0x169] sm:$0xff] %vm258, %v2555
      %2588 = vst.msk [vmem:[%s336 + $0x171] sm:$0xff] %vm258, %v2556
      %v2589 = vld [vmem:[#allocation2] sm:$0xff]
      %v2590 = vld [vmem:[#allocation2 + $0x8] sm:$0xff]
      %v2591 = vld [vmem:[#allocation2 + $0x10] sm:$0x3]
      %v2592 = vld [vmem:[#allocation2 + $0x18] sm:$0xff]
      %v2593 = vld [vmem:[#allocation2 + $0x20] sm:$0xff]
      %v2594 = vld [vmem:[#allocation2 + $0x28] sm:$0x3]
      %v2595 = vld [vmem:[#allocation2 + $0x30] sm:$0xff]
      %v2596 = vld [vmem:[#allocation2 + $0x38] sm:$0xff]
      %v2597 = vld [vmem:[#allocation2 + $0x40] sm:$0x3]
      %v2598 = vld [vmem:[#allocation2 + $0x48] sm:$0xff]
      %v2599 = vld [vmem:[#allocation2 + $0x50] sm:$0xff]
      %v2600 = vld [vmem:[#allocation2 + $0x58] sm:$0x3]
      %v2601 = vld [vmem:[#allocation2 + $0x60] sm:$0xff]
      %v2602 = vld [vmem:[#allocation2 + $0x68] sm:$0xff]
      %v2603 = vld [vmem:[#allocation2 + $0x70] sm:$0x3]
      %v2604 = vld [vmem:[#allocation2 + $0x78] sm:$0xff]
      %v2605 = vld [vmem:[#allocation2 + $0x80] sm:$0xff]
      %v2606 = vld [vmem:[#allocation2 + $0x88] sm:$0x3]
      %v2607 = vld [vmem:[#allocation2 + $0x90] sm:$0xff]
      %v2608 = vld [vmem:[#allocation2 + $0x98] sm:$0xff]
      %v2609 = vld [vmem:[#allocation2 + $0xa0] sm:$0x3]
      %v2610 = vld [vmem:[#allocation2 + $0xa8] sm:$0xff]
      %v2611 = vld [vmem:[#allocation2 + $0xb0] sm:$0xff]
      %v2612 = vld [vmem:[#allocation2 + $0xb8] sm:$0x3]
      %v2613 = vld [vmem:[#allocation2 + $0xc0] sm:$0xff]
      %v2614 = vld [vmem:[#allocation2 + $0xc8] sm:$0xff]
      %v2615 = vld [vmem:[#allocation2 + $0xd0] sm:$0x3]
      %v2616 = vld [vmem:[#allocation2 + $0xd8] sm:$0xff]
      %v2617 = vld [vmem:[#allocation2 + $0xe0] sm:$0xff]
      %v2618 = vld [vmem:[#allocation2 + $0xe8] sm:$0x3]
      %v2619 = vld [vmem:[#allocation2 + $0xf0] sm:$0xff]
      %v2620 = vld [vmem:[#allocation2 + $0xf8] sm:$0xff]
      %v2621 = vld [vmem:[#allocation2 + $0x100] sm:$0x3]
      %v2622 = vld [vmem:[#allocation2 + $0x108] sm:$0xff]
      %v2623 = vld [vmem:[#allocation2 + $0x110] sm:$0xff]
      %v2624 = vld [vmem:[#allocation2 + $0x118] sm:$0x3]
      %v2625 = vld [vmem:[#allocation2 + $0x120] sm:$0xff]
      %v2626 = vld [vmem:[#allocation2 + $0x128] sm:$0xff]
      %v2627 = vld [vmem:[#allocation2 + $0x130] sm:$0x3]
      %v2628 = vld [vmem:[#allocation2 + $0x138] sm:$0xff]
      %v2629 = vld [vmem:[#allocation2 + $0x140] sm:$0xff]
      %v2630 = vld [vmem:[#allocation2 + $0x148] sm:$0x3]
      %v2631 = vld [vmem:[#allocation2 + $0x150] sm:$0xff]
      %v2632 = vld [vmem:[#allocation2 + $0x158] sm:$0xff]
      %v2633 = vld [vmem:[#allocation2 + $0x160] sm:$0x3]
      %v2634 = vld [vmem:[#allocation2 + $0x168] sm:$0xff]
      %v2635 = vld [vmem:[#allocation2 + $0x170] sm:$0xff]
      %v2636 = vld [vmem:[#allocation2 + $0x178] sm:$0x3]
      %v2637 = vld [vmem:[#allocation2 + $0x180] sm:$0xff]
      %v2638 = vld [vmem:[#allocation2 + $0x188] sm:$0xff]
      %v2639 = vld [vmem:[#allocation2 + $0x190] sm:$0x3]
      %v2640 = vld [vmem:[#allocation2 + $0x198] sm:$0xff]
      %v2641 = vld [vmem:[#allocation2 + $0x1a0] sm:$0xff]
      %v2642 = vld [vmem:[#allocation2 + $0x1a8] sm:$0x3]
      %v2643 = vpack.c.bf16 %v2589, %v2589
      %v2644 = vpack.c.bf16 %v2590, %v2590
      %v2645 = vpack.c.bf16 %v2591, %v2591
      %v2646 = vpack.c.bf16 %v2592, %v2592
      %v2647 = vpack.c.bf16 %v2593, %v2593
      %v2648 = vpack.c.bf16 %v2594, %v2594
      %v2649 = vpack.c.bf16 %v2595, %v2595
      %v2650 = vpack.c.bf16 %v2596, %v2596
      %v2651 = vpack.c.bf16 %v2597, %v2597
      %v2652 = vpack.c.bf16 %v2598, %v2598
      %v2653 = vpack.c.bf16 %v2599, %v2599
      %v2654 = vpack.c.bf16 %v2600, %v2600
      %v2655 = vpack.c.bf16 %v2601, %v2601
      %v2656 = vpack.c.bf16 %v2602, %v2602
      %v2657 = vpack.c.bf16 %v2603, %v2603
      %v2658 = vpack.c.bf16 %v2604, %v2604
      %v2659 = vpack.c.bf16 %v2605, %v2605
      %v2660 = vpack.c.bf16 %v2606, %v2606
      %v2661 = vpack.c.bf16 %v2607, %v2607
      %v2662 = vpack.c.bf16 %v2608, %v2608
      %v2663 = vpack.c.bf16 %v2609, %v2609
      %v2664 = vpack.c.bf16 %v2610, %v2610
      %v2665 = vpack.c.bf16 %v2611, %v2611
      %v2666 = vpack.c.bf16 %v2612, %v2612
      %v2667 = vpack.c.bf16 %v2613, %v2613
      %v2668 = vpack.c.bf16 %v2614, %v2614
      %v2669 = vpack.c.bf16 %v2615, %v2615
      %v2670 = vpack.c.bf16 %v2616, %v2616
      %v2671 = vpack.c.bf16 %v2617, %v2617
      %v2672 = vpack.c.bf16 %v2618, %v2618
      %v2673 = vpack.c.bf16 %v2619, %v2619
      %v2674 = vpack.c.bf16 %v2620, %v2620
      %v2675 = vpack.c.bf16 %v2621, %v2621
      %v2676 = vpack.c.bf16 %v2622, %v2622
      %v2677 = vpack.c.bf16 %v2623, %v2623
      %v2678 = vpack.c.bf16 %v2624, %v2624
      %v2679 = vpack.c.bf16 %v2625, %v2625
      %v2680 = vpack.c.bf16 %v2626, %v2626
      %v2681 = vpack.c.bf16 %v2627, %v2627
      %v2682 = vpack.c.bf16 %v2628, %v2628
      %v2683 = vpack.c.bf16 %v2629, %v2629
      %v2684 = vpack.c.bf16 %v2630, %v2630
      %v2685 = vpack.c.bf16 %v2631, %v2631
      %v2686 = vpack.c.bf16 %v2632, %v2632
      %v2687 = vpack.c.bf16 %v2633, %v2633
      %v2688 = vpack.c.bf16 %v2634, %v2634
      %v2689 = vpack.c.bf16 %v2635, %v2635
      %v2690 = vpack.c.bf16 %v2636, %v2636
      %v2691 = vpack.c.bf16 %v2637, %v2637
      %v2692 = vpack.c.bf16 %v2638, %v2638
      %v2693 = vpack.c.bf16 %v2639, %v2639
      %v2694 = vpack.c.bf16 %v2640, %v2640
      %v2695 = vpack.c.bf16 %v2641, %v2641
      %v2696 = vpack.c.bf16 %v2642, %v2642
      %v2697 = vld [vmem:[%s3] sm:$0x3]
      %s2698 = scalar_lea.vmem %s3, 2
      %v2699 = vld [vmem:[%s2698] sm:$0x3]
      %v2701 = vshrl.u32 %v2643, 16
      %v2703 = vrot.slane %v2701, 4
      %v2704 = vshll.u32 %v2643, 16
      %v2706 = vrot.slane %v2704, 5
      %v2707 = vor.u32 %v2703, %v2706
      %v2708 = vrot.slane %v2707, 4
      %v2710 = vshll.u32 %v2644, 16
      %v2712 = vrot.slane %v2710, 5
      %v2713 = vsel %vm482, %v2708, %v2712
      %v2714 = vshrl.u32 %v2644, 16
      %v2716 = vrot.slane %v2714, 4
      %v2717 = vor.u32 %v2716, %v2712
      %v2718 = vrot.slane %v2717, 4
      %v2720 = vshll.u32 %v2645, 16
      %v2722 = vrot.slane %v2720, 5
      %v2723 = vsel %vm482, %v2718, %v2722
      %v2725 = vshrl.u32 %v2646, 16
      %v2727 = vrot.slane %v2725, 4
      %v2728 = vshll.u32 %v2646, 16
      %v2730 = vrot.slane %v2728, 5
      %v2731 = vor.u32 %v2727, %v2730
      %v2732 = vrot.slane %v2731, 4
      %v2734 = vshll.u32 %v2647, 16
      %v2736 = vrot.slane %v2734, 5
      %v2737 = vsel %vm482, %v2732, %v2736
      %v2738 = vshrl.u32 %v2647, 16
      %v2740 = vrot.slane %v2738, 4
      %v2741 = vor.u32 %v2740, %v2736
      %v2742 = vrot.slane %v2741, 4
      %v2744 = vshll.u32 %v2648, 16
      %v2746 = vrot.slane %v2744, 5
      %v2747 = vsel %vm482, %v2742, %v2746
      %v2749 = vshrl.u32 %v2649, 16
      %v2751 = vrot.slane %v2749, 4
      %v2752 = vshll.u32 %v2649, 16
      %v2754 = vrot.slane %v2752, 5
      %v2755 = vor.u32 %v2751, %v2754
      %v2756 = vrot.slane %v2755, 4
      %v2758 = vshll.u32 %v2650, 16
      %v2760 = vrot.slane %v2758, 5
      %v2761 = vsel %vm482, %v2756, %v2760
      %v2762 = vshrl.u32 %v2650, 16
      %v2764 = vrot.slane %v2762, 4
      %v2765 = vor.u32 %v2764, %v2760
      %v2766 = vrot.slane %v2765, 4
      %v2768 = vshll.u32 %v2651, 16
      %v2770 = vrot.slane %v2768, 5
      %v2771 = vsel %vm482, %v2766, %v2770
      %v2773 = vshrl.u32 %v2652, 16
      %v2775 = vrot.slane %v2773, 4
      %v2776 = vshll.u32 %v2652, 16
      %v2778 = vrot.slane %v2776, 5
      %v2779 = vor.u32 %v2775, %v2778
      %v2780 = vrot.slane %v2779, 4
      %v2782 = vshll.u32 %v2653, 16
      %v2784 = vrot.slane %v2782, 5
      %v2785 = vsel %vm482, %v2780, %v2784
      %v2786 = vshrl.u32 %v2653, 16
      %v2788 = vrot.slane %v2786, 4
      %v2789 = vor.u32 %v2788, %v2784
      %v2790 = vrot.slane %v2789, 4
      %v2792 = vshll.u32 %v2654, 16
      %v2794 = vrot.slane %v2792, 5
      %v2795 = vsel %vm482, %v2790, %v2794
      %v2797 = vshrl.u32 %v2655, 16
      %v2799 = vrot.slane %v2797, 4
      %v2800 = vshll.u32 %v2655, 16
      %v2802 = vrot.slane %v2800, 5
      %v2803 = vor.u32 %v2799, %v2802
      %v2804 = vrot.slane %v2803, 4
      %v2806 = vshll.u32 %v2656, 16
      %v2808 = vrot.slane %v2806, 5
      %v2809 = vsel %vm482, %v2804, %v2808
      %v2810 = vshrl.u32 %v2656, 16
      %v2812 = vrot.slane %v2810, 4
      %v2813 = vor.u32 %v2812, %v2808
      %v2814 = vrot.slane %v2813, 4
      %v2816 = vshll.u32 %v2657, 16
      %v2818 = vrot.slane %v2816, 5
      %v2819 = vsel %vm482, %v2814, %v2818
      %v2821 = vshrl.u32 %v2658, 16
      %v2823 = vrot.slane %v2821, 4
      %v2824 = vshll.u32 %v2658, 16
      %v2826 = vrot.slane %v2824, 5
      %v2827 = vor.u32 %v2823, %v2826
      %v2828 = vrot.slane %v2827, 4
      %v2830 = vshll.u32 %v2659, 16
      %v2832 = vrot.slane %v2830, 5
      %v2833 = vsel %vm482, %v2828, %v2832
      %v2834 = vshrl.u32 %v2659, 16
      %v2836 = vrot.slane %v2834, 4
      %v2837 = vor.u32 %v2836, %v2832
      %v2838 = vrot.slane %v2837, 4
      %v2840 = vshll.u32 %v2660, 16
      %v2842 = vrot.slane %v2840, 5
      %v2843 = vsel %vm482, %v2838, %v2842
      %v2845 = vshrl.u32 %v2661, 16
      %v2847 = vrot.slane %v2845, 4
      %v2848 = vshll.u32 %v2661, 16
      %v2850 = vrot.slane %v2848, 5
      %v2851 = vor.u32 %v2847, %v2850
      %v2852 = vrot.slane %v2851, 4
      %v2854 = vshll.u32 %v2662, 16
      %v2856 = vrot.slane %v2854, 5
      %v2857 = vsel %vm482, %v2852, %v2856
      %v2858 = vshrl.u32 %v2662, 16
      %v2860 = vrot.slane %v2858, 4
      %v2861 = vor.u32 %v2860, %v2856
      %v2862 = vrot.slane %v2861, 4
      %v2864 = vshll.u32 %v2663, 16
      %v2866 = vrot.slane %v2864, 5
      %v2867 = vsel %vm482, %v2862, %v2866
      %v2869 = vshrl.u32 %v2664, 16
      %v2871 = vrot.slane %v2869, 4
      %v2872 = vshll.u32 %v2664, 16
      %v2874 = vrot.slane %v2872, 5
      %v2875 = vor.u32 %v2871, %v2874
      %v2876 = vrot.slane %v2875, 4
      %v2878 = vshll.u32 %v2665, 16
      %v2880 = vrot.slane %v2878, 5
      %v2881 = vsel %vm482, %v2876, %v2880
      %v2882 = vshrl.u32 %v2665, 16
      %v2884 = vrot.slane %v2882, 4
      %v2885 = vor.u32 %v2884, %v2880
      %v2886 = vrot.slane %v2885, 4
      %v2888 = vshll.u32 %v2666, 16
      %v2890 = vrot.slane %v2888, 5
      %v2891 = vsel %vm482, %v2886, %v2890
      %v2893 = vshrl.u32 %v2667, 16
      %v2895 = vrot.slane %v2893, 4
      %v2896 = vshll.u32 %v2667, 16
      %v2898 = vrot.slane %v2896, 5
      %v2899 = vor.u32 %v2895, %v2898
      %v2900 = vrot.slane %v2899, 4
      %v2902 = vshll.u32 %v2668, 16
      %v2904 = vrot.slane %v2902, 5
      %v2905 = vsel %vm482, %v2900, %v2904
      %v2906 = vshrl.u32 %v2668, 16
      %v2908 = vrot.slane %v2906, 4
      %v2909 = vor.u32 %v2908, %v2904
      %v2910 = vrot.slane %v2909, 4
      %v2912 = vshll.u32 %v2669, 16
      %v2914 = vrot.slane %v2912, 5
      %v2915 = vsel %vm482, %v2910, %v2914
      %v2917 = vshrl.u32 %v2670, 16
      %v2919 = vrot.slane %v2917, 4
      %v2920 = vshll.u32 %v2670, 16
      %v2922 = vrot.slane %v2920, 5
      %v2923 = vor.u32 %v2919, %v2922
      %v2924 = vrot.slane %v2923, 4
      %v2926 = vshll.u32 %v2671, 16
      %v2928 = vrot.slane %v2926, 5
      %v2929 = vsel %vm482, %v2924, %v2928
      %v2930 = vshrl.u32 %v2671, 16
      %v2932 = vrot.slane %v2930, 4
      %v2933 = vor.u32 %v2932, %v2928
      %v2934 = vrot.slane %v2933, 4
      %v2936 = vshll.u32 %v2672, 16
      %v2938 = vrot.slane %v2936, 5
      %v2939 = vsel %vm482, %v2934, %v2938
      %v2941 = vshrl.u32 %v2673, 16
      %v2943 = vrot.slane %v2941, 4
      %v2944 = vshll.u32 %v2673, 16
      %v2946 = vrot.slane %v2944, 5
      %v2947 = vor.u32 %v2943, %v2946
      %v2948 = vrot.slane %v2947, 4
      %v2950 = vshll.u32 %v2674, 16
      %v2952 = vrot.slane %v2950, 5
      %v2953 = vsel %vm482, %v2948, %v2952
      %v2954 = vshrl.u32 %v2674, 16
      %v2956 = vrot.slane %v2954, 4
      %v2957 = vor.u32 %v2956, %v2952
      %v2958 = vrot.slane %v2957, 4
      %v2960 = vshll.u32 %v2675, 16
      %v2962 = vrot.slane %v2960, 5
      %v2963 = vsel %vm482, %v2958, %v2962
      %v2965 = vshrl.u32 %v2676, 16
      %v2967 = vrot.slane %v2965, 4
      %v2968 = vshll.u32 %v2676, 16
      %v2970 = vrot.slane %v2968, 5
      %v2971 = vor.u32 %v2967, %v2970
      %v2972 = vrot.slane %v2971, 4
      %v2974 = vshll.u32 %v2677, 16
      %v2976 = vrot.slane %v2974, 5
      %v2977 = vsel %vm482, %v2972, %v2976
      %v2978 = vshrl.u32 %v2677, 16
      %v2980 = vrot.slane %v2978, 4
      %v2981 = vor.u32 %v2980, %v2976
      %v2982 = vrot.slane %v2981, 4
      %v2984 = vshll.u32 %v2678, 16
      %v2986 = vrot.slane %v2984, 5
      %v2987 = vsel %vm482, %v2982, %v2986
      %v2989 = vshrl.u32 %v2679, 16
      %v2991 = vrot.slane %v2989, 4
      %v2992 = vshll.u32 %v2679, 16
      %v2994 = vrot.slane %v2992, 5
      %v2995 = vor.u32 %v2991, %v2994
      %v2996 = vrot.slane %v2995, 4
      %v2998 = vshll.u32 %v2680, 16
      %v3000 = vrot.slane %v2998, 5
      %v3001 = vsel %vm482, %v2996, %v3000
      %v3002 = vshrl.u32 %v2680, 16
      %v3004 = vrot.slane %v3002, 4
      %v3005 = vor.u32 %v3004, %v3000
      %v3006 = vrot.slane %v3005, 4
      %v3008 = vshll.u32 %v2681, 16
      %v3010 = vrot.slane %v3008, 5
      %v3011 = vsel %vm482, %v3006, %v3010
      %v3013 = vshrl.u32 %v2682, 16
      %v3015 = vrot.slane %v3013, 4
      %v3016 = vshll.u32 %v2682, 16
      %v3018 = vrot.slane %v3016, 5
      %v3019 = vor.u32 %v3015, %v3018
      %v3020 = vrot.slane %v3019, 4
      %v3022 = vshll.u32 %v2683, 16
      %v3024 = vrot.slane %v3022, 5
      %v3025 = vsel %vm482, %v3020, %v3024
      %v3026 = vshrl.u32 %v2683, 16
      %v3028 = vrot.slane %v3026, 4
      %v3029 = vor.u32 %v3028, %v3024
      %v3030 = vrot.slane %v3029, 4
      %v3032 = vshll.u32 %v2684, 16
      %v3034 = vrot.slane %v3032, 5
      %v3035 = vsel %vm482, %v3030, %v3034
      %v3037 = vshrl.u32 %v2685, 16
      %v3039 = vrot.slane %v3037, 4
      %v3040 = vshll.u32 %v2685, 16
      %v3042 = vrot.slane %v3040, 5
      %v3043 = vor.u32 %v3039, %v3042
      %v3044 = vrot.slane %v3043, 4
      %v3046 = vshll.u32 %v2686, 16
      %v3048 = vrot.slane %v3046, 5
      %v3049 = vsel %vm482, %v3044, %v3048
      %v3050 = vshrl.u32 %v2686, 16
      %v3052 = vrot.slane %v3050, 4
      %v3053 = vor.u32 %v3052, %v3048
      %v3054 = vrot.slane %v3053, 4
      %v3056 = vshll.u32 %v2687, 16
      %v3058 = vrot.slane %v3056, 5
      %v3059 = vsel %vm482, %v3054, %v3058
      %v3061 = vshrl.u32 %v2688, 16
      %v3063 = vrot.slane %v3061, 4
      %v3064 = vshll.u32 %v2688, 16
      %v3066 = vrot.slane %v3064, 5
      %v3067 = vor.u32 %v3063, %v3066
      %v3068 = vrot.slane %v3067, 4
      %v3070 = vshll.u32 %v2689, 16
      %v3072 = vrot.slane %v3070, 5
      %v3073 = vsel %vm482, %v3068, %v3072
      %v3074 = vshrl.u32 %v2689, 16
      %v3076 = vrot.slane %v3074, 4
      %v3077 = vor.u32 %v3076, %v3072
      %v3078 = vrot.slane %v3077, 4
      %v3080 = vshll.u32 %v2690, 16
      %v3082 = vrot.slane %v3080, 5
      %v3083 = vsel %vm482, %v3078, %v3082
      %v3084 = vunpack.c.l.b16 %v2713
      %v3085 = vunpack.c.l.b16 %v2723
      %v3086 = vunpack.c.l.b16 %v2737
      %v3087 = vunpack.c.l.b16 %v2747
      %v3088 = vunpack.c.l.b16 %v2761
      %v3089 = vunpack.c.l.b16 %v2771
      %v3090 = vunpack.c.l.b16 %v2785
      %v3091 = vunpack.c.l.b16 %v2795
      %v3092 = vunpack.c.l.b16 %v2809
      %v3093 = vunpack.c.l.b16 %v2819
      %v3094 = vunpack.c.l.b16 %v2833
      %v3095 = vunpack.c.l.b16 %v2843
      %v3096 = vunpack.c.l.b16 %v2857
      %v3097 = vunpack.c.l.b16 %v2867
      %v3098 = vunpack.c.l.b16 %v2881
      %v3099 = vunpack.c.l.b16 %v2891
      %v3100 = vunpack.c.l.b16 %v2905
      %v3101 = vunpack.c.l.b16 %v2915
      %v3102 = vunpack.c.l.b16 %v2929
      %v3103 = vunpack.c.l.b16 %v2939
      %v3104 = vunpack.c.l.b16 %v2953
      %v3105 = vunpack.c.l.b16 %v2963
      %v3106 = vunpack.c.l.b16 %v2977
      %v3107 = vunpack.c.l.b16 %v2987
      %v3108 = vunpack.c.l.b16 %v3001
      %v3109 = vunpack.c.l.b16 %v3011
      %v3110 = vunpack.c.l.b16 %v3025
      %v3111 = vunpack.c.l.b16 %v3035
      %v3112 = vunpack.c.l.b16 %v3049
      %v3113 = vunpack.c.l.b16 %v3059
      %v3114 = vunpack.c.l.b16 %v3073
      %v3115 = vunpack.c.l.b16 %v3083
      %v3116 = vpack.c.b16 %v3085, %v3084
      %v3117 = vpack.c.b16 %v3087, %v3086
      %v3118 = vpack.c.b16 %v3089, %v3088
      %v3119 = vpack.c.b16 %v3091, %v3090
      %v3120 = vpack.c.b16 %v3093, %v3092
      %v3121 = vpack.c.b16 %v3095, %v3094
      %v3122 = vpack.c.b16 %v3097, %v3096
      %v3123 = vpack.c.b16 %v3099, %v3098
      %v3124 = vpack.c.b16 %v3101, %v3100
      %v3125 = vpack.c.b16 %v3103, %v3102
      %v3126 = vpack.c.b16 %v3105, %v3104
      %v3127 = vpack.c.b16 %v3107, %v3106
      %v3128 = vpack.c.b16 %v3109, %v3108
      %v3129 = vpack.c.b16 %v3111, %v3110
      %v3130 = vpack.c.b16 %v3113, %v3112
      %v3131 = vpack.c.b16 %v3115, %v3114
      %v3133 = vsel %vm258, %v3116, 0
      %v3136 = vsel %vm258, %v3117, 0
      %v3139 = vsel %vm258, %v3118, 0
      %v3142 = vsel %vm258, %v3119, 0
      %v3145 = vsel %vm258, %v3120, 0
      %v3148 = vsel %vm258, %v3121, 0
      %v3151 = vsel %vm258, %v3122, 0
      %v3154 = vsel %vm258, %v3123, 0
      %v3157 = vsel %vm258, %v3124, 0
      %v3160 = vsel %vm258, %v3125, 0
      %v3163 = vsel %vm258, %v3126, 0
      %v3166 = vsel %vm258, %v3127, 0
      %v3169 = vsel %vm258, %v3128, 0
      %v3172 = vsel %vm258, %v3129, 0
      %v3175 = vsel %vm258, %v3130, 0
      %v3178 = vsel %vm258, %v3131, 0
      %v3181 = vsel %vm963, %v2699, 0
      %3183 = vmatpush.bf16.msra.mxu0 0
      %3184 = vmatpush.bf16.msra.mxu0 0
      %3185 = vmatpush.bf16.msra.mxu0 0
      %3186 = vmatpush.bf16.msra.mxu0 0
      %3187 = vmatpush.bf16.msra.mxu0 0
      %3188 = vmatpush.bf16.msra.mxu0 0
      %3189 = vmatpush.bf16.msra.mxu0 0
      %3190 = vmatpush.bf16.msra.mxu0 %v3181
      %3191 = vmatmul.bf16.gmra.mxu0 %v3133
      %v3192 = vpop.f32.mrf.mxu0
      %v3193 = vadd.f32 0.0, %v3192
      %v3194 = vpop.f32.mrf.mxu0
      %v3195 = vadd.f32 0.0, %v3194
      %3196 = vmatmul.bf16.gmra.mxu0 %v3136
      %v3197 = vpop.f32.mrf.mxu0
      %v3198 = vadd.f32 0.0, %v3197
      %v3199 = vpop.f32.mrf.mxu0
      %v3200 = vadd.f32 0.0, %v3199
      %3201 = vmatmul.bf16.gmra.mxu0 %v3139
      %v3202 = vpop.f32.mrf.mxu0
      %v3203 = vadd.f32 0.0, %v3202
      %v3204 = vpop.f32.mrf.mxu0
      %v3205 = vadd.f32 0.0, %v3204
      %3206 = vmatmul.bf16.gmra.mxu0 %v3142
      %v3207 = vpop.f32.mrf.mxu0
      %v3208 = vadd.f32 0.0, %v3207
      %v3209 = vpop.f32.mrf.mxu0
      %v3210 = vadd.f32 0.0, %v3209
      %3211 = vmatmul.bf16.gmra.mxu0 %v3145
      %v3212 = vpop.f32.mrf.mxu0
      %v3213 = vadd.f32 0.0, %v3212
      %v3214 = vpop.f32.mrf.mxu0
      %v3215 = vadd.f32 0.0, %v3214
      %3216 = vmatmul.bf16.gmra.mxu0 %v3148
      %v3217 = vpop.f32.mrf.mxu0
      %v3218 = vadd.f32 0.0, %v3217
      %v3219 = vpop.f32.mrf.mxu0
      %v3220 = vadd.f32 0.0, %v3219
      %3221 = vmatmul.bf16.gmra.mxu0 %v3151
      %v3222 = vpop.f32.mrf.mxu0
      %v3223 = vadd.f32 0.0, %v3222
      %v3224 = vpop.f32.mrf.mxu0
      %v3225 = vadd.f32 0.0, %v3224
      %3226 = vmatmul.bf16.gmra.mxu0 %v3154
      %v3227 = vpop.f32.mrf.mxu0
      %v3228 = vadd.f32 0.0, %v3227
      %v3229 = vpop.f32.mrf.mxu0
      %v3230 = vadd.f32 0.0, %v3229
      %3231 = vmatmul.bf16.gmra.mxu0 %v3157
      %v3232 = vpop.f32.mrf.mxu0
      %v3233 = vadd.f32 0.0, %v3232
      %v3234 = vpop.f32.mrf.mxu0
      %v3235 = vadd.f32 0.0, %v3234
      %3236 = vmatmul.bf16.gmra.mxu0 %v3160
      %v3237 = vpop.f32.mrf.mxu0
      %v3238 = vadd.f32 0.0, %v3237
      %v3239 = vpop.f32.mrf.mxu0
      %v3240 = vadd.f32 0.0, %v3239
      %3241 = vmatmul.bf16.gmra.mxu0 %v3163
      %v3242 = vpop.f32.mrf.mxu0
      %v3243 = vadd.f32 0.0, %v3242
      %v3244 = vpop.f32.mrf.mxu0
      %v3245 = vadd.f32 0.0, %v3244
      %3246 = vmatmul.bf16.gmra.mxu0 %v3166
      %v3247 = vpop.f32.mrf.mxu0
      %v3248 = vadd.f32 0.0, %v3247
      %v3249 = vpop.f32.mrf.mxu0
      %v3250 = vadd.f32 0.0, %v3249
      %3251 = vmatmul.bf16.gmra.mxu0 %v3169
      %v3252 = vpop.f32.mrf.mxu0
      %v3253 = vadd.f32 0.0, %v3252
      %v3254 = vpop.f32.mrf.mxu0
      %v3255 = vadd.f32 0.0, %v3254
      %3256 = vmatmul.bf16.gmra.mxu0 %v3172
      %v3257 = vpop.f32.mrf.mxu0
      %v3258 = vadd.f32 0.0, %v3257
      %v3259 = vpop.f32.mrf.mxu0
      %v3260 = vadd.f32 0.0, %v3259
      %3261 = vmatmul.bf16.gmra.mxu0 %v3175
      %v3262 = vpop.f32.mrf.mxu0
      %v3263 = vadd.f32 0.0, %v3262
      %v3264 = vpop.f32.mrf.mxu0
      %v3265 = vadd.f32 0.0, %v3264
      %3266 = vmatmul.bf16.gmra.mxu0 %v3178
      %v3267 = vpop.f32.mrf.mxu0
      %v3268 = vadd.f32 0.0, %v3267
      %v3269 = vpop.f32.mrf.mxu0
      %v3270 = vadd.f32 0.0, %v3269
      %3271 = vdwg.mxu0
      %v3304 = vunpack.c.l.b16 %v2643
      %v3305 = vunpack.c.l.b16 %v2644
      %v3306 = vunpack.c.l.b16 %v2646
      %v3307 = vunpack.c.l.b16 %v2647
      %v3308 = vunpack.c.l.b16 %v2649
      %v3309 = vunpack.c.l.b16 %v2650
      %v3310 = vunpack.c.l.b16 %v2652
      %v3311 = vunpack.c.l.b16 %v2653
      %v3312 = vunpack.c.l.b16 %v2655
      %v3313 = vunpack.c.l.b16 %v2656
      %v3314 = vunpack.c.l.b16 %v2658
      %v3315 = vunpack.c.l.b16 %v2659
      %v3316 = vunpack.c.l.b16 %v2661
      %v3317 = vunpack.c.l.b16 %v2662
      %v3318 = vunpack.c.l.b16 %v2664
      %v3319 = vunpack.c.l.b16 %v2665
      %v3320 = vunpack.c.l.b16 %v2667
      %v3321 = vunpack.c.l.b16 %v2668
      %v3322 = vunpack.c.l.b16 %v2670
      %v3323 = vunpack.c.l.b16 %v2671
      %v3324 = vunpack.c.l.b16 %v2673
      %v3325 = vunpack.c.l.b16 %v2674
      %v3326 = vunpack.c.l.b16 %v2676
      %v3327 = vunpack.c.l.b16 %v2677
      %v3328 = vunpack.c.l.b16 %v2679
      %v3329 = vunpack.c.l.b16 %v2680
      %v3330 = vunpack.c.l.b16 %v2682
      %v3331 = vunpack.c.l.b16 %v2683
      %v3332 = vunpack.c.l.b16 %v2685
      %v3333 = vunpack.c.l.b16 %v2686
      %v3334 = vunpack.c.l.b16 %v2688
      %v3335 = vunpack.c.l.b16 %v2689
      %v3336 = vpack.c.b16 %v3305, %v3304
      %v3337 = vpack.c.b16 %v3307, %v3306
      %v3338 = vpack.c.b16 %v3309, %v3308
      %v3339 = vpack.c.b16 %v3311, %v3310
      %v3340 = vpack.c.b16 %v3313, %v3312
      %v3341 = vpack.c.b16 %v3315, %v3314
      %v3342 = vpack.c.b16 %v3317, %v3316
      %v3343 = vpack.c.b16 %v3319, %v3318
      %v3344 = vpack.c.b16 %v3321, %v3320
      %v3345 = vpack.c.b16 %v3323, %v3322
      %v3346 = vpack.c.b16 %v3325, %v3324
      %v3347 = vpack.c.b16 %v3327, %v3326
      %v3348 = vpack.c.b16 %v3329, %v3328
      %v3349 = vpack.c.b16 %v3331, %v3330
      %v3350 = vpack.c.b16 %v3333, %v3332
      %v3351 = vpack.c.b16 %v3335, %v3334
      %v3353 = vsel %vm258, %v3336, 0
      %v3356 = vsel %vm258, %v3337, 0
      %v3359 = vsel %vm258, %v3338, 0
      %v3362 = vsel %vm258, %v3339, 0
      %v3365 = vsel %vm258, %v3340, 0
      %v3368 = vsel %vm258, %v3341, 0
      %v3371 = vsel %vm258, %v3342, 0
      %v3374 = vsel %vm258, %v3343, 0
      %v3377 = vsel %vm258, %v3344, 0
      %v3380 = vsel %vm258, %v3345, 0
      %v3383 = vsel %vm258, %v3346, 0
      %v3386 = vsel %vm258, %v3347, 0
      %v3389 = vsel %vm258, %v3348, 0
      %v3392 = vsel %vm258, %v3349, 0
      %v3395 = vsel %vm258, %v3350, 0
      %v3398 = vsel %vm258, %v3351, 0
      %v3401 = vsel %vm963, %v2697, 0
      %3403 = vmatpush.bf16.msra.mxu0 0
      %3404 = vmatpush.bf16.msra.mxu0 0
      %3405 = vmatpush.bf16.msra.mxu0 0
      %3406 = vmatpush.bf16.msra.mxu0 0
      %3407 = vmatpush.bf16.msra.mxu0 0
      %3408 = vmatpush.bf16.msra.mxu0 0
      %3409 = vmatpush.bf16.msra.mxu0 0
      %3410 = vmatpush.bf16.msra.mxu0 %v3401
      %3411 = vmatmul.bf16.gmra.mxu0 %v3353
      %v3412 = vpop.f32.mrf.mxu0
      %v3413 = vadd.f32 %v3193, %v3412
      %v3414 = vpop.f32.mrf.mxu0
      %v3415 = vadd.f32 %v3195, %v3414
      %3416 = vmatmul.bf16.gmra.mxu0 %v3356
      %v3417 = vpop.f32.mrf.mxu0
      %v3418 = vadd.f32 %v3198, %v3417
      %v3419 = vpop.f32.mrf.mxu0
      %v3420 = vadd.f32 %v3200, %v3419
      %3421 = vmatmul.bf16.gmra.mxu0 %v3359
      %v3422 = vpop.f32.mrf.mxu0
      %v3423 = vadd.f32 %v3203, %v3422
      %v3424 = vpop.f32.mrf.mxu0
      %v3425 = vadd.f32 %v3205, %v3424
      %3426 = vmatmul.bf16.gmra.mxu0 %v3362
      %v3427 = vpop.f32.mrf.mxu0
      %v3428 = vadd.f32 %v3208, %v3427
      %v3429 = vpop.f32.mrf.mxu0
      %v3430 = vadd.f32 %v3210, %v3429
      %3431 = vmatmul.bf16.gmra.mxu0 %v3365
      %v3432 = vpop.f32.mrf.mxu0
      %v3433 = vadd.f32 %v3213, %v3432
      %v3434 = vpop.f32.mrf.mxu0
      %v3435 = vadd.f32 %v3215, %v3434
      %3436 = vmatmul.bf16.gmra.mxu0 %v3368
      %v3437 = vpop.f32.mrf.mxu0
      %v3438 = vadd.f32 %v3218, %v3437
      %v3439 = vpop.f32.mrf.mxu0
      %v3440 = vadd.f32 %v3220, %v3439
      %3441 = vmatmul.bf16.gmra.mxu0 %v3371
      %v3442 = vpop.f32.mrf.mxu0
      %v3443 = vadd.f32 %v3223, %v3442
      %v3444 = vpop.f32.mrf.mxu0
      %v3445 = vadd.f32 %v3225, %v3444
      %3446 = vmatmul.bf16.gmra.mxu0 %v3374
      %v3447 = vpop.f32.mrf.mxu0
      %v3448 = vadd.f32 %v3228, %v3447
      %v3449 = vpop.f32.mrf.mxu0
      %v3450 = vadd.f32 %v3230, %v3449
      %3451 = vmatmul.bf16.gmra.mxu0 %v3377
      %v3452 = vpop.f32.mrf.mxu0
      %v3453 = vadd.f32 %v3233, %v3452
      %v3454 = vpop.f32.mrf.mxu0
      %v3455 = vadd.f32 %v3235, %v3454
      %3456 = vmatmul.bf16.gmra.mxu0 %v3380
      %v3457 = vpop.f32.mrf.mxu0
      %v3458 = vadd.f32 %v3238, %v3457
      %v3459 = vpop.f32.mrf.mxu0
      %v3460 = vadd.f32 %v3240, %v3459
      %3461 = vmatmul.bf16.gmra.mxu0 %v3383
      %v3462 = vpop.f32.mrf.mxu0
      %v3463 = vadd.f32 %v3243, %v3462
      %v3464 = vpop.f32.mrf.mxu0
      %v3465 = vadd.f32 %v3245, %v3464
      %3466 = vmatmul.bf16.gmra.mxu0 %v3386
      %v3467 = vpop.f32.mrf.mxu0
      %v3468 = vadd.f32 %v3248, %v3467
      %v3469 = vpop.f32.mrf.mxu0
      %v3470 = vadd.f32 %v3250, %v3469
      %3471 = vmatmul.bf16.gmra.mxu0 %v3389
      %v3472 = vpop.f32.mrf.mxu0
      %v3473 = vadd.f32 %v3253, %v3472
      %v3474 = vpop.f32.mrf.mxu0
      %v3475 = vadd.f32 %v3255, %v3474
      %3476 = vmatmul.bf16.gmra.mxu0 %v3392
      %v3477 = vpop.f32.mrf.mxu0
      %v3478 = vadd.f32 %v3258, %v3477
      %v3479 = vpop.f32.mrf.mxu0
      %v3480 = vadd.f32 %v3260, %v3479
      %3481 = vmatmul.bf16.gmra.mxu0 %v3395
      %v3482 = vpop.f32.mrf.mxu0
      %v3483 = vadd.f32 %v3263, %v3482
      %v3484 = vpop.f32.mrf.mxu0
      %v3485 = vadd.f32 %v3265, %v3484
      %3486 = vmatmul.bf16.gmra.mxu0 %v3398
      %v3487 = vpop.f32.mrf.mxu0
      %v3488 = vadd.f32 %v3268, %v3487
      %v3489 = vpop.f32.mrf.mxu0
      %v3490 = vadd.f32 %v3270, %v3489
      %3491 = vdwg.mxu0
      %s3492 = scalar_lea.vmem %s3, 4
      %v3493 = vld [vmem:[%s3492] sm:$0x3]
      %v3510 = vrot.slane %v2643, 5
      %v3511 = vrot.slane %v3510, 4
      %v3512 = vrot.slane %v2644, 5
      %v3513 = vsel %vm1296, %v3511, %v3512
      %v3514 = vrot.slane %v3512, 4
      %v3515 = vrot.slane %v2645, 5
      %v3516 = vsel %vm1296, %v3514, %v3515
      %v3517 = vrot.slane %v2646, 5
      %v3518 = vrot.slane %v3517, 4
      %v3519 = vrot.slane %v2647, 5
      %v3520 = vsel %vm1296, %v3518, %v3519
      %v3521 = vrot.slane %v3519, 4
      %v3522 = vrot.slane %v2648, 5
      %v3523 = vsel %vm1296, %v3521, %v3522
      %v3524 = vrot.slane %v2649, 5
      %v3525 = vrot.slane %v3524, 4
      %v3526 = vrot.slane %v2650, 5
      %v3527 = vsel %vm1296, %v3525, %v3526
      %v3528 = vrot.slane %v3526, 4
      %v3529 = vrot.slane %v2651, 5
      %v3530 = vsel %vm1296, %v3528, %v3529
      %v3531 = vrot.slane %v2652, 5
      %v3532 = vrot.slane %v3531, 4
      %v3533 = vrot.slane %v2653, 5
      %v3534 = vsel %vm1296, %v3532, %v3533
      %v3535 = vrot.slane %v3533, 4
      %v3536 = vrot.slane %v2654, 5
      %v3537 = vsel %vm1296, %v3535, %v3536
      %v3538 = vrot.slane %v2655, 5
      %v3539 = vrot.slane %v3538, 4
      %v3540 = vrot.slane %v2656, 5
      %v3541 = vsel %vm1296, %v3539, %v3540
      %v3542 = vrot.slane %v3540, 4
      %v3543 = vrot.slane %v2657, 5
      %v3544 = vsel %vm1296, %v3542, %v3543
      %v3545 = vrot.slane %v2658, 5
      %v3546 = vrot.slane %v3545, 4
      %v3547 = vrot.slane %v2659, 5
      %v3548 = vsel %vm1296, %v3546, %v3547
      %v3549 = vrot.slane %v3547, 4
      %v3550 = vrot.slane %v2660, 5
      %v3551 = vsel %vm1296, %v3549, %v3550
      %v3552 = vrot.slane %v2661, 5
      %v3553 = vrot.slane %v3552, 4
      %v3554 = vrot.slane %v2662, 5
      %v3555 = vsel %vm1296, %v3553, %v3554
      %v3556 = vrot.slane %v3554, 4
      %v3557 = vrot.slane %v2663, 5
      %v3558 = vsel %vm1296, %v3556, %v3557
      %v3559 = vrot.slane %v2664, 5
      %v3560 = vrot.slane %v3559, 4
      %v3561 = vrot.slane %v2665, 5
      %v3562 = vsel %vm1296, %v3560, %v3561
      %v3563 = vrot.slane %v3561, 4
      %v3564 = vrot.slane %v2666, 5
      %v3565 = vsel %vm1296, %v3563, %v3564
      %v3566 = vrot.slane %v2667, 5
      %v3567 = vrot.slane %v3566, 4
      %v3568 = vrot.slane %v2668, 5
      %v3569 = vsel %vm1296, %v3567, %v3568
      %v3570 = vrot.slane %v3568, 4
      %v3571 = vrot.slane %v2669, 5
      %v3572 = vsel %vm1296, %v3570, %v3571
      %v3573 = vrot.slane %v2670, 5
      %v3574 = vrot.slane %v3573, 4
      %v3575 = vrot.slane %v2671, 5
      %v3576 = vsel %vm1296, %v3574, %v3575
      %v3577 = vrot.slane %v3575, 4
      %v3578 = vrot.slane %v2672, 5
      %v3579 = vsel %vm1296, %v3577, %v3578
      %v3580 = vrot.slane %v2673, 5
      %v3581 = vrot.slane %v3580, 4
      %v3582 = vrot.slane %v2674, 5
      %v3583 = vsel %vm1296, %v3581, %v3582
      %v3584 = vrot.slane %v3582, 4
      %v3585 = vrot.slane %v2675, 5
      %v3586 = vsel %vm1296, %v3584, %v3585
      %v3587 = vrot.slane %v2676, 5
      %v3588 = vrot.slane %v3587, 4
      %v3589 = vrot.slane %v2677, 5
      %v3590 = vsel %vm1296, %v3588, %v3589
      %v3591 = vrot.slane %v3589, 4
      %v3592 = vrot.slane %v2678, 5
      %v3593 = vsel %vm1296, %v3591, %v3592
      %v3594 = vrot.slane %v2679, 5
      %v3595 = vrot.slane %v3594, 4
      %v3596 = vrot.slane %v2680, 5
      %v3597 = vsel %vm1296, %v3595, %v3596
      %v3598 = vrot.slane %v3596, 4
      %v3599 = vrot.slane %v2681, 5
      %v3600 = vsel %vm1296, %v3598, %v3599
      %v3601 = vrot.slane %v2682, 5
      %v3602 = vrot.slane %v3601, 4
      %v3603 = vrot.slane %v2683, 5
      %v3604 = vsel %vm1296, %v3602, %v3603
      %v3605 = vrot.slane %v3603, 4
      %v3606 = vrot.slane %v2684, 5
      %v3607 = vsel %vm1296, %v3605, %v3606
      %v3608 = vrot.slane %v2685, 5
      %v3609 = vrot.slane %v3608, 4
      %v3610 = vrot.slane %v2686, 5
      %v3611 = vsel %vm1296, %v3609, %v3610
      %v3612 = vrot.slane %v3610, 4
      %v3613 = vrot.slane %v2687, 5
      %v3614 = vsel %vm1296, %v3612, %v3613
      %v3615 = vrot.slane %v2688, 5
      %v3616 = vrot.slane %v3615, 4
      %v3617 = vrot.slane %v2689, 5
      %v3618 = vsel %vm1296, %v3616, %v3617
      %v3619 = vrot.slane %v3617, 4
      %v3620 = vrot.slane %v2690, 5
      %v3621 = vsel %vm1296, %v3619, %v3620
      %v3622 = vunpack.c.l.b16 %v3513
      %v3623 = vunpack.c.l.b16 %v3516
      %v3624 = vunpack.c.l.b16 %v3520
      %v3625 = vunpack.c.l.b16 %v3523
      %v3626 = vunpack.c.l.b16 %v3527
      %v3627 = vunpack.c.l.b16 %v3530
      %v3628 = vunpack.c.l.b16 %v3534
      %v3629 = vunpack.c.l.b16 %v3537
      %v3630 = vunpack.c.l.b16 %v3541
      %v3631 = vunpack.c.l.b16 %v3544
      %v3632 = vunpack.c.l.b16 %v3548
      %v3633 = vunpack.c.l.b16 %v3551
      %v3634 = vunpack.c.l.b16 %v3555
      %v3635 = vunpack.c.l.b16 %v3558
      %v3636 = vunpack.c.l.b16 %v3562
      %v3637 = vunpack.c.l.b16 %v3565
      %v3638 = vunpack.c.l.b16 %v3569
      %v3639 = vunpack.c.l.b16 %v3572
      %v3640 = vunpack.c.l.b16 %v3576
      %v3641 = vunpack.c.l.b16 %v3579
      %v3642 = vunpack.c.l.b16 %v3583
      %v3643 = vunpack.c.l.b16 %v3586
      %v3644 = vunpack.c.l.b16 %v3590
      %v3645 = vunpack.c.l.b16 %v3593
      %v3646 = vunpack.c.l.b16 %v3597
      %v3647 = vunpack.c.l.b16 %v3600
      %v3648 = vunpack.c.l.b16 %v3604
      %v3649 = vunpack.c.l.b16 %v3607
      %v3650 = vunpack.c.l.b16 %v3611
      %v3651 = vunpack.c.l.b16 %v3614
      %v3652 = vunpack.c.l.b16 %v3618
      %v3653 = vunpack.c.l.b16 %v3621
      %v3654 = vpack.c.b16 %v3623, %v3622
      %v3655 = vpack.c.b16 %v3625, %v3624
      %v3656 = vpack.c.b16 %v3627, %v3626
      %v3657 = vpack.c.b16 %v3629, %v3628
      %v3658 = vpack.c.b16 %v3631, %v3630
      %v3659 = vpack.c.b16 %v3633, %v3632
      %v3660 = vpack.c.b16 %v3635, %v3634
      %v3661 = vpack.c.b16 %v3637, %v3636
      %v3662 = vpack.c.b16 %v3639, %v3638
      %v3663 = vpack.c.b16 %v3641, %v3640
      %v3664 = vpack.c.b16 %v3643, %v3642
      %v3665 = vpack.c.b16 %v3645, %v3644
      %v3666 = vpack.c.b16 %v3647, %v3646
      %v3667 = vpack.c.b16 %v3649, %v3648
      %v3668 = vpack.c.b16 %v3651, %v3650
      %v3669 = vpack.c.b16 %v3653, %v3652
      %v3671 = vsel %vm258, %v3654, 0
      %v3674 = vsel %vm258, %v3655, 0
      %v3677 = vsel %vm258, %v3656, 0
      %v3680 = vsel %vm258, %v3657, 0
      %v3683 = vsel %vm258, %v3658, 0
      %v3686 = vsel %vm258, %v3659, 0
      %v3689 = vsel %vm258, %v3660, 0
      %v3692 = vsel %vm258, %v3661, 0
      %v3695 = vsel %vm258, %v3662, 0
      %v3698 = vsel %vm258, %v3663, 0
      %v3701 = vsel %vm258, %v3664, 0
      %v3704 = vsel %vm258, %v3665, 0
      %v3707 = vsel %vm258, %v3666, 0
      %v3710 = vsel %vm258, %v3667, 0
      %v3713 = vsel %vm258, %v3668, 0
      %v3716 = vsel %vm258, %v3669, 0
      %v3719 = vsel %vm963, %v3493, 0
      %3721 = vmatpush.bf16.msra.mxu0 0
      %3722 = vmatpush.bf16.msra.mxu0 0
      %3723 = vmatpush.bf16.msra.mxu0 0
      %3724 = vmatpush.bf16.msra.mxu0 0
      %3725 = vmatpush.bf16.msra.mxu0 0
      %3726 = vmatpush.bf16.msra.mxu0 0
      %3727 = vmatpush.bf16.msra.mxu0 0
      %3728 = vmatpush.bf16.msra.mxu0 %v3719
      %3729 = vmatmul.bf16.gmra.mxu0 %v3671
      %v3730 = vpop.f32.mrf.mxu0
      %v3731 = vadd.f32 0.0, %v3730
      %v3732 = vpop.f32.mrf.mxu0
      %v3733 = vadd.f32 0.0, %v3732
      %3734 = vmatmul.bf16.gmra.mxu0 %v3674
      %v3735 = vpop.f32.mrf.mxu0
      %v3736 = vadd.f32 0.0, %v3735
      %v3737 = vpop.f32.mrf.mxu0
      %v3738 = vadd.f32 0.0, %v3737
      %3739 = vmatmul.bf16.gmra.mxu0 %v3677
      %v3740 = vpop.f32.mrf.mxu0
      %v3741 = vadd.f32 0.0, %v3740
      %v3742 = vpop.f32.mrf.mxu0
      %v3743 = vadd.f32 0.0, %v3742
      %3744 = vmatmul.bf16.gmra.mxu0 %v3680
      %v3745 = vpop.f32.mrf.mxu0
      %v3746 = vadd.f32 0.0, %v3745
      %v3747 = vpop.f32.mrf.mxu0
      %v3748 = vadd.f32 0.0, %v3747
      %3749 = vmatmul.bf16.gmra.mxu0 %v3683
      %v3750 = vpop.f32.mrf.mxu0
      %v3751 = vadd.f32 0.0, %v3750
      %v3752 = vpop.f32.mrf.mxu0
      %v3753 = vadd.f32 0.0, %v3752
      %3754 = vmatmul.bf16.gmra.mxu0 %v3686
      %v3755 = vpop.f32.mrf.mxu0
      %v3756 = vadd.f32 0.0, %v3755
      %v3757 = vpop.f32.mrf.mxu0
      %v3758 = vadd.f32 0.0, %v3757
      %3759 = vmatmul.bf16.gmra.mxu0 %v3689
      %v3760 = vpop.f32.mrf.mxu0
      %v3761 = vadd.f32 0.0, %v3760
      %v3762 = vpop.f32.mrf.mxu0
      %v3763 = vadd.f32 0.0, %v3762
      %3764 = vmatmul.bf16.gmra.mxu0 %v3692
      %v3765 = vpop.f32.mrf.mxu0
      %v3766 = vadd.f32 0.0, %v3765
      %v3767 = vpop.f32.mrf.mxu0
      %v3768 = vadd.f32 0.0, %v3767
      %3769 = vmatmul.bf16.gmra.mxu0 %v3695
      %v3770 = vpop.f32.mrf.mxu0
      %v3771 = vadd.f32 0.0, %v3770
      %v3772 = vpop.f32.mrf.mxu0
      %v3773 = vadd.f32 0.0, %v3772
      %3774 = vmatmul.bf16.gmra.mxu0 %v3698
      %v3775 = vpop.f32.mrf.mxu0
      %v3776 = vadd.f32 0.0, %v3775
      %v3777 = vpop.f32.mrf.mxu0
      %v3778 = vadd.f32 0.0, %v3777
      %3779 = vmatmul.bf16.gmra.mxu0 %v3701
      %v3780 = vpop.f32.mrf.mxu0
      %v3781 = vadd.f32 0.0, %v3780
      %v3782 = vpop.f32.mrf.mxu0
      %v3783 = vadd.f32 0.0, %v3782
      %3784 = vmatmul.bf16.gmra.mxu0 %v3704
      %v3785 = vpop.f32.mrf.mxu0
      %v3786 = vadd.f32 0.0, %v3785
      %v3787 = vpop.f32.mrf.mxu0
      %v3788 = vadd.f32 0.0, %v3787
      %3789 = vmatmul.bf16.gmra.mxu0 %v3707
      %v3790 = vpop.f32.mrf.mxu0
      %v3791 = vadd.f32 0.0, %v3790
      %v3792 = vpop.f32.mrf.mxu0
      %v3793 = vadd.f32 0.0, %v3792
      %3794 = vmatmul.bf16.gmra.mxu0 %v3710
      %v3795 = vpop.f32.mrf.mxu0
      %v3796 = vadd.f32 0.0, %v3795
      %v3797 = vpop.f32.mrf.mxu0
      %v3798 = vadd.f32 0.0, %v3797
      %3799 = vmatmul.bf16.gmra.mxu0 %v3713
      %v3800 = vpop.f32.mrf.mxu0
      %v3801 = vadd.f32 0.0, %v3800
      %v3802 = vpop.f32.mrf.mxu0
      %v3803 = vadd.f32 0.0, %v3802
      %3804 = vmatmul.bf16.gmra.mxu0 %v3716
      %v3805 = vpop.f32.mrf.mxu0
      %v3806 = vadd.f32 0.0, %v3805
      %v3807 = vpop.f32.mrf.mxu0
      %v3808 = vadd.f32 0.0, %v3807
      %3809 = vdwg.mxu0
      %v3810 = vadd.f32 %v3413, %v3731
      %v3811 = vadd.f32 %v3415, %v3733
      %v3812 = vadd.f32 %v3418, %v3736
      %v3813 = vadd.f32 %v3420, %v3738
      %v3814 = vadd.f32 %v3423, %v3741
      %v3815 = vadd.f32 %v3425, %v3743
      %v3816 = vadd.f32 %v3428, %v3746
      %v3817 = vadd.f32 %v3430, %v3748
      %v3818 = vadd.f32 %v3433, %v3751
      %v3819 = vadd.f32 %v3435, %v3753
      %v3820 = vadd.f32 %v3438, %v3756
      %v3821 = vadd.f32 %v3440, %v3758
      %v3822 = vadd.f32 %v3443, %v3761
      %v3823 = vadd.f32 %v3445, %v3763
      %v3824 = vadd.f32 %v3448, %v3766
      %v3825 = vadd.f32 %v3450, %v3768
      %v3826 = vadd.f32 %v3453, %v3771
      %v3827 = vadd.f32 %v3455, %v3773
      %v3828 = vadd.f32 %v3458, %v3776
      %v3829 = vadd.f32 %v3460, %v3778
      %v3830 = vadd.f32 %v3463, %v3781
      %v3831 = vadd.f32 %v3465, %v3783
      %v3832 = vadd.f32 %v3468, %v3786
      %v3833 = vadd.f32 %v3470, %v3788
      %v3834 = vadd.f32 %v3473, %v3791
      %v3835 = vadd.f32 %v3475, %v3793
      %v3836 = vadd.f32 %v3478, %v3796
      %v3837 = vadd.f32 %v3480, %v3798
      %v3838 = vadd.f32 %v3483, %v3801
      %v3839 = vadd.f32 %v3485, %v3803
      %v3840 = vadd.f32 %v3488, %v3806
      %v3841 = vadd.f32 %v3490, %v3808
      %s3842 = scalar_lea.vmem %s3, 6
      %v3843 = vld [vmem:[%s3842] sm:$0x3]
      %v3846 = vunpack.c.l.b16 %v2691
      %v3847 = vunpack.c.l.b16 %v2692
      %v3848 = vpack.c.b16 %v3847, %v3846
      %v3850 = vsel %vm258, %v3848, 0
      %v3853 = vsel %vm963, %v3843, 0
      %3855 = vmatpush.bf16.msra.mxu0 0
      %3856 = vmatpush.bf16.msra.mxu0 0
      %3857 = vmatpush.bf16.msra.mxu0 0
      %3858 = vmatpush.bf16.msra.mxu0 0
      %3859 = vmatpush.bf16.msra.mxu0 0
      %3860 = vmatpush.bf16.msra.mxu0 0
      %3861 = vmatpush.bf16.msra.mxu0 0
      %3862 = vmatpush.bf16.msra.mxu0 %v3853
      %3863 = vmatmul.bf16.gmra.mxu0 %v3356
      %v3864 = vpop.f32.mrf.mxu0
      %v3865 = vadd.f32 0.0, %v3864
      %v3866 = vpop.f32.mrf.mxu0
      %v3867 = vadd.f32 0.0, %v3866
      %3868 = vmatmul.bf16.gmra.mxu0 %v3359
      %v3869 = vpop.f32.mrf.mxu0
      %v3870 = vadd.f32 0.0, %v3869
      %v3871 = vpop.f32.mrf.mxu0
      %v3872 = vadd.f32 0.0, %v3871
      %3873 = vmatmul.bf16.gmra.mxu0 %v3362
      %v3874 = vpop.f32.mrf.mxu0
      %v3875 = vadd.f32 0.0, %v3874
      %v3876 = vpop.f32.mrf.mxu0
      %v3877 = vadd.f32 0.0, %v3876
      %3878 = vmatmul.bf16.gmra.mxu0 %v3365
      %v3879 = vpop.f32.mrf.mxu0
      %v3880 = vadd.f32 0.0, %v3879
      %v3881 = vpop.f32.mrf.mxu0
      %v3882 = vadd.f32 0.0, %v3881
      %3883 = vmatmul.bf16.gmra.mxu0 %v3368
      %v3884 = vpop.f32.mrf.mxu0
      %v3885 = vadd.f32 0.0, %v3884
      %v3886 = vpop.f32.mrf.mxu0
      %v3887 = vadd.f32 0.0, %v3886
      %3888 = vmatmul.bf16.gmra.mxu0 %v3371
      %v3889 = vpop.f32.mrf.mxu0
      %v3890 = vadd.f32 0.0, %v3889
      %v3891 = vpop.f32.mrf.mxu0
      %v3892 = vadd.f32 0.0, %v3891
      %3893 = vmatmul.bf16.gmra.mxu0 %v3374
      %v3894 = vpop.f32.mrf.mxu0
      %v3895 = vadd.f32 0.0, %v3894
      %v3896 = vpop.f32.mrf.mxu0
      %v3897 = vadd.f32 0.0, %v3896
      %3898 = vmatmul.bf16.gmra.mxu0 %v3377
      %v3899 = vpop.f32.mrf.mxu0
      %v3900 = vadd.f32 0.0, %v3899
      %v3901 = vpop.f32.mrf.mxu0
      %v3902 = vadd.f32 0.0, %v3901
      %3903 = vmatmul.bf16.gmra.mxu0 %v3380
      %v3904 = vpop.f32.mrf.mxu0
      %v3905 = vadd.f32 0.0, %v3904
      %v3906 = vpop.f32.mrf.mxu0
      %v3907 = vadd.f32 0.0, %v3906
      %3908 = vmatmul.bf16.gmra.mxu0 %v3383
      %v3909 = vpop.f32.mrf.mxu0
      %v3910 = vadd.f32 0.0, %v3909
      %v3911 = vpop.f32.mrf.mxu0
      %v3912 = vadd.f32 0.0, %v3911
      %3913 = vmatmul.bf16.gmra.mxu0 %v3386
      %v3914 = vpop.f32.mrf.mxu0
      %v3915 = vadd.f32 0.0, %v3914
      %v3916 = vpop.f32.mrf.mxu0
      %v3917 = vadd.f32 0.0, %v3916
      %3918 = vmatmul.bf16.gmra.mxu0 %v3389
      %v3919 = vpop.f32.mrf.mxu0
      %v3920 = vadd.f32 0.0, %v3919
      %v3921 = vpop.f32.mrf.mxu0
      %v3922 = vadd.f32 0.0, %v3921
      %3923 = vmatmul.bf16.gmra.mxu0 %v3392
      %v3924 = vpop.f32.mrf.mxu0
      %v3925 = vadd.f32 0.0, %v3924
      %v3926 = vpop.f32.mrf.mxu0
      %v3927 = vadd.f32 0.0, %v3926
      %3928 = vmatmul.bf16.gmra.mxu0 %v3395
      %v3929 = vpop.f32.mrf.mxu0
      %v3930 = vadd.f32 0.0, %v3929
      %v3931 = vpop.f32.mrf.mxu0
      %v3932 = vadd.f32 0.0, %v3931
      %3933 = vmatmul.bf16.gmra.mxu0 %v3398
      %v3934 = vpop.f32.mrf.mxu0
      %v3935 = vadd.f32 0.0, %v3934
      %v3936 = vpop.f32.mrf.mxu0
      %v3937 = vadd.f32 0.0, %v3936
      %3938 = vmatmul.bf16.gmra.mxu0 %v3850
      %v3939 = vpop.f32.mrf.mxu0
      %v3940 = vadd.f32 0.0, %v3939
      %v3941 = vpop.f32.mrf.mxu0
      %v3942 = vadd.f32 0.0, %v3941
      %3943 = vdwg.mxu0
      %v3944 = vadd.f32 %v3810, %v3865
      %v3945 = vadd.f32 %v3811, %v3867
      %v3946 = vadd.f32 %v3812, %v3870
      %v3947 = vadd.f32 %v3813, %v3872
      %v3948 = vadd.f32 %v3814, %v3875
      %v3949 = vadd.f32 %v3815, %v3877
      %v3950 = vadd.f32 %v3816, %v3880
      %v3951 = vadd.f32 %v3817, %v3882
      %v3952 = vadd.f32 %v3818, %v3885
      %v3953 = vadd.f32 %v3819, %v3887
      %v3954 = vadd.f32 %v3820, %v3890
      %v3955 = vadd.f32 %v3821, %v3892
      %v3956 = vadd.f32 %v3822, %v3895
      %v3957 = vadd.f32 %v3823, %v3897
      %v3958 = vadd.f32 %v3824, %v3900
      %v3959 = vadd.f32 %v3825, %v3902
      %v3960 = vadd.f32 %v3826, %v3905
      %v3961 = vadd.f32 %v3827, %v3907
      %v3962 = vadd.f32 %v3828, %v3910
      %v3963 = vadd.f32 %v3829, %v3912
      %v3964 = vadd.f32 %v3830, %v3915
      %v3965 = vadd.f32 %v3831, %v3917
      %v3966 = vadd.f32 %v3832, %v3920
      %v3967 = vadd.f32 %v3833, %v3922
      %v3968 = vadd.f32 %v3834, %v3925
      %v3969 = vadd.f32 %v3835, %v3927
      %v3970 = vadd.f32 %v3836, %v3930
      %v3971 = vadd.f32 %v3837, %v3932
      %v3972 = vadd.f32 %v3838, %v3935
      %v3973 = vadd.f32 %v3839, %v3937
      %v3974 = vadd.f32 %v3840, %v3940
      %v3975 = vadd.f32 %v3841, %v3942
      %s3976 = scalar_lea.vmem %s3, 8
      %v3977 = vld [vmem:[%s3976] sm:$0x3]
      %v3979 = vshrl.u32 %v2691, 16
      %v3981 = vrot.slane %v3979, 4
      %v3982 = vshll.u32 %v2691, 16
      %v3984 = vrot.slane %v3982, 5
      %v3985 = vor.u32 %v3981, %v3984
      %v3986 = vrot.slane %v3985, 4
      %v3988 = vshll.u32 %v2692, 16
      %v3990 = vrot.slane %v3988, 5
      %v3991 = vsel %vm482, %v3986, %v3990
      %v3992 = vshrl.u32 %v2692, 16
      %v3994 = vrot.slane %v3992, 4
      %v3995 = vor.u32 %v3994, %v3990
      %v3996 = vrot.slane %v3995, 4
      %v3998 = vshll.u32 %v2693, 16
      %v4000 = vrot.slane %v3998, 5
      %v4001 = vsel %vm482, %v3996, %v4000
      %v4002 = vunpack.c.l.b16 %v3991
      %v4003 = vunpack.c.l.b16 %v4001
      %v4004 = vpack.c.b16 %v4003, %v4002
      %v4006 = vsel %vm258, %v4004, 0
      %v4009 = vsel %vm963, %v3977, 0
      %4011 = vmatpush.bf16.msra.mxu0 0
      %4012 = vmatpush.bf16.msra.mxu0 0
      %4013 = vmatpush.bf16.msra.mxu0 0
      %4014 = vmatpush.bf16.msra.mxu0 0
      %4015 = vmatpush.bf16.msra.mxu0 0
      %4016 = vmatpush.bf16.msra.mxu0 0
      %4017 = vmatpush.bf16.msra.mxu0 0
      %4018 = vmatpush.bf16.msra.mxu0 %v4009
      %4019 = vmatmul.bf16.gmra.mxu0 %v3136
      %v4020 = vpop.f32.mrf.mxu0
      %v4021 = vadd.f32 0.0, %v4020
      %v4022 = vpop.f32.mrf.mxu0
      %v4023 = vadd.f32 0.0, %v4022
      %4024 = vmatmul.bf16.gmra.mxu0 %v3139
      %v4025 = vpop.f32.mrf.mxu0
      %v4026 = vadd.f32 0.0, %v4025
      %v4027 = vpop.f32.mrf.mxu0
      %v4028 = vadd.f32 0.0, %v4027
      %4029 = vmatmul.bf16.gmra.mxu0 %v3142
      %v4030 = vpop.f32.mrf.mxu0
      %v4031 = vadd.f32 0.0, %v4030
      %v4032 = vpop.f32.mrf.mxu0
      %v4033 = vadd.f32 0.0, %v4032
      %4034 = vmatmul.bf16.gmra.mxu0 %v3145
      %v4035 = vpop.f32.mrf.mxu0
      %v4036 = vadd.f32 0.0, %v4035
      %v4037 = vpop.f32.mrf.mxu0
      %v4038 = vadd.f32 0.0, %v4037
      %4039 = vmatmul.bf16.gmra.mxu0 %v3148
      %v4040 = vpop.f32.mrf.mxu0
      %v4041 = vadd.f32 0.0, %v4040
      %v4042 = vpop.f32.mrf.mxu0
      %v4043 = vadd.f32 0.0, %v4042
      %4044 = vmatmul.bf16.gmra.mxu0 %v3151
      %v4045 = vpop.f32.mrf.mxu0
      %v4046 = vadd.f32 0.0, %v4045
      %v4047 = vpop.f32.mrf.mxu0
      %v4048 = vadd.f32 0.0, %v4047
      %4049 = vmatmul.bf16.gmra.mxu0 %v3154
      %v4050 = vpop.f32.mrf.mxu0
      %v4051 = vadd.f32 0.0, %v4050
      %v4052 = vpop.f32.mrf.mxu0
      %v4053 = vadd.f32 0.0, %v4052
      %4054 = vmatmul.bf16.gmra.mxu0 %v3157
      %v4055 = vpop.f32.mrf.mxu0
      %v4056 = vadd.f32 0.0, %v4055
      %v4057 = vpop.f32.mrf.mxu0
      %v4058 = vadd.f32 0.0, %v4057
      %4059 = vmatmul.bf16.gmra.mxu0 %v3160
      %v4060 = vpop.f32.mrf.mxu0
      %v4061 = vadd.f32 0.0, %v4060
      %v4062 = vpop.f32.mrf.mxu0
      %v4063 = vadd.f32 0.0, %v4062
      %4064 = vmatmul.bf16.gmra.mxu0 %v3163
      %v4065 = vpop.f32.mrf.mxu0
      %v4066 = vadd.f32 0.0, %v4065
      %v4067 = vpop.f32.mrf.mxu0
      %v4068 = vadd.f32 0.0, %v4067
      %4069 = vmatmul.bf16.gmra.mxu0 %v3166
      %v4070 = vpop.f32.mrf.mxu0
      %v4071 = vadd.f32 0.0, %v4070
      %v4072 = vpop.f32.mrf.mxu0
      %v4073 = vadd.f32 0.0, %v4072
      %4074 = vmatmul.bf16.gmra.mxu0 %v3169
      %v4075 = vpop.f32.mrf.mxu0
      %v4076 = vadd.f32 0.0, %v4075
      %v4077 = vpop.f32.mrf.mxu0
      %v4078 = vadd.f32 0.0, %v4077
      %4079 = vmatmul.bf16.gmra.mxu0 %v3172
      %v4080 = vpop.f32.mrf.mxu0
      %v4081 = vadd.f32 0.0, %v4080
      %v4082 = vpop.f32.mrf.mxu0
      %v4083 = vadd.f32 0.0, %v4082
      %4084 = vmatmul.bf16.gmra.mxu0 %v3175
      %v4085 = vpop.f32.mrf.mxu0
      %v4086 = vadd.f32 0.0, %v4085
      %v4087 = vpop.f32.mrf.mxu0
      %v4088 = vadd.f32 0.0, %v4087
      %4089 = vmatmul.bf16.gmra.mxu0 %v3178
      %v4090 = vpop.f32.mrf.mxu0
      %v4091 = vadd.f32 0.0, %v4090
      %v4092 = vpop.f32.mrf.mxu0
      %v4093 = vadd.f32 0.0, %v4092
      %4094 = vmatmul.bf16.gmra.mxu0 %v4006
      %v4095 = vpop.f32.mrf.mxu0
      %v4096 = vadd.f32 0.0, %v4095
      %v4097 = vpop.f32.mrf.mxu0
      %v4098 = vadd.f32 0.0, %v4097
      %4099 = vdwg.mxu0
      %v4100 = vadd.f32 %v3944, %v4021
      %v4101 = vadd.f32 %v3945, %v4023
      %v4102 = vadd.f32 %v3946, %v4026
      %v4103 = vadd.f32 %v3947, %v4028
      %v4104 = vadd.f32 %v3948, %v4031
      %v4105 = vadd.f32 %v3949, %v4033
      %v4106 = vadd.f32 %v3950, %v4036
      %v4107 = vadd.f32 %v3951, %v4038
      %v4108 = vadd.f32 %v3952, %v4041
      %v4109 = vadd.f32 %v3953, %v4043
      %v4110 = vadd.f32 %v3954, %v4046
      %v4111 = vadd.f32 %v3955, %v4048
      %v4112 = vadd.f32 %v3956, %v4051
      %v4113 = vadd.f32 %v3957, %v4053
      %v4114 = vadd.f32 %v3958, %v4056
      %v4115 = vadd.f32 %v3959, %v4058
      %v4116 = vadd.f32 %v3960, %v4061
      %v4117 = vadd.f32 %v3961, %v4063
      %v4118 = vadd.f32 %v3962, %v4066
      %v4119 = vadd.f32 %v3963, %v4068
      %v4120 = vadd.f32 %v3964, %v4071
      %v4121 = vadd.f32 %v3965, %v4073
      %v4122 = vadd.f32 %v3966, %v4076
      %v4123 = vadd.f32 %v3967, %v4078
      %v4124 = vadd.f32 %v3968, %v4081
      %v4125 = vadd.f32 %v3969, %v4083
      %v4126 = vadd.f32 %v3970, %v4086
      %v4127 = vadd.f32 %v3971, %v4088
      %v4128 = vadd.f32 %v3972, %v4091
      %v4129 = vadd.f32 %v3973, %v4093
      %v4130 = vadd.f32 %v3974, %v4096
      %v4131 = vadd.f32 %v3975, %v4098
      %s4132 = scalar_lea.vmem %s3, 10
      %v4133 = vld [vmem:[%s4132] sm:$0x3]
      %v4135 = vrot.slane %v2691, 5
      %v4136 = vrot.slane %v4135, 4
      %v4137 = vrot.slane %v2692, 5
      %v4138 = vsel %vm1296, %v4136, %v4137
      %v4139 = vrot.slane %v4137, 4
      %v4140 = vrot.slane %v2693, 5
      %v4141 = vsel %vm1296, %v4139, %v4140
      %v4142 = vunpack.c.l.b16 %v4138
      %v4143 = vunpack.c.l.b16 %v4141
      %v4144 = vpack.c.b16 %v4143, %v4142
      %v4146 = vsel %vm258, %v4144, 0
      %v4149 = vsel %vm963, %v4133, 0
      %4151 = vmatpush.bf16.msra.mxu0 0
      %4152 = vmatpush.bf16.msra.mxu0 0
      %4153 = vmatpush.bf16.msra.mxu0 0
      %4154 = vmatpush.bf16.msra.mxu0 0
      %4155 = vmatpush.bf16.msra.mxu0 0
      %4156 = vmatpush.bf16.msra.mxu0 0
      %4157 = vmatpush.bf16.msra.mxu0 0
      %4158 = vmatpush.bf16.msra.mxu0 %v4149
      %4159 = vmatmul.bf16.gmra.mxu0 %v3674
      %v4160 = vpop.f32.mrf.mxu0
      %v4161 = vadd.f32 0.0, %v4160
      %v4162 = vpop.f32.mrf.mxu0
      %v4163 = vadd.f32 0.0, %v4162
      %4164 = vmatmul.bf16.gmra.mxu0 %v3677
      %v4165 = vpop.f32.mrf.mxu0
      %v4166 = vadd.f32 0.0, %v4165
      %v4167 = vpop.f32.mrf.mxu0
      %v4168 = vadd.f32 0.0, %v4167
      %4169 = vmatmul.bf16.gmra.mxu0 %v3680
      %v4170 = vpop.f32.mrf.mxu0
      %v4171 = vadd.f32 0.0, %v4170
      %v4172 = vpop.f32.mrf.mxu0
      %v4173 = vadd.f32 0.0, %v4172
      %4174 = vmatmul.bf16.gmra.mxu0 %v3683
      %v4175 = vpop.f32.mrf.mxu0
      %v4176 = vadd.f32 0.0, %v4175
      %v4177 = vpop.f32.mrf.mxu0
      %v4178 = vadd.f32 0.0, %v4177
      %4179 = vmatmul.bf16.gmra.mxu0 %v3686
      %v4180 = vpop.f32.mrf.mxu0
      %v4181 = vadd.f32 0.0, %v4180
      %v4182 = vpop.f32.mrf.mxu0
      %v4183 = vadd.f32 0.0, %v4182
      %4184 = vmatmul.bf16.gmra.mxu0 %v3689
      %v4185 = vpop.f32.mrf.mxu0
      %v4186 = vadd.f32 0.0, %v4185
      %v4187 = vpop.f32.mrf.mxu0
      %v4188 = vadd.f32 0.0, %v4187
      %4189 = vmatmul.bf16.gmra.mxu0 %v3692
      %v4190 = vpop.f32.mrf.mxu0
      %v4191 = vadd.f32 0.0, %v4190
      %v4192 = vpop.f32.mrf.mxu0
      %v4193 = vadd.f32 0.0, %v4192
      %4194 = vmatmul.bf16.gmra.mxu0 %v3695
      %v4195 = vpop.f32.mrf.mxu0
      %v4196 = vadd.f32 0.0, %v4195
      %v4197 = vpop.f32.mrf.mxu0
      %v4198 = vadd.f32 0.0, %v4197
      %4199 = vmatmul.bf16.gmra.mxu0 %v3698
      %v4200 = vpop.f32.mrf.mxu0
      %v4201 = vadd.f32 0.0, %v4200
      %v4202 = vpop.f32.mrf.mxu0
      %v4203 = vadd.f32 0.0, %v4202
      %4204 = vmatmul.bf16.gmra.mxu0 %v3701
      %v4205 = vpop.f32.mrf.mxu0
      %v4206 = vadd.f32 0.0, %v4205
      %v4207 = vpop.f32.mrf.mxu0
      %v4208 = vadd.f32 0.0, %v4207
      %4209 = vmatmul.bf16.gmra.mxu0 %v3704
      %v4210 = vpop.f32.mrf.mxu0
      %v4211 = vadd.f32 0.0, %v4210
      %v4212 = vpop.f32.mrf.mxu0
      %v4213 = vadd.f32 0.0, %v4212
      %4214 = vmatmul.bf16.gmra.mxu0 %v3707
      %v4215 = vpop.f32.mrf.mxu0
      %v4216 = vadd.f32 0.0, %v4215
      %v4217 = vpop.f32.mrf.mxu0
      %v4218 = vadd.f32 0.0, %v4217
      %4219 = vmatmul.bf16.gmra.mxu0 %v3710
      %v4220 = vpop.f32.mrf.mxu0
      %v4221 = vadd.f32 0.0, %v4220
      %v4222 = vpop.f32.mrf.mxu0
      %v4223 = vadd.f32 0.0, %v4222
      %4224 = vmatmul.bf16.gmra.mxu0 %v3713
      %v4225 = vpop.f32.mrf.mxu0
      %v4226 = vadd.f32 0.0, %v4225
      %v4227 = vpop.f32.mrf.mxu0
      %v4228 = vadd.f32 0.0, %v4227
      %4229 = vmatmul.bf16.gmra.mxu0 %v3716
      %v4230 = vpop.f32.mrf.mxu0
      %v4231 = vadd.f32 0.0, %v4230
      %v4232 = vpop.f32.mrf.mxu0
      %v4233 = vadd.f32 0.0, %v4232
      %4234 = vmatmul.bf16.gmra.mxu0 %v4146
      %v4235 = vpop.f32.mrf.mxu0
      %v4236 = vadd.f32 0.0, %v4235
      %v4237 = vpop.f32.mrf.mxu0
      %v4238 = vadd.f32 0.0, %v4237
      %4239 = vdwg.mxu0
      %v4240 = vadd.f32 %v4100, %v4161
      %v4241 = vadd.f32 %v4101, %v4163
      %v4242 = vadd.f32 %v4102, %v4166
      %v4243 = vadd.f32 %v4103, %v4168
      %v4244 = vadd.f32 %v4104, %v4171
      %v4245 = vadd.f32 %v4105, %v4173
      %v4246 = vadd.f32 %v4106, %v4176
      %v4247 = vadd.f32 %v4107, %v4178
      %v4248 = vadd.f32 %v4108, %v4181
      %v4249 = vadd.f32 %v4109, %v4183
      %v4250 = vadd.f32 %v4110, %v4186
      %v4251 = vadd.f32 %v4111, %v4188
      %v4252 = vadd.f32 %v4112, %v4191
      %v4253 = vadd.f32 %v4113, %v4193
      %v4254 = vadd.f32 %v4114, %v4196
      %v4255 = vadd.f32 %v4115, %v4198
      %v4256 = vadd.f32 %v4116, %v4201
      %v4257 = vadd.f32 %v4117, %v4203
      %v4258 = vadd.f32 %v4118, %v4206
      %v4259 = vadd.f32 %v4119, %v4208
      %v4260 = vadd.f32 %v4120, %v4211
      %v4261 = vadd.f32 %v4121, %v4213
      %v4262 = vadd.f32 %v4122, %v4216
      %v4263 = vadd.f32 %v4123, %v4218
      %v4264 = vadd.f32 %v4124, %v4221
      %v4265 = vadd.f32 %v4125, %v4223
      %v4266 = vadd.f32 %v4126, %v4226
      %v4267 = vadd.f32 %v4127, %v4228
      %v4268 = vadd.f32 %v4128, %v4231
      %v4269 = vadd.f32 %v4129, %v4233
      %v4270 = vadd.f32 %v4130, %v4236
      %v4271 = vadd.f32 %v4131, %v4238
      %s4272 = scalar_lea.vmem %s3, 12
      %v4273 = vld [vmem:[%s4272] sm:$0x3]
      %v4276 = vunpack.c.l.b16 %v2694
      %v4277 = vunpack.c.l.b16 %v2695
      %v4278 = vpack.c.b16 %v4277, %v4276
      %v4280 = vsel %vm258, %v4278, 0
      %v4283 = vsel %vm963, %v4273, 0
      %4285 = vmatpush.bf16.msra.mxu0 0
      %4286 = vmatpush.bf16.msra.mxu0 0
      %4287 = vmatpush.bf16.msra.mxu0 0
      %4288 = vmatpush.bf16.msra.mxu0 0
      %4289 = vmatpush.bf16.msra.mxu0 0
      %4290 = vmatpush.bf16.msra.mxu0 0
      %4291 = vmatpush.bf16.msra.mxu0 0
      %4292 = vmatpush.bf16.msra.mxu0 %v4283
      %4293 = vmatmul.bf16.gmra.mxu0 %v3359
      %v4294 = vpop.f32.mrf.mxu0
      %v4295 = vadd.f32 0.0, %v4294
      %v4296 = vpop.f32.mrf.mxu0
      %v4297 = vadd.f32 0.0, %v4296
      %4298 = vmatmul.bf16.gmra.mxu0 %v3362
      %v4299 = vpop.f32.mrf.mxu0
      %v4300 = vadd.f32 0.0, %v4299
      %v4301 = vpop.f32.mrf.mxu0
      %v4302 = vadd.f32 0.0, %v4301
      %4303 = vmatmul.bf16.gmra.mxu0 %v3365
      %v4304 = vpop.f32.mrf.mxu0
      %v4305 = vadd.f32 0.0, %v4304
      %v4306 = vpop.f32.mrf.mxu0
      %v4307 = vadd.f32 0.0, %v4306
      %4308 = vmatmul.bf16.gmra.mxu0 %v3368
      %v4309 = vpop.f32.mrf.mxu0
      %v4310 = vadd.f32 0.0, %v4309
      %v4311 = vpop.f32.mrf.mxu0
      %v4312 = vadd.f32 0.0, %v4311
      %4313 = vmatmul.bf16.gmra.mxu0 %v3371
      %v4314 = vpop.f32.mrf.mxu0
      %v4315 = vadd.f32 0.0, %v4314
      %v4316 = vpop.f32.mrf.mxu0
      %v4317 = vadd.f32 0.0, %v4316
      %4318 = vmatmul.bf16.gmra.mxu0 %v3374
      %v4319 = vpop.f32.mrf.mxu0
      %v4320 = vadd.f32 0.0, %v4319
      %v4321 = vpop.f32.mrf.mxu0
      %v4322 = vadd.f32 0.0, %v4321
      %4323 = vmatmul.bf16.gmra.mxu0 %v3377
      %v4324 = vpop.f32.mrf.mxu0
      %v4325 = vadd.f32 0.0, %v4324
      %v4326 = vpop.f32.mrf.mxu0
      %v4327 = vadd.f32 0.0, %v4326
      %4328 = vmatmul.bf16.gmra.mxu0 %v3380
      %v4329 = vpop.f32.mrf.mxu0
      %v4330 = vadd.f32 0.0, %v4329
      %v4331 = vpop.f32.mrf.mxu0
      %v4332 = vadd.f32 0.0, %v4331
      %4333 = vmatmul.bf16.gmra.mxu0 %v3383
      %v4334 = vpop.f32.mrf.mxu0
      %v4335 = vadd.f32 0.0, %v4334
      %v4336 = vpop.f32.mrf.mxu0
      %v4337 = vadd.f32 0.0, %v4336
      %4338 = vmatmul.bf16.gmra.mxu0 %v3386
      %v4339 = vpop.f32.mrf.mxu0
      %v4340 = vadd.f32 0.0, %v4339
      %v4341 = vpop.f32.mrf.mxu0
      %v4342 = vadd.f32 0.0, %v4341
      %4343 = vmatmul.bf16.gmra.mxu0 %v3389
      %v4344 = vpop.f32.mrf.mxu0
      %v4345 = vadd.f32 0.0, %v4344
      %v4346 = vpop.f32.mrf.mxu0
      %v4347 = vadd.f32 0.0, %v4346
      %4348 = vmatmul.bf16.gmra.mxu0 %v3392
      %v4349 = vpop.f32.mrf.mxu0
      %v4350 = vadd.f32 0.0, %v4349
      %v4351 = vpop.f32.mrf.mxu0
      %v4352 = vadd.f32 0.0, %v4351
      %4353 = vmatmul.bf16.gmra.mxu0 %v3395
      %v4354 = vpop.f32.mrf.mxu0
      %v4355 = vadd.f32 0.0, %v4354
      %v4356 = vpop.f32.mrf.mxu0
      %v4357 = vadd.f32 0.0, %v4356
      %4358 = vmatmul.bf16.gmra.mxu0 %v3398
      %v4359 = vpop.f32.mrf.mxu0
      %v4360 = vadd.f32 0.0, %v4359
      %v4361 = vpop.f32.mrf.mxu0
      %v4362 = vadd.f32 0.0, %v4361
      %4363 = vmatmul.bf16.gmra.mxu0 %v3850
      %v4364 = vpop.f32.mrf.mxu0
      %v4365 = vadd.f32 0.0, %v4364
      %v4366 = vpop.f32.mrf.mxu0
      %v4367 = vadd.f32 0.0, %v4366
      %4368 = vmatmul.bf16.gmra.mxu0 %v4280
      %v4369 = vpop.f32.mrf.mxu0
      %v4370 = vadd.f32 0.0, %v4369
      %v4371 = vpop.f32.mrf.mxu0
      %v4372 = vadd.f32 0.0, %v4371
      %4373 = vdwg.mxu0
      %v4374 = vadd.f32 %v4240, %v4295
      %v4375 = vadd.f32 %v4241, %v4297
      %v4376 = vadd.f32 %v4242, %v4300
      %v4377 = vadd.f32 %v4243, %v4302
      %v4378 = vadd.f32 %v4244, %v4305
      %v4379 = vadd.f32 %v4245, %v4307
      %v4380 = vadd.f32 %v4246, %v4310
      %v4381 = vadd.f32 %v4247, %v4312
      %v4382 = vadd.f32 %v4248, %v4315
      %v4383 = vadd.f32 %v4249, %v4317
      %v4384 = vadd.f32 %v4250, %v4320
      %v4385 = vadd.f32 %v4251, %v4322
      %v4386 = vadd.f32 %v4252, %v4325
      %v4387 = vadd.f32 %v4253, %v4327
      %v4388 = vadd.f32 %v4254, %v4330
      %v4389 = vadd.f32 %v4255, %v4332
      %v4390 = vadd.f32 %v4256, %v4335
      %v4391 = vadd.f32 %v4257, %v4337
      %v4392 = vadd.f32 %v4258, %v4340
      %v4393 = vadd.f32 %v4259, %v4342
      %v4394 = vadd.f32 %v4260, %v4345
      %v4395 = vadd.f32 %v4261, %v4347
      %v4396 = vadd.f32 %v4262, %v4350
      %v4397 = vadd.f32 %v4263, %v4352
      %v4398 = vadd.f32 %v4264, %v4355
      %v4399 = vadd.f32 %v4265, %v4357
      %v4400 = vadd.f32 %v4266, %v4360
      %v4401 = vadd.f32 %v4267, %v4362
      %v4402 = vadd.f32 %v4268, %v4365
      %v4403 = vadd.f32 %v4269, %v4367
      %v4404 = vadd.f32 %v4270, %v4370
      %v4405 = vadd.f32 %v4271, %v4372
      %s4406 = scalar_lea.vmem %s3, 14
      %v4407 = vld [vmem:[%s4406] sm:$0x3]
      %v4409 = vshrl.u32 %v2694, 16
      %v4411 = vrot.slane %v4409, 4
      %v4412 = vshll.u32 %v2694, 16
      %v4414 = vrot.slane %v4412, 5
      %v4415 = vor.u32 %v4411, %v4414
      %v4416 = vrot.slane %v4415, 4
      %v4418 = vshll.u32 %v2695, 16
      %v4420 = vrot.slane %v4418, 5
      %v4421 = vsel %vm482, %v4416, %v4420
      %v4422 = vshrl.u32 %v2695, 16
      %v4424 = vrot.slane %v4422, 4
      %v4425 = vor.u32 %v4424, %v4420
      %v4426 = vrot.slane %v4425, 4
      %v4428 = vshll.u32 %v2696, 16
      %v4430 = vrot.slane %v4428, 5
      %v4431 = vsel %vm482, %v4426, %v4430
      %v4432 = vunpack.c.l.b16 %v4421
      %v4433 = vunpack.c.l.b16 %v4431
      %v4434 = vpack.c.b16 %v4433, %v4432
      %v4436 = vsel %vm258, %v4434, 0
      %v4439 = vsel %vm963, %v4407, 0
      %4441 = vmatpush.bf16.msra.mxu0 0
      %4442 = vmatpush.bf16.msra.mxu0 0
      %4443 = vmatpush.bf16.msra.mxu0 0
      %4444 = vmatpush.bf16.msra.mxu0 0
      %4445 = vmatpush.bf16.msra.mxu0 0
      %4446 = vmatpush.bf16.msra.mxu0 0
      %4447 = vmatpush.bf16.msra.mxu0 0
      %4448 = vmatpush.bf16.msra.mxu0 %v4439
      %4449 = vmatmul.bf16.gmra.mxu0 %v3139
      %v4450 = vpop.f32.mrf.mxu0
      %v4451 = vadd.f32 0.0, %v4450
      %v4452 = vpop.f32.mrf.mxu0
      %v4453 = vadd.f32 0.0, %v4452
      %4454 = vmatmul.bf16.gmra.mxu0 %v3142
      %v4455 = vpop.f32.mrf.mxu0
      %v4456 = vadd.f32 0.0, %v4455
      %v4457 = vpop.f32.mrf.mxu0
      %v4458 = vadd.f32 0.0, %v4457
      %4459 = vmatmul.bf16.gmra.mxu0 %v3145
      %v4460 = vpop.f32.mrf.mxu0
      %v4461 = vadd.f32 0.0, %v4460
      %v4462 = vpop.f32.mrf.mxu0
      %v4463 = vadd.f32 0.0, %v4462
      %4464 = vmatmul.bf16.gmra.mxu0 %v3148
      %v4465 = vpop.f32.mrf.mxu0
      %v4466 = vadd.f32 0.0, %v4465
      %v4467 = vpop.f32.mrf.mxu0
      %v4468 = vadd.f32 0.0, %v4467
      %4469 = vmatmul.bf16.gmra.mxu0 %v3151
      %v4470 = vpop.f32.mrf.mxu0
      %v4471 = vadd.f32 0.0, %v4470
      %v4472 = vpop.f32.mrf.mxu0
      %v4473 = vadd.f32 0.0, %v4472
      %4474 = vmatmul.bf16.gmra.mxu0 %v3154
      %v4475 = vpop.f32.mrf.mxu0
      %v4476 = vadd.f32 0.0, %v4475
      %v4477 = vpop.f32.mrf.mxu0
      %v4478 = vadd.f32 0.0, %v4477
      %4479 = vmatmul.bf16.gmra.mxu0 %v3157
      %v4480 = vpop.f32.mrf.mxu0
      %v4481 = vadd.f32 0.0, %v4480
      %v4482 = vpop.f32.mrf.mxu0
      %v4483 = vadd.f32 0.0, %v4482
      %4484 = vmatmul.bf16.gmra.mxu0 %v3160
      %v4485 = vpop.f32.mrf.mxu0
      %v4486 = vadd.f32 0.0, %v4485
      %v4487 = vpop.f32.mrf.mxu0
      %v4488 = vadd.f32 0.0, %v4487
      %4489 = vmatmul.bf16.gmra.mxu0 %v3163
      %v4490 = vpop.f32.mrf.mxu0
      %v4491 = vadd.f32 0.0, %v4490
      %v4492 = vpop.f32.mrf.mxu0
      %v4493 = vadd.f32 0.0, %v4492
      %4494 = vmatmul.bf16.gmra.mxu0 %v3166
      %v4495 = vpop.f32.mrf.mxu0
      %v4496 = vadd.f32 0.0, %v4495
      %v4497 = vpop.f32.mrf.mxu0
      %v4498 = vadd.f32 0.0, %v4497
      %4499 = vmatmul.bf16.gmra.mxu0 %v3169
      %v4500 = vpop.f32.mrf.mxu0
      %v4501 = vadd.f32 0.0, %v4500
      %v4502 = vpop.f32.mrf.mxu0
      %v4503 = vadd.f32 0.0, %v4502
      %4504 = vmatmul.bf16.gmra.mxu0 %v3172
      %v4505 = vpop.f32.mrf.mxu0
      %v4506 = vadd.f32 0.0, %v4505
      %v4507 = vpop.f32.mrf.mxu0
      %v4508 = vadd.f32 0.0, %v4507
      %4509 = vmatmul.bf16.gmra.mxu0 %v3175
      %v4510 = vpop.f32.mrf.mxu0
      %v4511 = vadd.f32 0.0, %v4510
      %v4512 = vpop.f32.mrf.mxu0
      %v4513 = vadd.f32 0.0, %v4512
      %4514 = vmatmul.bf16.gmra.mxu0 %v3178
      %v4515 = vpop.f32.mrf.mxu0
      %v4516 = vadd.f32 0.0, %v4515
      %v4517 = vpop.f32.mrf.mxu0
      %v4518 = vadd.f32 0.0, %v4517
      %4519 = vmatmul.bf16.gmra.mxu0 %v4006
      %v4520 = vpop.f32.mrf.mxu0
      %v4521 = vadd.f32 0.0, %v4520
      %v4522 = vpop.f32.mrf.mxu0
      %v4523 = vadd.f32 0.0, %v4522
      %4524 = vmatmul.bf16.gmra.mxu0 %v4436
      %v4525 = vpop.f32.mrf.mxu0
      %v4526 = vadd.f32 0.0, %v4525
      %v4527 = vpop.f32.mrf.mxu0
      %v4528 = vadd.f32 0.0, %v4527
      %4529 = vdwg.mxu0
      %v4530 = vadd.f32 %v4374, %v4451
      %v4531 = vadd.f32 %v4375, %v4453
      %v4532 = vadd.f32 %v4376, %v4456
      %v4533 = vadd.f32 %v4377, %v4458
      %v4534 = vadd.f32 %v4378, %v4461
      %v4535 = vadd.f32 %v4379, %v4463
      %v4536 = vadd.f32 %v4380, %v4466
      %v4537 = vadd.f32 %v4381, %v4468
      %v4538 = vadd.f32 %v4382, %v4471
      %v4539 = vadd.f32 %v4383, %v4473
      %v4540 = vadd.f32 %v4384, %v4476
      %v4541 = vadd.f32 %v4385, %v4478
      %v4542 = vadd.f32 %v4386, %v4481
      %v4543 = vadd.f32 %v4387, %v4483
      %v4544 = vadd.f32 %v4388, %v4486
      %v4545 = vadd.f32 %v4389, %v4488
      %v4546 = vadd.f32 %v4390, %v4491
      %v4547 = vadd.f32 %v4391, %v4493
      %v4548 = vadd.f32 %v4392, %v4496
      %v4549 = vadd.f32 %v4393, %v4498
      %v4550 = vadd.f32 %v4394, %v4501
      %v4551 = vadd.f32 %v4395, %v4503
      %v4552 = vadd.f32 %v4396, %v4506
      %v4553 = vadd.f32 %v4397, %v4508
      %v4554 = vadd.f32 %v4398, %v4511
      %v4555 = vadd.f32 %v4399, %v4513
      %v4556 = vadd.f32 %v4400, %v4516
      %v4557 = vadd.f32 %v4401, %v4518
      %v4558 = vadd.f32 %v4402, %v4521
      %v4559 = vadd.f32 %v4403, %v4523
      %v4560 = vadd.f32 %v4404, %v4526
      %v4561 = vadd.f32 %v4405, %v4528
      %s4562 = scalar_lea.vmem %s3, 16
      %v4563 = vld [vmem:[%s4562] sm:$0x3]
      %v4565 = vrot.slane %v2694, 5
      %v4566 = vrot.slane %v4565, 4
      %v4567 = vrot.slane %v2695, 5
      %v4568 = vsel %vm1296, %v4566, %v4567
      %v4569 = vrot.slane %v4567, 4
      %v4570 = vrot.slane %v2696, 5
      %v4571 = vsel %vm1296, %v4569, %v4570
      %v4572 = vunpack.c.l.b16 %v4568
      %v4573 = vunpack.c.l.b16 %v4571
      %v4574 = vpack.c.b16 %v4573, %v4572
      %v4576 = vsel %vm258, %v4574, 0
      %v4579 = vsel %vm963, %v4563, 0
      %4581 = vmatpush.bf16.msra.mxu0 0
      %4582 = vmatpush.bf16.msra.mxu0 0
      %4583 = vmatpush.bf16.msra.mxu0 0
      %4584 = vmatpush.bf16.msra.mxu0 0
      %4585 = vmatpush.bf16.msra.mxu0 0
      %4586 = vmatpush.bf16.msra.mxu0 0
      %4587 = vmatpush.bf16.msra.mxu0 0
      %4588 = vmatpush.bf16.msra.mxu0 %v4579
      %4589 = vmatmul.bf16.gmra.mxu0 %v3677
      %v4590 = vpop.f32.mrf.mxu0
      %v4591 = vadd.f32 0.0, %v4590
      %v4592 = vpop.f32.mrf.mxu0
      %v4593 = vadd.f32 0.0, %v4592
      %4594 = vmatmul.bf16.gmra.mxu0 %v3680
      %v4595 = vpop.f32.mrf.mxu0
      %v4596 = vadd.f32 0.0, %v4595
      %v4597 = vpop.f32.mrf.mxu0
      %v4598 = vadd.f32 0.0, %v4597
      %4599 = vmatmul.bf16.gmra.mxu0 %v3683
      %v4600 = vpop.f32.mrf.mxu0
      %v4601 = vadd.f32 0.0, %v4600
      %v4602 = vpop.f32.mrf.mxu0
      %v4603 = vadd.f32 0.0, %v4602
      %4604 = vmatmul.bf16.gmra.mxu0 %v3686
      %v4605 = vpop.f32.mrf.mxu0
      %v4606 = vadd.f32 0.0, %v4605
      %v4607 = vpop.f32.mrf.mxu0
      %v4608 = vadd.f32 0.0, %v4607
      %4609 = vmatmul.bf16.gmra.mxu0 %v3689
      %v4610 = vpop.f32.mrf.mxu0
      %v4611 = vadd.f32 0.0, %v4610
      %v4612 = vpop.f32.mrf.mxu0
      %v4613 = vadd.f32 0.0, %v4612
      %4614 = vmatmul.bf16.gmra.mxu0 %v3692
      %v4615 = vpop.f32.mrf.mxu0
      %v4616 = vadd.f32 0.0, %v4615
      %v4617 = vpop.f32.mrf.mxu0
      %v4618 = vadd.f32 0.0, %v4617
      %4619 = vmatmul.bf16.gmra.mxu0 %v3695
      %v4620 = vpop.f32.mrf.mxu0
      %v4621 = vadd.f32 0.0, %v4620
      %v4622 = vpop.f32.mrf.mxu0
      %v4623 = vadd.f32 0.0, %v4622
      %4624 = vmatmul.bf16.gmra.mxu0 %v3698
      %v4625 = vpop.f32.mrf.mxu0
      %v4626 = vadd.f32 0.0, %v4625
      %v4627 = vpop.f32.mrf.mxu0
      %v4628 = vadd.f32 0.0, %v4627
      %4629 = vmatmul.bf16.gmra.mxu0 %v3701
      %v4630 = vpop.f32.mrf.mxu0
      %v4631 = vadd.f32 0.0, %v4630
      %v4632 = vpop.f32.mrf.mxu0
      %v4633 = vadd.f32 0.0, %v4632
      %4634 = vmatmul.bf16.gmra.mxu0 %v3704
      %v4635 = vpop.f32.mrf.mxu0
      %v4636 = vadd.f32 0.0, %v4635
      %v4637 = vpop.f32.mrf.mxu0
      %v4638 = vadd.f32 0.0, %v4637
      %4639 = vmatmul.bf16.gmra.mxu0 %v3707
      %v4640 = vpop.f32.mrf.mxu0
      %v4641 = vadd.f32 0.0, %v4640
      %v4642 = vpop.f32.mrf.mxu0
      %v4643 = vadd.f32 0.0, %v4642
      %4644 = vmatmul.bf16.gmra.mxu0 %v3710
      %v4645 = vpop.f32.mrf.mxu0
      %v4646 = vadd.f32 0.0, %v4645
      %v4647 = vpop.f32.mrf.mxu0
      %v4648 = vadd.f32 0.0, %v4647
      %4649 = vmatmul.bf16.gmra.mxu0 %v3713
      %v4650 = vpop.f32.mrf.mxu0
      %v4651 = vadd.f32 0.0, %v4650
      %v4652 = vpop.f32.mrf.mxu0
      %v4653 = vadd.f32 0.0, %v4652
      %4654 = vmatmul.bf16.gmra.mxu0 %v3716
      %v4655 = vpop.f32.mrf.mxu0
      %v4656 = vadd.f32 0.0, %v4655
      %v4657 = vpop.f32.mrf.mxu0
      %v4658 = vadd.f32 0.0, %v4657
      %4659 = vmatmul.bf16.gmra.mxu0 %v4146
      %v4660 = vpop.f32.mrf.mxu0
      %v4661 = vadd.f32 0.0, %v4660
      %v4662 = vpop.f32.mrf.mxu0
      %v4663 = vadd.f32 0.0, %v4662
      %4664 = vmatmul.bf16.gmra.mxu0 %v4576
      %v4665 = vpop.f32.mrf.mxu0
      %v4666 = vadd.f32 0.0, %v4665
      %v4667 = vpop.f32.mrf.mxu0
      %v4668 = vadd.f32 0.0, %v4667
      %4669 = vdwg.mxu0
      %v4670 = vadd.f32 %v4530, %v4591
      %v4671 = vadd.f32 %v4531, %v4593
      %v4672 = vadd.f32 %v4532, %v4596
      %v4673 = vadd.f32 %v4533, %v4598
      %v4674 = vadd.f32 %v4534, %v4601
      %v4675 = vadd.f32 %v4535, %v4603
      %v4676 = vadd.f32 %v4536, %v4606
      %v4677 = vadd.f32 %v4537, %v4608
      %v4678 = vadd.f32 %v4538, %v4611
      %v4679 = vadd.f32 %v4539, %v4613
      %v4680 = vadd.f32 %v4540, %v4616
      %v4681 = vadd.f32 %v4541, %v4618
      %v4682 = vadd.f32 %v4542, %v4621
      %v4683 = vadd.f32 %v4543, %v4623
      %v4684 = vadd.f32 %v4544, %v4626
      %v4685 = vadd.f32 %v4545, %v4628
      %v4686 = vadd.f32 %v4546, %v4631
      %v4687 = vadd.f32 %v4547, %v4633
      %v4688 = vadd.f32 %v4548, %v4636
      %v4689 = vadd.f32 %v4549, %v4638
      %v4690 = vadd.f32 %v4550, %v4641
      %v4691 = vadd.f32 %v4551, %v4643
      %v4692 = vadd.f32 %v4552, %v4646
      %v4693 = vadd.f32 %v4553, %v4648
      %v4694 = vadd.f32 %v4554, %v4651
      %v4695 = vadd.f32 %v4555, %v4653
      %v4696 = vadd.f32 %v4556, %v4656
      %v4697 = vadd.f32 %v4557, %v4658
      %v4698 = vadd.f32 %v4558, %v4661
      %v4699 = vadd.f32 %v4559, %v4663
      %v4700 = vadd.f32 %v4560, %v4666
      %v4701 = vadd.f32 %v4561, %v4668
      %v4702 = vld [vmem:[%s4] sm:$0x1]
      %v4704 = vperm.slane %v4702, 0
      %v4706 = vadd.f32 %v4670, %v4704
      %v4707 = vadd.f32 %v4671, %v4704
      %v4708 = vadd.f32 %v4672, %v4704
      %v4709 = vadd.f32 %v4673, %v4704
      %v4710 = vadd.f32 %v4674, %v4704
      %v4711 = vadd.f32 %v4675, %v4704
      %v4712 = vadd.f32 %v4676, %v4704
      %v4713 = vadd.f32 %v4677, %v4704
      %v4714 = vadd.f32 %v4678, %v4704
      %v4715 = vadd.f32 %v4679, %v4704
      %v4716 = vadd.f32 %v4680, %v4704
      %v4717 = vadd.f32 %v4681, %v4704
      %v4718 = vadd.f32 %v4682, %v4704
      %v4719 = vadd.f32 %v4683, %v4704
      %v4720 = vadd.f32 %v4684, %v4704
      %v4721 = vadd.f32 %v4685, %v4704
      %v4722 = vadd.f32 %v4686, %v4704
      %v4723 = vadd.f32 %v4687, %v4704
      %v4724 = vadd.f32 %v4688, %v4704
      %v4725 = vadd.f32 %v4689, %v4704
      %v4726 = vadd.f32 %v4690, %v4704
      %v4727 = vadd.f32 %v4691, %v4704
      %v4728 = vadd.f32 %v4692, %v4704
      %v4729 = vadd.f32 %v4693, %v4704
      %v4730 = vadd.f32 %v4694, %v4704
      %v4731 = vadd.f32 %v4695, %v4704
      %v4732 = vadd.f32 %v4696, %v4704
      %v4733 = vadd.f32 %v4697, %v4704
      %v4734 = vadd.f32 %v4698, %v4704
      %v4735 = vadd.f32 %v4699, %v4704
      %v4736 = vadd.f32 %v4700, %v4704
      %v4737 = vadd.f32 %v4701, %v4704
      %v4738 = vadd.f32 %v4706, %v226
      %v4739 = vadd.f32 %v4707, %v227
      %v4740 = vadd.f32 %v4708, %v228
      %v4741 = vadd.f32 %v4709, %v229
      %v4742 = vadd.f32 %v4710, %v230
      %v4743 = vadd.f32 %v4711, %v231
      %v4744 = vadd.f32 %v4712, %v232
      %v4745 = vadd.f32 %v4713, %v233
      %v4746 = vadd.f32 %v4714, %v234
      %v4747 = vadd.f32 %v4715, %v235
      %v4748 = vadd.f32 %v4716, %v236
      %v4749 = vadd.f32 %v4717, %v237
      %v4750 = vadd.f32 %v4718, %v238
      %v4751 = vadd.f32 %v4719, %v239
      %v4752 = vadd.f32 %v4720, %v240
      %v4753 = vadd.f32 %v4721, %v241
      %v4754 = vadd.f32 %v4722, %v242
      %v4755 = vadd.f32 %v4723, %v243
      %v4756 = vadd.f32 %v4724, %v244
      %v4757 = vadd.f32 %v4725, %v245
      %v4758 = vadd.f32 %v4726, %v246
      %v4759 = vadd.f32 %v4727, %v247
      %v4760 = vadd.f32 %v4728, %v248
      %v4761 = vadd.f32 %v4729, %v249
      %v4762 = vadd.f32 %v4730, %v250
      %v4763 = vadd.f32 %v4731, %v251
      %v4764 = vadd.f32 %v4732, %v252
      %v4765 = vadd.f32 %v4733, %v253
      %v4766 = vadd.f32 %v4734, %v254
      %v4767 = vadd.f32 %v4735, %v255
      %v4768 = vadd.f32 %v4736, %v256
      %v4769 = vadd.f32 %v4737, %v257
      %4770 = vst.msk [vmem:[%s224] sm:$0xff] %vm258, %v4738
      %4771 = vst.msk [vmem:[%s224 + $0x8] sm:$0xff] %vm258, %v4739
      %4772 = vst.msk [vmem:[%s224 + $0x10] sm:$0xff] %vm258, %v4740
      %4773 = vst.msk [vmem:[%s224 + $0x18] sm:$0xff] %vm258, %v4741
      %4774 = vst.msk [vmem:[%s224 + $0x20] sm:$0xff] %vm258, %v4742
      %4775 = vst.msk [vmem:[%s224 + $0x28] sm:$0xff] %vm258, %v4743
      %4776 = vst.msk [vmem:[%s224 + $0x30] sm:$0xff] %vm258, %v4744
      %4777 = vst.msk [vmem:[%s224 + $0x38] sm:$0xff] %vm258, %v4745
      %4778 = vst.msk [vmem:[%s224 + $0x40] sm:$0xff] %vm258, %v4746
      %4779 = vst.msk [vmem:[%s224 + $0x48] sm:$0xff] %vm258, %v4747
      %4780 = vst.msk [vmem:[%s224 + $0x50] sm:$0xff] %vm258, %v4748
      %4781 = vst.msk [vmem:[%s224 + $0x58] sm:$0xff] %vm258, %v4749
      %4782 = vst.msk [vmem:[%s224 + $0x60] sm:$0xff] %vm258, %v4750
      %4783 = vst.msk [vmem:[%s224 + $0x68] sm:$0xff] %vm258, %v4751
      %4784 = vst.msk [vmem:[%s224 + $0x70] sm:$0xff] %vm258, %v4752
      %4785 = vst.msk [vmem:[%s224 + $0x78] sm:$0xff] %vm258, %v4753
      %4786 = vst.msk [vmem:[%s224 + $0x80] sm:$0xff] %vm258, %v4754
      %4787 = vst.msk [vmem:[%s224 + $0x88] sm:$0xff] %vm258, %v4755
      %4788 = vst.msk [vmem:[%s224 + $0x90] sm:$0xff] %vm258, %v4756
      %4789 = vst.msk [vmem:[%s224 + $0x98] sm:$0xff] %vm258, %v4757
      %4790 = vst.msk [vmem:[%s224 + $0xa0] sm:$0xff] %vm258, %v4758
      %4791 = vst.msk [vmem:[%s224 + $0xa8] sm:$0xff] %vm258, %v4759
      %4792 = vst.msk [vmem:[%s224 + $0xb0] sm:$0xff] %vm258, %v4760
      %4793 = vst.msk [vmem:[%s224 + $0xb8] sm:$0xff] %vm258, %v4761
      %4794 = vst.msk [vmem:[%s224 + $0xc0] sm:$0xff] %vm258, %v4762
      %4795 = vst.msk [vmem:[%s224 + $0xc8] sm:$0xff] %vm258, %v4763
      %4796 = vst.msk [vmem:[%s224 + $0xd0] sm:$0xff] %vm258, %v4764
      %4797 = vst.msk [vmem:[%s224 + $0xd8] sm:$0xff] %vm258, %v4765
      %4798 = vst.msk [vmem:[%s224 + $0xe0] sm:$0xff] %vm258, %v4766
      %4799 = vst.msk [vmem:[%s224 + $0xe8] sm:$0xff] %vm258, %v4767
      %4800 = vst.msk [vmem:[%s224 + $0xf0] sm:$0xff] %vm258, %v4768
      %4801 = vst.msk [vmem:[%s224 + $0xf8] sm:$0xff] %vm258, %v4769
      %p4802 = scmp.lt.s32.totalorder %s16, 1
      %s4803 = scalar_select %p4802, %s16, 1
      %s4804 = smul.addr %s4803, 32
      %s4805 = smul.addr %s4804, 8
      %s4806 = scalar_lea.vmem %s5, %s4805
      // Predicated region
      $region41: #{tpu_custom_call.1} parent=39 // pred_check
        %p4807 = pneg %p144
      $region42: #{tpu_custom_call.1} parent=39 // pred_check_branch
        %4809 = sbr.rel (%p4807) target = $region44
      $region43: #{tpu_custom_call.1} parent=39 // pred_region
        _
      $region44: #{tpu_custom_call.1} parent=39 // pred_fallthru
        _
    $region40: #{tpu_custom_call.1} parent=5 // pred_fallthru
      _
    %p4810 = scmp.le.s32.totalorder 2, %s11
    // Predicated region
    $region45: #{tpu_custom_call.1} parent=5 // pred_check
      %p4811 = pneg %p4810
    $region46: #{tpu_custom_call.1} parent=5 // pred_check_branch
      %4813 = sbr.rel (%p4811) target = $region48
    $region47: #{tpu_custom_call.1} parent=5 // pred_region
      %s4814 = ssub.s32 %s11, 2
      // Predicated region
      $region49: #{tpu_custom_call.1} parent=47 // pred_check
        %p4815 = pneg %p150
      $region50: #{tpu_custom_call.1} parent=47 // pred_check_branch
        %4817 = sbr.rel (%p4815) target = $region52
      $region51: #{tpu_custom_call.1} parent=47 // pred_region
        %p4818 = scmp.lt.s32.totalorder %s17, 1
        %s4819 = scalar_select %p4818, %s17, 1
        %s4820 = smul.addr %s4819, 32
        %s4821 = smul.addr %s4820, 8
        %s4822 = scalar_lea.vmem %s5, %s4821
      $region52: #{tpu_custom_call.1} parent=47 // pred_fallthru
        _
    $region48: #{tpu_custom_call.1} parent=5 // pred_fallthru
      _
  $region6: #{tpu_custom_call.1} parent=0 // loop_footer
    %s15 = sadd.s32 1, %s11
  $region7: #{tpu_custom_call.1} parent=0 // loop_footer_branch
    %10 = sbr.rel target = $region3
  $region8: #{tpu_custom_call.1} parent=0 // loop_exit
    _

</llo_original>
